<compile_context>
chip_gen: v7x
topology: tpu7x:2x2x1
jax: 0.10.0
libtpu: 0.0.40
codegen_flags: <defaults>
</compile_context>

<pallas_src>
import jax
import jax.numpy as jnp
from jax import lax
from jax.experimental import pallas as pl
from jax.experimental.pallas import tpu as pltpu

_PREC = lax.Precision.HIGHEST  # explicit f32 parity with the PyTorch module


def rnn_kernel(x_ref, wih_ref, whh_ref, bias_ref, wfc_ref, bfc_ref,
               out_ref, p_ref):
    """Whole-sequence RNN + FC head in a single invocation.

    Shapes (all static):
      x_ref:    (T*Bp, F)   time-major, batch padded to a sublane multiple
      wih_ref:  (F, H)      W_ih^T
      whh_ref:  (H, H)      W_hh^T
      bias_ref: (1, H)      b_ih + b_hh (pre-folded)
      wfc_ref:  (H, Op)     W_fc^T, zero-padded to a lane multiple
      bfc_ref:  (1, Op)     b_fc,   zero-padded
      out_ref:  (Bp, Op)
      p_ref:    (T*Bp, H)   VMEM scratch for the hoisted input projection
    """
    Bp = out_ref.shape[0]
    H = whh_ref.shape[0]
    T = x_ref.shape[0] // Bp

    # Hoisted input projection for every time step + fused bias, parked in
    # VMEM scratch so the unrolled recurrence does not carry T*Bp*H live vregs.
    p_ref[...] = (jnp.dot(x_ref[...], wih_ref[...],
                          preferred_element_type=jnp.float32,
                          precision=_PREC)
                  + bias_ref[...])

    # Load the recurrent weight once; the unrolled loop reuses this value so
    # the MXU RHS push can be hoisted out of the body.
    whh = whh_ref[...]

    # t = 0: h_{-1} = 0  =>  h_0 = tanh(P[0])  (no recurrent matmul needed).
    h = jnp.tanh(p_ref[pl.ds(0, Bp), :])

    # Fully unrolled serial recurrence; slices are static, (8,128)-aligned.
    for t in range(1, T):
        p_t = p_ref[pl.ds(t * Bp, Bp), :]                      # (Bp, H)
        h = jnp.tanh(p_t + jnp.dot(h, whh,
                                   preferred_element_type=jnp.float32,
                                   precision=_PREC))

    # Final Linear head on the last hidden state; Op padded to 128 lanes so
    # this store is a full, unmasked (8,128) tile write.
    out_ref[...] = (jnp.dot(h, wfc_ref[...],
                            preferred_element_type=jnp.float32,
                            precision=_PREC)
                    + bfc_ref[...])


def rnn_forward(x_btf, w_ih, w_hh, b_ih, b_hh, w_fc, b_fc):
    """x_btf: (B, T, F) float32, batch_first like the PyTorch module."""
    B, T, F = x_btf.shape
    H = w_ih.shape[0]
    O = w_fc.shape[0]

    Bp = ((max(B, 8) + 7) // 8) * 8          # batch  -> sublane multiple (>= 8)
    Op = ((max(O, 128) + 127) // 128) * 128  # output -> lane multiple (>= 128)

    # Time-major, batch-padded, flattened to (T*Bp, F) so the input projection
    # is a single 2-D matmul inside the kernel.  (Negligible at these sizes;
    # for long sequences prefer accepting time-major input to avoid the extra
    # HBM round trip of this transpose/pad.)
    x_tbf = jnp.transpose(x_btf, (1, 0, 2)).astype(jnp.float32)     # (T, B, F)
    x_tbf = jnp.pad(x_tbf, ((0, 0), (0, Bp - B), (0, 0)))
    x2d = x_tbf.reshape(T * Bp, F)

    wih_t = jnp.transpose(w_ih).astype(jnp.float32)                 # (F, H)
    whh_t = jnp.transpose(w_hh).astype(jnp.float32)                 # (H, H)
    bias2 = (b_ih + b_hh).reshape(1, H).astype(jnp.float32)         # fused bias

    wfc_t = jnp.pad(jnp.transpose(w_fc).astype(jnp.float32),        # (H, Op)
                    ((0, 0), (0, Op - O)))
    bfc2 = jnp.pad(b_fc.reshape(1, O).astype(jnp.float32),          # (1, Op)
                   ((0, 0), (0, Op - O)))

    # Fully-resident footprint guard (inputs + output + P scratch), must fit
    # comfortably inside the smallest scoped-VMEM default (32 MiB on v7x).
    vmem_bytes = 4 * (T * Bp * F + F * H + H * H + H + H * Op + Op
                      + Bp * Op + T * Bp * H)
    assert vmem_bytes < 24 * 1024 * 1024, (
        "fully-resident RNN kernel no longer fits VMEM; time-chunk the grid")

    out_pad = pl.pallas_call(
        rnn_kernel,
        out_shape=jax.ShapeDtypeStruct((Bp, Op), jnp.float32),
        in_specs=[
            pl.BlockSpec((T * Bp, F), lambda: (0, 0)),   # full x, resident
            pl.BlockSpec((F, H), lambda: (0, 0)),        # W_ih^T
            pl.BlockSpec((H, H), lambda: (0, 0)),        # W_hh^T
            pl.BlockSpec((1, H), lambda: (0, 0)),        # fused bias
            pl.BlockSpec((H, Op), lambda: (0, 0)),       # W_fc^T (padded)
            pl.BlockSpec((1, Op), lambda: (0, 0)),       # b_fc   (padded)
        ],
        out_specs=pl.BlockSpec((Bp, Op), lambda: (0, 0)),
        scratch_shapes=[pltpu.VMEM((T * Bp, H), jnp.float32)],
        compiler_params=pltpu.CompilerParams(
            vmem_limit_bytes=32 * 1024 * 1024),
    )(x2d, wih_t, whh_t, bias2, wfc_t, bfc2)

    return out_pad[:B, :O]


def rnn_reference(x_btf, w_ih, w_hh, b_ih, b_hh, w_fc, b_fc):
    """Pure-JAX reference matching torch.nn.RNN(batch_first=True) + Linear."""
    B = x_btf.shape[0]
    H = w_ih.shape[0]
    h0 = jnp.zeros((B, H), jnp.float32)

    def step(h, x_t):
        h_new = jnp.tanh(
            jnp.dot(x_t, w_ih.T, precision=_PREC) + b_ih
            + jnp.dot(h, w_hh.T, precision=_PREC) + b_hh)
        return h_new, None

    x_tbf = jnp.transpose(x_btf, (1, 0, 2))
    h_last, _ = lax.scan(step, h0, x_tbf)
    return jnp.dot(h_last, w_fc.T, precision=_PREC) + b_fc


if __name__ == "__main__":
    # Shapes consistent with the module's forward:
    #   hidden_size = 128 (as in the spec), output_size = 1, num_layers = 1,
    #   small batch B=4, seq T=8, input_size F=16.
    B, T, F, H, O = 4, 8, 16, 128, 1

    key = jax.random.PRNGKey(0)
    ks = jax.random.split(key, 7)
    bound = 1.0 / jnp.sqrt(H)  # PyTorch-style uniform init range

    x = jax.random.normal(ks[0], (B, T, F), dtype=jnp.float32)
    w_ih = jax.random.uniform(ks[1], (H, F), jnp.float32, -bound, bound)
    w_hh = jax.random.uniform(ks[2], (H, H), jnp.float32, -bound, bound)
    b_ih = jax.random.uniform(ks[3], (H,), jnp.float32, -bound, bound)
    b_hh = jax.random.uniform(ks[4], (H,), jnp.float32, -bound, bound)
    w_fc = jax.random.uniform(ks[5], (O, H), jnp.float32, -bound, bound)
    b_fc = jax.random.uniform(ks[6], (O,), jnp.float32, -bound, bound)

    out = rnn_forward(x, w_ih, w_hh, b_ih, b_hh, w_fc, b_fc)
    out = jax.block_until_ready(out)

    ref = rnn_reference(x, w_ih, w_hh, b_ih, b_hh, w_fc, b_fc)
    assert out.shape == (B, O), out.shape
    assert jnp.allclose(out, ref, atol=1e-4, rtol=1e-4), (out, ref)

    print("KERNEL_OK")
</pallas_src>

<mosaic_0001>
module attributes {stable_mosaic.version = 11 : i64} {
  func.func @rnn_kernel(%arg0: memref<64x16xf32, #tpu.memory_space<vmem>>, %arg1: memref<16x128xf32, #tpu.memory_space<vmem>>, %arg2: memref<128x128xf32, #tpu.memory_space<vmem>>, %arg3: memref<1x128xf32, #tpu.memory_space<vmem>>, %arg4: memref<128x128xf32, #tpu.memory_space<vmem>>, %arg5: memref<1x128xf32, #tpu.memory_space<vmem>>, %arg6: memref<8x128xf32, #tpu.memory_space<vmem>>, %arg7: memref<64x128xf32, #tpu.memory_space<vmem>>) attributes {dimension_semantics = [], scalar_prefetch = 0 : i64, scratch_operands = 1 : i64, tpu.core_type = #tpu.core_type<tc>} {
    %c0 = arith.constant 0 : index
    %c0_0 = arith.constant 0 : index
    %0 = vector.load %arg0[%c0, %c0_0] : memref<64x16xf32, #tpu.memory_space<vmem>>, vector<64x16xf32>
    %c0_1 = arith.constant 0 : index
    %c0_2 = arith.constant 0 : index
    %1 = vector.load %arg1[%c0_1, %c0_2] : memref<16x128xf32, #tpu.memory_space<vmem>>, vector<16x128xf32>
    %cst = arith.constant dense<0.000000e+00> : vector<64x128xf32>
    %2 = tpu.matmul %0, %1, %cst {dimension_numbers = #tpu.dot_dimension_numbers<[1], [0], [0], [1], [0, 0, 1, 1], [], []>, precision = #tpu.contract_precision<fp32>} : vector<64x16xf32>, vector<16x128xf32>, vector<64x128xf32> -> vector<64x128xf32>
    %c0_3 = arith.constant 0 : index
    %c0_4 = arith.constant 0 : index
    %3 = vector.load %arg3[%c0_3, %c0_4] : memref<1x128xf32, #tpu.memory_space<vmem>>, vector<1x128xf32>
    %4 = vector.broadcast %3 : vector<1x128xf32> to vector<64x128xf32>
    %5 = arith.addf %2, %4 : vector<64x128xf32>
    %c0_5 = arith.constant 0 : index
    %c0_6 = arith.constant 0 : index
    %6 = vector.load %arg7[%c0_5, %c0_6] : memref<64x128xf32, #tpu.memory_space<vmem>>, vector<64x128xf32>
    tpu.vector_store %arg7[%c0_5, %c0_6], %5 {strides = array<i32>} : memref<64x128xf32, #tpu.memory_space<vmem>>, vector<64x128xf32>,
    %c0_7 = arith.constant 0 : index
    %c0_8 = arith.constant 0 : index
    %7 = vector.load %arg2[%c0_7, %c0_8] : memref<128x128xf32, #tpu.memory_space<vmem>>, vector<128x128xf32>
    %c0_9 = arith.constant 0 : index
    %c0_10 = arith.constant 0 : index
    %8 = vector.load %arg7[%c0_9, %c0_10] : memref<64x128xf32, #tpu.memory_space<vmem>>, vector<8x128xf32>
    %9 = math.tanh %8 : vector<8x128xf32>
    %c8 = arith.constant 8 : index
    %c0_11 = arith.constant 0 : index
    %10 = vector.load %arg7[%c8, %c0_11] : memref<64x128xf32, #tpu.memory_space<vmem>>, vector<8x128xf32>
    %cst_12 = arith.constant dense<0.000000e+00> : vector<8x128xf32>
    %11 = tpu.matmul %9, %7, %cst_12 {dimension_numbers = #tpu.dot_dimension_numbers<[1], [0], [0], [1], [0, 0, 1, 1], [], []>, precision = #tpu.contract_precision<fp32>} : vector<8x128xf32>, vector<128x128xf32>, vector<8x128xf32> -> vector<8x128xf32>
    %12 = arith.addf %10, %11 : vector<8x128xf32>
    %13 = math.tanh %12 : vector<8x128xf32>
    %c16 = arith.constant 16 : index
    %c0_13 = arith.constant 0 : index
    %14 = vector.load %arg7[%c16, %c0_13] : memref<64x128xf32, #tpu.memory_space<vmem>>, vector<8x128xf32>
    %cst_14 = arith.constant dense<0.000000e+00> : vector<8x128xf32>
    %15 = tpu.matmul %13, %7, %cst_14 {dimension_numbers = #tpu.dot_dimension_numbers<[1], [0], [0], [1], [0, 0, 1, 1], [], []>, precision = #tpu.contract_precision<fp32>} : vector<8x128xf32>, vector<128x128xf32>, vector<8x128xf32> -> vector<8x128xf32>
    %16 = arith.addf %14, %15 : vector<8x128xf32>
    %17 = math.tanh %16 : vector<8x128xf32>
    %c24 = arith.constant 24 : index
    %c0_15 = arith.constant 0 : index
    %18 = vector.load %arg7[%c24, %c0_15] : memref<64x128xf32, #tpu.memory_space<vmem>>, vector<8x128xf32>
    %cst_16 = arith.constant dense<0.000000e+00> : vector<8x128xf32>
    %19 = tpu.matmul %17, %7, %cst_16 {dimension_numbers = #tpu.dot_dimension_numbers<[1], [0], [0], [1], [0, 0, 1, 1], [], []>, precision = #tpu.contract_precision<fp32>} : vector<8x128xf32>, vector<128x128xf32>, vector<8x128xf32> -> vector<8x128xf32>
    %20 = arith.addf %18, %19 : vector<8x128xf32>
    %21 = math.tanh %20 : vector<8x128xf32>
    %c32 = arith.constant 32 : index
    %c0_17 = arith.constant 0 : index
    %22 = vector.load %arg7[%c32, %c0_17] : memref<64x128xf32, #tpu.memory_space<vmem>>, vector<8x128xf32>
    %cst_18 = arith.constant dense<0.000000e+00> : vector<8x128xf32>
    %23 = tpu.matmul %21, %7, %cst_18 {dimension_numbers = #tpu.dot_dimension_numbers<[1], [0], [0], [1], [0, 0, 1, 1], [], []>, precision = #tpu.contract_precision<fp32>} : vector<8x128xf32>, vector<128x128xf32>, vector<8x128xf32> -> vector<8x128xf32>
    %24 = arith.addf %22, %23 : vector<8x128xf32>
    %25 = math.tanh %24 : vector<8x128xf32>
    %c40 = arith.constant 40 : index
    %c0_19 = arith.constant 0 : index
    %26 = vector.load %arg7[%c40, %c0_19] : memref<64x128xf32, #tpu.memory_space<vmem>>, vector<8x128xf32>
    %cst_20 = arith.constant dense<0.000000e+00> : vector<8x128xf32>
    %27 = tpu.matmul %25, %7, %cst_20 {dimension_numbers = #tpu.dot_dimension_numbers<[1], [0], [0], [1], [0, 0, 1, 1], [], []>, precision = #tpu.contract_precision<fp32>} : vector<8x128xf32>, vector<128x128xf32>, vector<8x128xf32> -> vector<8x128xf32>
    %28 = arith.addf %26, %27 : vector<8x128xf32>
    %29 = math.tanh %28 : vector<8x128xf32>
    %c48 = arith.constant 48 : index
    %c0_21 = arith.constant 0 : index
    %30 = vector.load %arg7[%c48, %c0_21] : memref<64x128xf32, #tpu.memory_space<vmem>>, vector<8x128xf32>
    %cst_22 = arith.constant dense<0.000000e+00> : vector<8x128xf32>
    %31 = tpu.matmul %29, %7, %cst_22 {dimension_numbers = #tpu.dot_dimension_numbers<[1], [0], [0], [1], [0, 0, 1, 1], [], []>, precision = #tpu.contract_precision<fp32>} : vector<8x128xf32>, vector<128x128xf32>, vector<8x128xf32> -> vector<8x128xf32>
    %32 = arith.addf %30, %31 : vector<8x128xf32>
    %33 = math.tanh %32 : vector<8x128xf32>
    %c56 = arith.constant 56 : index
    %c0_23 = arith.constant 0 : index
    %34 = vector.load %arg7[%c56, %c0_23] : memref<64x128xf32, #tpu.memory_space<vmem>>, vector<8x128xf32>
    %cst_24 = arith.constant dense<0.000000e+00> : vector<8x128xf32>
    %35 = tpu.matmul %33, %7, %cst_24 {dimension_numbers = #tpu.dot_dimension_numbers<[1], [0], [0], [1], [0, 0, 1, 1], [], []>, precision = #tpu.contract_precision<fp32>} : vector<8x128xf32>, vector<128x128xf32>, vector<8x128xf32> -> vector<8x128xf32>
    %36 = arith.addf %34, %35 : vector<8x128xf32>
    %37 = math.tanh %36 : vector<8x128xf32>
    %c0_25 = arith.constant 0 : index
    %c0_26 = arith.constant 0 : index
    %38 = vector.load %arg4[%c0_25, %c0_26] : memref<128x128xf32, #tpu.memory_space<vmem>>, vector<128x128xf32>
    %cst_27 = arith.constant dense<0.000000e+00> : vector<8x128xf32>
    %39 = tpu.matmul %37, %38, %cst_27 {dimension_numbers = #tpu.dot_dimension_numbers<[1], [0], [0], [1], [0, 0, 1, 1], [], []>, precision = #tpu.contract_precision<fp32>} : vector<8x128xf32>, vector<128x128xf32>, vector<8x128xf32> -> vector<8x128xf32>
    %c0_28 = arith.constant 0 : index
    %c0_29 = arith.constant 0 : index
    %40 = vector.load %arg5[%c0_28, %c0_29] : memref<1x128xf32, #tpu.memory_space<vmem>>, vector<1x128xf32>
    %41 = vector.broadcast %40 : vector<1x128xf32> to vector<8x128xf32>
    %42 = arith.addf %39, %41 : vector<8x128xf32>
    %c0_30 = arith.constant 0 : index
    %c0_31 = arith.constant 0 : index
    %43 = vector.load %arg6[%c0_30, %c0_31] : memref<8x128xf32, #tpu.memory_space<vmem>>, vector<8x128xf32>
    tpu.vector_store %arg6[%c0_30, %c0_31], %42 {strides = array<i32>} : memref<8x128xf32, #tpu.memory_space<vmem>>, vector<8x128xf32>,
    return
  }
}

</mosaic_0001>

<llo_original>
// kernel: tpu_custom_call.1
$region0: #{tpu_custom_call.1}
  #allocation0 [shape = 'u32[]', space=smem, size = 0x4, offset = 0x4, fixed_abs, tag = 'smem constant byte address 0x4 - core index']
  #allocation1 [shape = 'u32[144,128]{1,0:T(1,128)}', space=vmem, size = 0x12000, scoped, tag = 'internal scratch']
  #allocation2 [shape = 'f32[64,128]{1,0:T(8,128)}', space=vmem, size = 0x8000, scoped, tag = 'scratch operand']
  %s0 = inlined_call_operand.vmem [shape: f32[64,16], index: 0, kind: input, shape index: {}]
  %s1 = inlined_call_operand.vmem [shape: f32[16,128], index: 1, kind: input, shape index: {}]
  %s2 = inlined_call_operand.hbm [shape: f32[128,128], index: 2, kind: input, shape index: {}]
  %s3 = inlined_call_operand.vmem [shape: f32[1,128], index: 3, kind: input, shape index: {}]
  %s4 = inlined_call_operand.hbm [shape: f32[128,128], index: 4, kind: input, shape index: {}]
  %s5 = inlined_call_operand.vmem [shape: f32[1,128], index: 5, kind: input, shape index: {}]
  %s6 = inlined_call_operand.hbm [shape: f32[8,128], index: 6, kind: output, shape index: {}]
  %s7 = sld [smem:[#allocation0]]
  $region42: #{tpu_custom_call.1} parent=0
    _
  %s9 = ssub.s32 1, %s7
  %s10 = scalar_select 0, %s9, %s7
  $region1: #{tpu_custom_call.1} parent=0
    #allocation3 [shape = 'u8[65536]{0}', space=vmem, size = 0x10000, scoped, tag = 'input window, operand 2, single buffered']
    #allocation4 [shape = 's32[1]{0}', space=sflag, size = 0x4, scoped, tag = 'scoped memory for tpu_custom_call.1']
    #allocation5 [shape = 's32[1]{0}', space=sflag, size = 0x4, scoped, tag = 'scoped memory for tpu_custom_call.1']
    #allocation6 [shape = 'u8[65536]{0}', space=vmem, size = 0x10000, scoped, tag = 'input window, operand 4, single buffered']
    #allocation7 [shape = 's32[1]{0}', space=sflag, size = 0x4, scoped, tag = 'scoped memory for tpu_custom_call.1']
    #allocation8 [shape = 'u8[4096]{0}', space=vmem, size = 0x1000, scoped, tag = 'output window, operand 0, single buffered']
    %11 = vsyncpa [#allocation4], 0
    %12 = vsyncpa [#allocation7], 0
    %13 = vsyncpa [#allocation5], 0
    // Predicated region
    $region2: #{tpu_custom_call.1} parent=1 // pred_check
      _
    $region3: #{tpu_custom_call.1} parent=1 // pred_check_branch
      %15 = sbr.rel (0) target = $region5
    $region4: #{tpu_custom_call.1} parent=1 // pred_region
      _
    $region5: #{tpu_custom_call.1} parent=1 // pred_fallthru
      _
    // Predicated region
    $region6: #{tpu_custom_call.1} parent=1 // pred_check
      _
    $region7: #{tpu_custom_call.1} parent=1 // pred_check_branch
      %17 = sbr.rel (0) target = $region9
    $region8: #{tpu_custom_call.1} parent=1 // pred_region
      _
    $region9: #{tpu_custom_call.1} parent=1 // pred_fallthru
      _
    // Predicated region
    $region10: #{tpu_custom_call.1} parent=1 // pred_check
      _
    $region11: #{tpu_custom_call.1} parent=1 // pred_check_branch
      %19 = sbr.rel (0) target = $region13
    $region12: #{tpu_custom_call.1} parent=1 // pred_region
      %s21 = ssub.s32 2048, 2048
      %22 = vsyncadd [#allocation4], %s21
      %s23 = sshll.u32 [#allocation3], 4
      %s24 = int_to_ptr.vmem [resolvable:$true] %s23
      %29 = dma.hbm_to_vmem [thread:$0]  %s2, 2048, %s24, [#allocation4], 128, 128, 8
    $region13: #{tpu_custom_call.1} parent=1 // pred_fallthru
      _
    // Predicated region
    $region14: #{tpu_custom_call.1} parent=1 // pred_check
      _
    $region15: #{tpu_custom_call.1} parent=1 // pred_check_branch
      %31 = sbr.rel (0) target = $region17
    $region16: #{tpu_custom_call.1} parent=1 // pred_region
      _
    $region17: #{tpu_custom_call.1} parent=1 // pred_fallthru
      _
    // Predicated region
    $region18: #{tpu_custom_call.1} parent=1 // pred_check
      _
    $region19: #{tpu_custom_call.1} parent=1 // pred_check_branch
      %33 = sbr.rel (0) target = $region21
    $region20: #{tpu_custom_call.1} parent=1 // pred_region
      %s35 = ssub.s32 2048, 2048
      %36 = vsyncadd [#allocation7], %s35
      %s37 = sshll.u32 [#allocation6], 4
      %s38 = int_to_ptr.vmem [resolvable:$true] %s37
      %43 = dma.hbm_to_vmem [thread:$0]  %s4, 2048, %s38, [#allocation7], 128, 128, 8
    $region21: #{tpu_custom_call.1} parent=1 // pred_fallthru
      _
    // Predicated region
    $region22: #{tpu_custom_call.1} parent=1 // pred_check
      _
    $region23: #{tpu_custom_call.1} parent=1 // pred_check_branch
      %45 = sbr.rel (0) target = $region25
    $region24: #{tpu_custom_call.1} parent=1 // pred_region
      _
    $region25: #{tpu_custom_call.1} parent=1 // pred_fallthru
      _
    // Predicated region
    $region26: #{tpu_custom_call.1} parent=1 // pred_check
      _
    $region27: #{tpu_custom_call.1} parent=1 // pred_check_branch
      %47 = sbr.rel (0) target = $region29
    $region28: #{tpu_custom_call.1} parent=1 // pred_region
      %48 = dma.done [#allocation4], 2048
    $region29: #{tpu_custom_call.1} parent=1 // pred_fallthru
      _
    // Predicated region
    $region30: #{tpu_custom_call.1} parent=1 // pred_check
      _
    $region31: #{tpu_custom_call.1} parent=1 // pred_check_branch
      %50 = sbr.rel (0) target = $region33
    $region32: #{tpu_custom_call.1} parent=1 // pred_region
      %51 = dma.done [#allocation7], 2048
    $region33: #{tpu_custom_call.1} parent=1 // pred_fallthru
      _
    %v52 = vld [vmem:[%s0] sm:$0xff]
    %v53 = vld [vmem:[%s0 + $0x8] sm:$0xff]
    %v54 = vld [vmem:[%s0 + $0x10] sm:$0xff]
    %v55 = vld [vmem:[%s0 + $0x18] sm:$0xff]
    %v56 = vld [vmem:[%s0 + $0x20] sm:$0xff]
    %v57 = vld [vmem:[%s0 + $0x28] sm:$0xff]
    %v58 = vld [vmem:[%s0 + $0x30] sm:$0xff]
    %v59 = vld [vmem:[%s0 + $0x38] sm:$0xff]
    %v60 = vld [vmem:[%s1] sm:$0xff]
    %v61 = vld [vmem:[%s1 + $0x8] sm:$0xff]
    %v62 = vld [vmem:[%s3] sm:$0x1]
    %v64 = vlaneseq
    %v65 = vshrl.u32 %v64, 7
    %v66 = vsub.s32 0, %v65
    %v67 = vrot.slane %v62, %v66
    %vm69 = vcmask 130048
    %v71 = vsel %vm69, %v52, 0
    %v74 = vsel %vm69, %v53, 0
    %v77 = vsel %vm69, %v54, 0
    %v80 = vsel %vm69, %v55, 0
    %v83 = vsel %vm69, %v56, 0
    %v86 = vsel %vm69, %v57, 0
    %v89 = vsel %vm69, %v58, 0
    %v92 = vsel %vm69, %v59, 0
    %94 = vmatprep.subr.mxu0 0.0
    %v95 = vand.u32 %v60, 4294901760
    %96 = vmatpush1.msra.mxu0 %v95
    %97 = vmatprep.subr.mxu0 0.0
    %v98 = vand.u32 %v61, 4294901760
    %99 = vmatpush1.msra.mxu0 %v98
    %100 = vmatprep.subr.mxu0 0.0
    %101 = vmatpush1.msra.mxu0 0.0
    %102 = vmatprep.subr.mxu0 0.0
    %103 = vmatpush1.msra.mxu0 0.0
    %104 = vmatprep.subr.mxu0 0.0
    %105 = vmatpush1.msra.mxu0 0.0
    %106 = vmatprep.subr.mxu0 0.0
    %107 = vmatpush1.msra.mxu0 0.0
    %108 = vmatprep.subr.mxu0 0.0
    %109 = vmatpush1.msra.mxu0 0.0
    %110 = vmatprep.subr.mxu0 0.0
    %111 = vmatpush1.msra.mxu0 0.0
    %112 = vmatprep.subr.mxu0 0.0
    %113 = vmatpush1.msra.mxu0 0.0
    %114 = vmatprep.subr.mxu0 0.0
    %115 = vmatpush1.msra.mxu0 0.0
    %116 = vmatprep.subr.mxu0 0.0
    %117 = vmatpush1.msra.mxu0 0.0
    %118 = vmatprep.subr.mxu0 0.0
    %119 = vmatpush1.msra.mxu0 0.0
    %120 = vmatprep.subr.mxu0 0.0
    %121 = vmatpush1.msra.mxu0 0.0
    %122 = vmatprep.subr.mxu0 0.0
    %123 = vmatpush1.msra.mxu0 0.0
    %124 = vmatprep.subr.mxu0 0.0
    %125 = vmatpush1.msra.mxu0 0.0
    %126 = vmatprep.subr.mxu0 0.0
    %127 = vmatpush1.msra.mxu0 0.0
    %128 = vmatprep.subr.mxu0 0.0
    %129 = vmatpush1.msra.mxu0 0.0
    %130 = vmatprep.subr.mxu0 0.0
    %131 = vmatpush1.msra.mxu0 0.0
    %132 = vmatprep.subr.mxu0 0.0
    %133 = vmatpush1.msra.mxu0 0.0
    %134 = vmatprep.subr.mxu0 0.0
    %135 = vmatpush1.msra.mxu0 0.0
    %136 = vmatprep.subr.mxu0 0.0
    %137 = vmatpush1.msra.mxu0 0.0
    %138 = vmatprep.subr.mxu0 0.0
    %139 = vmatpush1.msra.mxu0 0.0
    %140 = vmatprep.subr.mxu0 0.0
    %141 = vmatpush1.msra.mxu0 0.0
    %142 = vmatprep.subr.mxu0 0.0
    %143 = vmatpush1.msra.mxu0 0.0
    %144 = vmatprep.subr.mxu0 0.0
    %145 = vmatpush1.msra.mxu0 0.0
    %146 = vmatprep.subr.mxu0 0.0
    %147 = vmatpush1.msra.mxu0 0.0
    %148 = vmatprep.subr.mxu0 0.0
    %149 = vmatpush1.msra.mxu0 0.0
    %150 = vmatprep.subr.mxu0 0.0
    %151 = vmatpush1.msra.mxu0 0.0
    %152 = vmatprep.subr.mxu0 0.0
    %153 = vmatpush1.msra.mxu0 0.0
    %154 = vmatprep.subr.mxu0 0.0
    %155 = vmatpush1.msra.mxu0 0.0
    %156 = vmatprep.subr.mxu0 0.0
    %157 = vmatpush1.msra.mxu0 0.0
    %158 = vmatprep.subr.mxu0 0.0
    %159 = vmatpush1.msra.mxu0 0.0
    %160 = vmatprep.mubr.f32.mxu0 0.0
    %v161 = vand.u32 %v71, 4294901760
    %v162 = vsub.f32 %v71, %v161
    %v163 = vand.u32 %v162, 4294901760
    %v164 = vsub.f32 %v162, %v163
    %v165 = vand.u32 %v164, 4294901760
    %166 = vmatmul.mubr.f32.gmra.mrb[0].mxu0 %v165
    %v167 = vpop.f32.mrb[0].mxu0
    %v168 = vadd.f32 %v67, %v167
    %v169 = vpop.f32.mrb[0].mxu0
    %170 = vmatprep.mubr.f32.mxu0 0.0
    %v171 = vand.u32 %v74, 4294901760
    %v172 = vsub.f32 %v74, %v171
    %v173 = vand.u32 %v172, 4294901760
    %v174 = vsub.f32 %v172, %v173
    %v175 = vand.u32 %v174, 4294901760
    %176 = vmatmul.mubr.f32.gmra.mrb[0].mxu0 %v175
    %v177 = vpop.f32.mrb[0].mxu0
    %v178 = vadd.f32 %v67, %v177
    %v179 = vpop.f32.mrb[0].mxu0
    %180 = vmatprep.mubr.f32.mxu0 0.0
    %v181 = vand.u32 %v77, 4294901760
    %v182 = vsub.f32 %v77, %v181
    %v183 = vand.u32 %v182, 4294901760
    %v184 = vsub.f32 %v182, %v183
    %v185 = vand.u32 %v184, 4294901760
    %186 = vmatmul.mubr.f32.gmra.mrb[0].mxu0 %v185
    %v187 = vpop.f32.mrb[0].mxu0
    %v188 = vadd.f32 %v67, %v187
    %v189 = vpop.f32.mrb[0].mxu0
    %190 = vmatprep.mubr.f32.mxu0 0.0
    %v191 = vand.u32 %v80, 4294901760
    %v192 = vsub.f32 %v80, %v191
    %v193 = vand.u32 %v192, 4294901760
    %v194 = vsub.f32 %v192, %v193
    %v195 = vand.u32 %v194, 4294901760
    %196 = vmatmul.mubr.f32.gmra.mrb[0].mxu0 %v195
    %v197 = vpop.f32.mrb[0].mxu0
    %v198 = vadd.f32 %v67, %v197
    %v199 = vpop.f32.mrb[0].mxu0
    %200 = vmatprep.mubr.f32.mxu0 0.0
    %v201 = vand.u32 %v83, 4294901760
    %v202 = vsub.f32 %v83, %v201
    %v203 = vand.u32 %v202, 4294901760
    %v204 = vsub.f32 %v202, %v203
    %v205 = vand.u32 %v204, 4294901760
    %206 = vmatmul.mubr.f32.gmra.mrb[0].mxu0 %v205
    %v207 = vpop.f32.mrb[0].mxu0
    %v208 = vadd.f32 %v67, %v207
    %v209 = vpop.f32.mrb[0].mxu0
    %210 = vmatprep.mubr.f32.mxu0 0.0
    %v211 = vand.u32 %v86, 4294901760
    %v212 = vsub.f32 %v86, %v211
    %v213 = vand.u32 %v212, 4294901760
    %v214 = vsub.f32 %v212, %v213
    %v215 = vand.u32 %v214, 4294901760
    %216 = vmatmul.mubr.f32.gmra.mrb[0].mxu0 %v215
    %v217 = vpop.f32.mrb[0].mxu0
    %v218 = vadd.f32 %v67, %v217
    %v219 = vpop.f32.mrb[0].mxu0
    %220 = vmatprep.mubr.f32.mxu0 0.0
    %v221 = vand.u32 %v89, 4294901760
    %v222 = vsub.f32 %v89, %v221
    %v223 = vand.u32 %v222, 4294901760
    %v224 = vsub.f32 %v222, %v223
    %v225 = vand.u32 %v224, 4294901760
    %226 = vmatmul.mubr.f32.gmra.mrb[0].mxu0 %v225
    %v227 = vpop.f32.mrb[0].mxu0
    %v228 = vadd.f32 %v67, %v227
    %v229 = vpop.f32.mrb[0].mxu0
    %230 = vmatprep.mubr.f32.mxu0 0.0
    %v231 = vand.u32 %v92, 4294901760
    %v232 = vsub.f32 %v92, %v231
    %v233 = vand.u32 %v232, 4294901760
    %v234 = vsub.f32 %v232, %v233
    %v235 = vand.u32 %v234, 4294901760
    %236 = vmatmul.mubr.f32.gmra.mrb[0].mxu0 %v235
    %v237 = vpop.f32.mrb[0].mxu0
    %v238 = vadd.f32 %v67, %v237
    %v239 = vpop.f32.mrb[0].mxu0
    %240 = vdwg.mxu0
    %241 = vmatprep.subr.mxu0 0.0
    %v242 = vand.u32 %v60, 4294901760
    %v243 = vsub.f32 %v60, %v242
    %v244 = vand.u32 %v243, 4294901760
    %v245 = vsub.f32 %v243, %v244
    %v246 = vand.u32 %v245, 4294901760
    %247 = vmatpush1.msra.mxu0 %v246
    %248 = vmatprep.subr.mxu0 0.0
    %v249 = vand.u32 %v61, 4294901760
    %v250 = vsub.f32 %v61, %v249
    %v251 = vand.u32 %v250, 4294901760
    %v252 = vsub.f32 %v250, %v251
    %v253 = vand.u32 %v252, 4294901760
    %254 = vmatpush1.msra.mxu0 %v253
    %255 = vmatprep.subr.mxu0 0.0
    %256 = vmatpush1.msra.mxu0 0.0
    %257 = vmatprep.subr.mxu0 0.0
    %258 = vmatpush1.msra.mxu0 0.0
    %259 = vmatprep.subr.mxu0 0.0
    %260 = vmatpush1.msra.mxu0 0.0
    %261 = vmatprep.subr.mxu0 0.0
    %262 = vmatpush1.msra.mxu0 0.0
    %263 = vmatprep.subr.mxu0 0.0
    %264 = vmatpush1.msra.mxu0 0.0
    %265 = vmatprep.subr.mxu0 0.0
    %266 = vmatpush1.msra.mxu0 0.0
    %267 = vmatprep.subr.mxu0 0.0
    %268 = vmatpush1.msra.mxu0 0.0
    %269 = vmatprep.subr.mxu0 0.0
    %270 = vmatpush1.msra.mxu0 0.0
    %271 = vmatprep.subr.mxu0 0.0
    %272 = vmatpush1.msra.mxu0 0.0
    %273 = vmatprep.subr.mxu0 0.0
    %274 = vmatpush1.msra.mxu0 0.0
    %275 = vmatprep.subr.mxu0 0.0
    %276 = vmatpush1.msra.mxu0 0.0
    %277 = vmatprep.subr.mxu0 0.0
    %278 = vmatpush1.msra.mxu0 0.0
    %279 = vmatprep.subr.mxu0 0.0
    %280 = vmatpush1.msra.mxu0 0.0
    %281 = vmatprep.subr.mxu0 0.0
    %282 = vmatpush1.msra.mxu0 0.0
    %283 = vmatprep.subr.mxu0 0.0
    %284 = vmatpush1.msra.mxu0 0.0
    %285 = vmatprep.subr.mxu0 0.0
    %286 = vmatpush1.msra.mxu0 0.0
    %287 = vmatprep.subr.mxu0 0.0
    %288 = vmatpush1.msra.mxu0 0.0
    %289 = vmatprep.subr.mxu0 0.0
    %290 = vmatpush1.msra.mxu0 0.0
    %291 = vmatprep.subr.mxu0 0.0
    %292 = vmatpush1.msra.mxu0 0.0
    %293 = vmatprep.subr.mxu0 0.0
    %294 = vmatpush1.msra.mxu0 0.0
    %295 = vmatprep.subr.mxu0 0.0
    %296 = vmatpush1.msra.mxu0 0.0
    %297 = vmatprep.subr.mxu0 0.0
    %298 = vmatpush1.msra.mxu0 0.0
    %299 = vmatprep.subr.mxu0 0.0
    %300 = vmatpush1.msra.mxu0 0.0
    %301 = vmatprep.subr.mxu0 0.0
    %302 = vmatpush1.msra.mxu0 0.0
    %303 = vmatprep.subr.mxu0 0.0
    %304 = vmatpush1.msra.mxu0 0.0
    %305 = vmatprep.subr.mxu0 0.0
    %306 = vmatpush1.msra.mxu0 0.0
    %307 = vmatprep.subr.mxu0 0.0
    %308 = vmatpush1.msra.mxu0 0.0
    %309 = vmatprep.subr.mxu0 0.0
    %310 = vmatpush1.msra.mxu0 0.0
    %311 = vmatprep.subr.mxu0 0.0
    %312 = vmatpush1.msra.mxu0 0.0
    %313 = vmatprep.subr.mxu0 0.0
    %314 = vmatpush1.msra.mxu0 0.0
    %315 = vmatprep.mubr.f32.mxu0 0.0
    %v316 = vand.u32 %v71, 4294901760
    %317 = vmatmul.mubr.f32.gmra.mrb[0].mxu0 %v316
    %v318 = vpop.f32.mrb[0].mxu0
    %v319 = vadd.f32 %v168, %v318
    %v320 = vpop.f32.mrb[0].mxu0
    %321 = vmatprep.mubr.f32.mxu0 0.0
    %v322 = vand.u32 %v74, 4294901760
    %323 = vmatmul.mubr.f32.gmra.mrb[0].mxu0 %v322
    %v324 = vpop.f32.mrb[0].mxu0
    %v325 = vadd.f32 %v178, %v324
    %v326 = vpop.f32.mrb[0].mxu0
    %327 = vmatprep.mubr.f32.mxu0 0.0
    %v328 = vand.u32 %v77, 4294901760
    %329 = vmatmul.mubr.f32.gmra.mrb[0].mxu0 %v328
    %v330 = vpop.f32.mrb[0].mxu0
    %v331 = vadd.f32 %v188, %v330
    %v332 = vpop.f32.mrb[0].mxu0
    %333 = vmatprep.mubr.f32.mxu0 0.0
    %v334 = vand.u32 %v80, 4294901760
    %335 = vmatmul.mubr.f32.gmra.mrb[0].mxu0 %v334
    %v336 = vpop.f32.mrb[0].mxu0
    %v337 = vadd.f32 %v198, %v336
    %v338 = vpop.f32.mrb[0].mxu0
    %339 = vmatprep.mubr.f32.mxu0 0.0
    %v340 = vand.u32 %v83, 4294901760
    %341 = vmatmul.mubr.f32.gmra.mrb[0].mxu0 %v340
    %v342 = vpop.f32.mrb[0].mxu0
    %v343 = vadd.f32 %v208, %v342
    %v344 = vpop.f32.mrb[0].mxu0
    %345 = vmatprep.mubr.f32.mxu0 0.0
    %v346 = vand.u32 %v86, 4294901760
    %347 = vmatmul.mubr.f32.gmra.mrb[0].mxu0 %v346
    %v348 = vpop.f32.mrb[0].mxu0
    %v349 = vadd.f32 %v218, %v348
    %v350 = vpop.f32.mrb[0].mxu0
    %351 = vmatprep.mubr.f32.mxu0 0.0
    %v352 = vand.u32 %v89, 4294901760
    %353 = vmatmul.mubr.f32.gmra.mrb[0].mxu0 %v352
    %v354 = vpop.f32.mrb[0].mxu0
    %v355 = vadd.f32 %v228, %v354
    %v356 = vpop.f32.mrb[0].mxu0
    %357 = vmatprep.mubr.f32.mxu0 0.0
    %v358 = vand.u32 %v92, 4294901760
    %359 = vmatmul.mubr.f32.gmra.mrb[0].mxu0 %v358
    %v360 = vpop.f32.mrb[0].mxu0
    %v361 = vadd.f32 %v238, %v360
    %v362 = vpop.f32.mrb[0].mxu0
    %363 = vdwg.mxu0
    %364 = vmatprep.subr.mxu0 0.0
    %v365 = vand.u32 %v60, 4294901760
    %v366 = vsub.f32 %v60, %v365
    %367 = vmatpush1.msra.mxu0 %v366
    %368 = vmatprep.subr.mxu0 0.0
    %v369 = vand.u32 %v61, 4294901760
    %v370 = vsub.f32 %v61, %v369
    %371 = vmatpush1.msra.mxu0 %v370
    %372 = vmatprep.subr.mxu0 0.0
    %373 = vmatpush1.msra.mxu0 0.0
    %374 = vmatprep.subr.mxu0 0.0
    %375 = vmatpush1.msra.mxu0 0.0
    %376 = vmatprep.subr.mxu0 0.0
    %377 = vmatpush1.msra.mxu0 0.0
    %378 = vmatprep.subr.mxu0 0.0
    %379 = vmatpush1.msra.mxu0 0.0
    %380 = vmatprep.subr.mxu0 0.0
    %381 = vmatpush1.msra.mxu0 0.0
    %382 = vmatprep.subr.mxu0 0.0
    %383 = vmatpush1.msra.mxu0 0.0
    %384 = vmatprep.subr.mxu0 0.0
    %385 = vmatpush1.msra.mxu0 0.0
    %386 = vmatprep.subr.mxu0 0.0
    %387 = vmatpush1.msra.mxu0 0.0
    %388 = vmatprep.subr.mxu0 0.0
    %389 = vmatpush1.msra.mxu0 0.0
    %390 = vmatprep.subr.mxu0 0.0
    %391 = vmatpush1.msra.mxu0 0.0
    %392 = vmatprep.subr.mxu0 0.0
    %393 = vmatpush1.msra.mxu0 0.0
    %394 = vmatprep.subr.mxu0 0.0
    %395 = vmatpush1.msra.mxu0 0.0
    %396 = vmatprep.subr.mxu0 0.0
    %397 = vmatpush1.msra.mxu0 0.0
    %398 = vmatprep.subr.mxu0 0.0
    %399 = vmatpush1.msra.mxu0 0.0
    %400 = vmatprep.subr.mxu0 0.0
    %401 = vmatpush1.msra.mxu0 0.0
    %402 = vmatprep.subr.mxu0 0.0
    %403 = vmatpush1.msra.mxu0 0.0
    %404 = vmatprep.subr.mxu0 0.0
    %405 = vmatpush1.msra.mxu0 0.0
    %406 = vmatprep.subr.mxu0 0.0
    %407 = vmatpush1.msra.mxu0 0.0
    %408 = vmatprep.subr.mxu0 0.0
    %409 = vmatpush1.msra.mxu0 0.0
    %410 = vmatprep.subr.mxu0 0.0
    %411 = vmatpush1.msra.mxu0 0.0
    %412 = vmatprep.subr.mxu0 0.0
    %413 = vmatpush1.msra.mxu0 0.0
    %414 = vmatprep.subr.mxu0 0.0
    %415 = vmatpush1.msra.mxu0 0.0
    %416 = vmatprep.subr.mxu0 0.0
    %417 = vmatpush1.msra.mxu0 0.0
    %418 = vmatprep.subr.mxu0 0.0
    %419 = vmatpush1.msra.mxu0 0.0
    %420 = vmatprep.subr.mxu0 0.0
    %421 = vmatpush1.msra.mxu0 0.0
    %422 = vmatprep.subr.mxu0 0.0
    %423 = vmatpush1.msra.mxu0 0.0
    %424 = vmatprep.subr.mxu0 0.0
    %425 = vmatpush1.msra.mxu0 0.0
    %426 = vmatprep.subr.mxu0 0.0
    %427 = vmatpush1.msra.mxu0 0.0
    %428 = vmatprep.subr.mxu0 0.0
    %429 = vmatpush1.msra.mxu0 0.0
    %430 = vmatprep.subr.mxu0 0.0
    %431 = vmatpush1.msra.mxu0 0.0
    %432 = vmatprep.mubr.f32.mxu0 0.0
    %v433 = vand.u32 %v71, 4294901760
    %v434 = vsub.f32 %v71, %v433
    %435 = vmatmul.mubr.f32.gmra.mrb[0].mxu0 %v434
    %v436 = vpop.f32.mrb[0].mxu0
    %v437 = vadd.f32 %v319, %v436
    %v438 = vpop.f32.mrb[0].mxu0
    %439 = vmatprep.mubr.f32.mxu0 0.0
    %v440 = vand.u32 %v74, 4294901760
    %v441 = vsub.f32 %v74, %v440
    %442 = vmatmul.mubr.f32.gmra.mrb[0].mxu0 %v441
    %v443 = vpop.f32.mrb[0].mxu0
    %v444 = vadd.f32 %v325, %v443
    %v445 = vpop.f32.mrb[0].mxu0
    %446 = vmatprep.mubr.f32.mxu0 0.0
    %v447 = vand.u32 %v77, 4294901760
    %v448 = vsub.f32 %v77, %v447
    %449 = vmatmul.mubr.f32.gmra.mrb[0].mxu0 %v448
    %v450 = vpop.f32.mrb[0].mxu0
    %v451 = vadd.f32 %v331, %v450
    %v452 = vpop.f32.mrb[0].mxu0
    %453 = vmatprep.mubr.f32.mxu0 0.0
    %v454 = vand.u32 %v80, 4294901760
    %v455 = vsub.f32 %v80, %v454
    %456 = vmatmul.mubr.f32.gmra.mrb[0].mxu0 %v455
    %v457 = vpop.f32.mrb[0].mxu0
    %v458 = vadd.f32 %v337, %v457
    %v459 = vpop.f32.mrb[0].mxu0
    %460 = vmatprep.mubr.f32.mxu0 0.0
    %v461 = vand.u32 %v83, 4294901760
    %v462 = vsub.f32 %v83, %v461
    %463 = vmatmul.mubr.f32.gmra.mrb[0].mxu0 %v462
    %v464 = vpop.f32.mrb[0].mxu0
    %v465 = vadd.f32 %v343, %v464
    %v466 = vpop.f32.mrb[0].mxu0
    %467 = vmatprep.mubr.f32.mxu0 0.0
    %v468 = vand.u32 %v86, 4294901760
    %v469 = vsub.f32 %v86, %v468
    %470 = vmatmul.mubr.f32.gmra.mrb[0].mxu0 %v469
    %v471 = vpop.f32.mrb[0].mxu0
    %v472 = vadd.f32 %v349, %v471
    %v473 = vpop.f32.mrb[0].mxu0
    %474 = vmatprep.mubr.f32.mxu0 0.0
    %v475 = vand.u32 %v89, 4294901760
    %v476 = vsub.f32 %v89, %v475
    %477 = vmatmul.mubr.f32.gmra.mrb[0].mxu0 %v476
    %v478 = vpop.f32.mrb[0].mxu0
    %v479 = vadd.f32 %v355, %v478
    %v480 = vpop.f32.mrb[0].mxu0
    %481 = vmatprep.mubr.f32.mxu0 0.0
    %v482 = vand.u32 %v92, 4294901760
    %v483 = vsub.f32 %v92, %v482
    %484 = vmatmul.mubr.f32.gmra.mrb[0].mxu0 %v483
    %v485 = vpop.f32.mrb[0].mxu0
    %v486 = vadd.f32 %v361, %v485
    %v487 = vpop.f32.mrb[0].mxu0
    %488 = vdwg.mxu0
    %489 = vmatprep.subr.mxu0 0.0
    %v490 = vand.u32 %v60, 4294901760
    %491 = vmatpush1.msra.mxu0 %v490
    %492 = vmatprep.subr.mxu0 0.0
    %v493 = vand.u32 %v61, 4294901760
    %494 = vmatpush1.msra.mxu0 %v493
    %495 = vmatprep.subr.mxu0 0.0
    %496 = vmatpush1.msra.mxu0 0.0
    %497 = vmatprep.subr.mxu0 0.0
    %498 = vmatpush1.msra.mxu0 0.0
    %499 = vmatprep.subr.mxu0 0.0
    %500 = vmatpush1.msra.mxu0 0.0
    %501 = vmatprep.subr.mxu0 0.0
    %502 = vmatpush1.msra.mxu0 0.0
    %503 = vmatprep.subr.mxu0 0.0
    %504 = vmatpush1.msra.mxu0 0.0
    %505 = vmatprep.subr.mxu0 0.0
    %506 = vmatpush1.msra.mxu0 0.0
    %507 = vmatprep.subr.mxu0 0.0
    %508 = vmatpush1.msra.mxu0 0.0
    %509 = vmatprep.subr.mxu0 0.0
    %510 = vmatpush1.msra.mxu0 0.0
    %511 = vmatprep.subr.mxu0 0.0
    %512 = vmatpush1.msra.mxu0 0.0
    %513 = vmatprep.subr.mxu0 0.0
    %514 = vmatpush1.msra.mxu0 0.0
    %515 = vmatprep.subr.mxu0 0.0
    %516 = vmatpush1.msra.mxu0 0.0
    %517 = vmatprep.subr.mxu0 0.0
    %518 = vmatpush1.msra.mxu0 0.0
    %519 = vmatprep.subr.mxu0 0.0
    %520 = vmatpush1.msra.mxu0 0.0
    %521 = vmatprep.subr.mxu0 0.0
    %522 = vmatpush1.msra.mxu0 0.0
    %523 = vmatprep.subr.mxu0 0.0
    %524 = vmatpush1.msra.mxu0 0.0
    %525 = vmatprep.subr.mxu0 0.0
    %526 = vmatpush1.msra.mxu0 0.0
    %527 = vmatprep.subr.mxu0 0.0
    %528 = vmatpush1.msra.mxu0 0.0
    %529 = vmatprep.subr.mxu0 0.0
    %530 = vmatpush1.msra.mxu0 0.0
    %531 = vmatprep.subr.mxu0 0.0
    %532 = vmatpush1.msra.mxu0 0.0
    %533 = vmatprep.subr.mxu0 0.0
    %534 = vmatpush1.msra.mxu0 0.0
    %535 = vmatprep.subr.mxu0 0.0
    %536 = vmatpush1.msra.mxu0 0.0
    %537 = vmatprep.subr.mxu0 0.0
    %538 = vmatpush1.msra.mxu0 0.0
    %539 = vmatprep.subr.mxu0 0.0
    %540 = vmatpush1.msra.mxu0 0.0
    %541 = vmatprep.subr.mxu0 0.0
    %542 = vmatpush1.msra.mxu0 0.0
    %543 = vmatprep.subr.mxu0 0.0
    %544 = vmatpush1.msra.mxu0 0.0
    %545 = vmatprep.subr.mxu0 0.0
    %546 = vmatpush1.msra.mxu0 0.0
    %547 = vmatprep.subr.mxu0 0.0
    %548 = vmatpush1.msra.mxu0 0.0
    %549 = vmatprep.subr.mxu0 0.0
    %550 = vmatpush1.msra.mxu0 0.0
    %551 = vmatprep.subr.mxu0 0.0
    %552 = vmatpush1.msra.mxu0 0.0
    %553 = vmatprep.subr.mxu0 0.0
    %554 = vmatpush1.msra.mxu0 0.0
    %555 = vmatprep.mubr.f32.mxu0 0.0
    %v556 = vand.u32 %v71, 4294901760
    %v557 = vsub.f32 %v71, %v556
    %v558 = vand.u32 %v557, 4294901760
    %559 = vmatmul.mubr.f32.gmra.mrb[0].mxu0 %v558
    %v560 = vpop.f32.mrb[0].mxu0
    %v561 = vadd.f32 %v437, %v560
    %v562 = vpop.f32.mrb[0].mxu0
    %563 = vmatprep.mubr.f32.mxu0 0.0
    %v564 = vand.u32 %v74, 4294901760
    %v565 = vsub.f32 %v74, %v564
    %v566 = vand.u32 %v565, 4294901760
    %567 = vmatmul.mubr.f32.gmra.mrb[0].mxu0 %v566
    %v568 = vpop.f32.mrb[0].mxu0
    %v569 = vadd.f32 %v444, %v568
    %v570 = vpop.f32.mrb[0].mxu0
    %571 = vmatprep.mubr.f32.mxu0 0.0
    %v572 = vand.u32 %v77, 4294901760
    %v573 = vsub.f32 %v77, %v572
    %v574 = vand.u32 %v573, 4294901760
    %575 = vmatmul.mubr.f32.gmra.mrb[0].mxu0 %v574
    %v576 = vpop.f32.mrb[0].mxu0
    %v577 = vadd.f32 %v451, %v576
    %v578 = vpop.f32.mrb[0].mxu0
    %579 = vmatprep.mubr.f32.mxu0 0.0
    %v580 = vand.u32 %v80, 4294901760
    %v581 = vsub.f32 %v80, %v580
    %v582 = vand.u32 %v581, 4294901760
    %583 = vmatmul.mubr.f32.gmra.mrb[0].mxu0 %v582
    %v584 = vpop.f32.mrb[0].mxu0
    %v585 = vadd.f32 %v458, %v584
    %v586 = vpop.f32.mrb[0].mxu0
    %587 = vmatprep.mubr.f32.mxu0 0.0
    %v588 = vand.u32 %v83, 4294901760
    %v589 = vsub.f32 %v83, %v588
    %v590 = vand.u32 %v589, 4294901760
    %591 = vmatmul.mubr.f32.gmra.mrb[0].mxu0 %v590
    %v592 = vpop.f32.mrb[0].mxu0
    %v593 = vadd.f32 %v465, %v592
    %v594 = vpop.f32.mrb[0].mxu0
    %595 = vmatprep.mubr.f32.mxu0 0.0
    %v596 = vand.u32 %v86, 4294901760
    %v597 = vsub.f32 %v86, %v596
    %v598 = vand.u32 %v597, 4294901760
    %599 = vmatmul.mubr.f32.gmra.mrb[0].mxu0 %v598
    %v600 = vpop.f32.mrb[0].mxu0
    %v601 = vadd.f32 %v472, %v600
    %v602 = vpop.f32.mrb[0].mxu0
    %603 = vmatprep.mubr.f32.mxu0 0.0
    %v604 = vand.u32 %v89, 4294901760
    %v605 = vsub.f32 %v89, %v604
    %v606 = vand.u32 %v605, 4294901760
    %607 = vmatmul.mubr.f32.gmra.mrb[0].mxu0 %v606
    %v608 = vpop.f32.mrb[0].mxu0
    %v609 = vadd.f32 %v479, %v608
    %v610 = vpop.f32.mrb[0].mxu0
    %611 = vmatprep.mubr.f32.mxu0 0.0
    %v612 = vand.u32 %v92, 4294901760
    %v613 = vsub.f32 %v92, %v612
    %v614 = vand.u32 %v613, 4294901760
    %615 = vmatmul.mubr.f32.gmra.mrb[0].mxu0 %v614
    %v616 = vpop.f32.mrb[0].mxu0
    %v617 = vadd.f32 %v486, %v616
    %v618 = vpop.f32.mrb[0].mxu0
    %619 = vdwg.mxu0
    %620 = vmatprep.subr.mxu0 0.0
    %v621 = vand.u32 %v60, 4294901760
    %v622 = vsub.f32 %v60, %v621
    %v623 = vand.u32 %v622, 4294901760
    %624 = vmatpush1.msra.mxu0 %v623
    %625 = vmatprep.subr.mxu0 0.0
    %v626 = vand.u32 %v61, 4294901760
    %v627 = vsub.f32 %v61, %v626
    %v628 = vand.u32 %v627, 4294901760
    %629 = vmatpush1.msra.mxu0 %v628
    %630 = vmatprep.subr.mxu0 0.0
    %631 = vmatpush1.msra.mxu0 0.0
    %632 = vmatprep.subr.mxu0 0.0
    %633 = vmatpush1.msra.mxu0 0.0
    %634 = vmatprep.subr.mxu0 0.0
    %635 = vmatpush1.msra.mxu0 0.0
    %636 = vmatprep.subr.mxu0 0.0
    %637 = vmatpush1.msra.mxu0 0.0
    %638 = vmatprep.subr.mxu0 0.0
    %639 = vmatpush1.msra.mxu0 0.0
    %640 = vmatprep.subr.mxu0 0.0
    %641 = vmatpush1.msra.mxu0 0.0
    %642 = vmatprep.subr.mxu0 0.0
    %643 = vmatpush1.msra.mxu0 0.0
    %644 = vmatprep.subr.mxu0 0.0
    %645 = vmatpush1.msra.mxu0 0.0
    %646 = vmatprep.subr.mxu0 0.0
    %647 = vmatpush1.msra.mxu0 0.0
    %648 = vmatprep.subr.mxu0 0.0
    %649 = vmatpush1.msra.mxu0 0.0
    %650 = vmatprep.subr.mxu0 0.0
    %651 = vmatpush1.msra.mxu0 0.0
    %652 = vmatprep.subr.mxu0 0.0
    %653 = vmatpush1.msra.mxu0 0.0
    %654 = vmatprep.subr.mxu0 0.0
    %655 = vmatpush1.msra.mxu0 0.0
    %656 = vmatprep.subr.mxu0 0.0
    %657 = vmatpush1.msra.mxu0 0.0
    %658 = vmatprep.subr.mxu0 0.0
    %659 = vmatpush1.msra.mxu0 0.0
    %660 = vmatprep.subr.mxu0 0.0
    %661 = vmatpush1.msra.mxu0 0.0
    %662 = vmatprep.subr.mxu0 0.0
    %663 = vmatpush1.msra.mxu0 0.0
    %664 = vmatprep.subr.mxu0 0.0
    %665 = vmatpush1.msra.mxu0 0.0
    %666 = vmatprep.subr.mxu0 0.0
    %667 = vmatpush1.msra.mxu0 0.0
    %668 = vmatprep.subr.mxu0 0.0
    %669 = vmatpush1.msra.mxu0 0.0
    %670 = vmatprep.subr.mxu0 0.0
    %671 = vmatpush1.msra.mxu0 0.0
    %672 = vmatprep.subr.mxu0 0.0
    %673 = vmatpush1.msra.mxu0 0.0
    %674 = vmatprep.subr.mxu0 0.0
    %675 = vmatpush1.msra.mxu0 0.0
    %676 = vmatprep.subr.mxu0 0.0
    %677 = vmatpush1.msra.mxu0 0.0
    %678 = vmatprep.subr.mxu0 0.0
    %679 = vmatpush1.msra.mxu0 0.0
    %680 = vmatprep.subr.mxu0 0.0
    %681 = vmatpush1.msra.mxu0 0.0
    %682 = vmatprep.subr.mxu0 0.0
    %683 = vmatpush1.msra.mxu0 0.0
    %684 = vmatprep.subr.mxu0 0.0
    %685 = vmatpush1.msra.mxu0 0.0
    %686 = vmatprep.subr.mxu0 0.0
    %687 = vmatpush1.msra.mxu0 0.0
    %688 = vmatprep.subr.mxu0 0.0
    %689 = vmatpush1.msra.mxu0 0.0
    %690 = vmatprep.mubr.f32.mxu0 0.0
    %v691 = vand.u32 %v71, 4294901760
    %692 = vmatmul.mubr.f32.gmra.mrb[0].mxu0 %v691
    %v693 = vpop.f32.mrb[0].mxu0
    %v694 = vadd.f32 %v561, %v693
    %v695 = vpop.f32.mrb[0].mxu0
    %696 = vmatprep.mubr.f32.mxu0 0.0
    %v697 = vand.u32 %v74, 4294901760
    %698 = vmatmul.mubr.f32.gmra.mrb[0].mxu0 %v697
    %v699 = vpop.f32.mrb[0].mxu0
    %v700 = vadd.f32 %v569, %v699
    %v701 = vpop.f32.mrb[0].mxu0
    %702 = vmatprep.mubr.f32.mxu0 0.0
    %v703 = vand.u32 %v77, 4294901760
    %704 = vmatmul.mubr.f32.gmra.mrb[0].mxu0 %v703
    %v705 = vpop.f32.mrb[0].mxu0
    %v706 = vadd.f32 %v577, %v705
    %v707 = vpop.f32.mrb[0].mxu0
    %708 = vmatprep.mubr.f32.mxu0 0.0
    %v709 = vand.u32 %v80, 4294901760
    %710 = vmatmul.mubr.f32.gmra.mrb[0].mxu0 %v709
    %v711 = vpop.f32.mrb[0].mxu0
    %v712 = vadd.f32 %v585, %v711
    %v713 = vpop.f32.mrb[0].mxu0
    %714 = vmatprep.mubr.f32.mxu0 0.0
    %v715 = vand.u32 %v83, 4294901760
    %716 = vmatmul.mubr.f32.gmra.mrb[0].mxu0 %v715
    %v717 = vpop.f32.mrb[0].mxu0
    %v718 = vadd.f32 %v593, %v717
    %v719 = vpop.f32.mrb[0].mxu0
    %720 = vmatprep.mubr.f32.mxu0 0.0
    %v721 = vand.u32 %v86, 4294901760
    %722 = vmatmul.mubr.f32.gmra.mrb[0].mxu0 %v721
    %v723 = vpop.f32.mrb[0].mxu0
    %v724 = vadd.f32 %v601, %v723
    %v725 = vpop.f32.mrb[0].mxu0
    %726 = vmatprep.mubr.f32.mxu0 0.0
    %v727 = vand.u32 %v89, 4294901760
    %728 = vmatmul.mubr.f32.gmra.mrb[0].mxu0 %v727
    %v729 = vpop.f32.mrb[0].mxu0
    %v730 = vadd.f32 %v609, %v729
    %v731 = vpop.f32.mrb[0].mxu0
    %732 = vmatprep.mubr.f32.mxu0 0.0
    %v733 = vand.u32 %v92, 4294901760
    %734 = vmatmul.mubr.f32.gmra.mrb[0].mxu0 %v733
    %v735 = vpop.f32.mrb[0].mxu0
    %v736 = vadd.f32 %v617, %v735
    %v737 = vpop.f32.mrb[0].mxu0
    %738 = vdwg.mxu0
    %739 = vmatprep.subr.mxu0 0.0
    %v740 = vand.u32 %v60, 4294901760
    %741 = vmatpush1.msra.mxu0 %v740
    %742 = vmatprep.subr.mxu0 0.0
    %v743 = vand.u32 %v61, 4294901760
    %744 = vmatpush1.msra.mxu0 %v743
    %745 = vmatprep.subr.mxu0 0.0
    %746 = vmatpush1.msra.mxu0 0.0
    %747 = vmatprep.subr.mxu0 0.0
    %748 = vmatpush1.msra.mxu0 0.0
    %749 = vmatprep.subr.mxu0 0.0
    %750 = vmatpush1.msra.mxu0 0.0
    %751 = vmatprep.subr.mxu0 0.0
    %752 = vmatpush1.msra.mxu0 0.0
    %753 = vmatprep.subr.mxu0 0.0
    %754 = vmatpush1.msra.mxu0 0.0
    %755 = vmatprep.subr.mxu0 0.0
    %756 = vmatpush1.msra.mxu0 0.0
    %757 = vmatprep.subr.mxu0 0.0
    %758 = vmatpush1.msra.mxu0 0.0
    %759 = vmatprep.subr.mxu0 0.0
    %760 = vmatpush1.msra.mxu0 0.0
    %761 = vmatprep.subr.mxu0 0.0
    %762 = vmatpush1.msra.mxu0 0.0
    %763 = vmatprep.subr.mxu0 0.0
    %764 = vmatpush1.msra.mxu0 0.0
    %765 = vmatprep.subr.mxu0 0.0
    %766 = vmatpush1.msra.mxu0 0.0
    %767 = vmatprep.subr.mxu0 0.0
    %768 = vmatpush1.msra.mxu0 0.0
    %769 = vmatprep.subr.mxu0 0.0
    %770 = vmatpush1.msra.mxu0 0.0
    %771 = vmatprep.subr.mxu0 0.0
    %772 = vmatpush1.msra.mxu0 0.0
    %773 = vmatprep.subr.mxu0 0.0
    %774 = vmatpush1.msra.mxu0 0.0
    %775 = vmatprep.subr.mxu0 0.0
    %776 = vmatpush1.msra.mxu0 0.0
    %777 = vmatprep.subr.mxu0 0.0
    %778 = vmatpush1.msra.mxu0 0.0
    %779 = vmatprep.subr.mxu0 0.0
    %780 = vmatpush1.msra.mxu0 0.0
    %781 = vmatprep.subr.mxu0 0.0
    %782 = vmatpush1.msra.mxu0 0.0
    %783 = vmatprep.subr.mxu0 0.0
    %784 = vmatpush1.msra.mxu0 0.0
    %785 = vmatprep.subr.mxu0 0.0
    %786 = vmatpush1.msra.mxu0 0.0
    %787 = vmatprep.subr.mxu0 0.0
    %788 = vmatpush1.msra.mxu0 0.0
    %789 = vmatprep.subr.mxu0 0.0
    %790 = vmatpush1.msra.mxu0 0.0
    %791 = vmatprep.subr.mxu0 0.0
    %792 = vmatpush1.msra.mxu0 0.0
    %793 = vmatprep.subr.mxu0 0.0
    %794 = vmatpush1.msra.mxu0 0.0
    %795 = vmatprep.subr.mxu0 0.0
    %796 = vmatpush1.msra.mxu0 0.0
    %797 = vmatprep.subr.mxu0 0.0
    %798 = vmatpush1.msra.mxu0 0.0
    %799 = vmatprep.subr.mxu0 0.0
    %800 = vmatpush1.msra.mxu0 0.0
    %801 = vmatprep.subr.mxu0 0.0
    %802 = vmatpush1.msra.mxu0 0.0
    %803 = vmatprep.subr.mxu0 0.0
    %804 = vmatpush1.msra.mxu0 0.0
    %805 = vmatprep.mubr.f32.mxu0 0.0
    %v806 = vand.u32 %v71, 4294901760
    %807 = vmatmul.mubr.f32.gmra.mrb[0].mxu0 %v806
    %v808 = vpop.f32.mrb[0].mxu0
    %v809 = vadd.f32 %v694, %v808
    %v810 = vpop.f32.mrb[0].mxu0
    %811 = vmatprep.mubr.f32.mxu0 0.0
    %v812 = vand.u32 %v74, 4294901760
    %813 = vmatmul.mubr.f32.gmra.mrb[0].mxu0 %v812
    %v814 = vpop.f32.mrb[0].mxu0
    %v815 = vadd.f32 %v700, %v814
    %v816 = vpop.f32.mrb[0].mxu0
    %817 = vmatprep.mubr.f32.mxu0 0.0
    %v818 = vand.u32 %v77, 4294901760
    %819 = vmatmul.mubr.f32.gmra.mrb[0].mxu0 %v818
    %v820 = vpop.f32.mrb[0].mxu0
    %v821 = vadd.f32 %v706, %v820
    %v822 = vpop.f32.mrb[0].mxu0
    %823 = vmatprep.mubr.f32.mxu0 0.0
    %v824 = vand.u32 %v80, 4294901760
    %825 = vmatmul.mubr.f32.gmra.mrb[0].mxu0 %v824
    %v826 = vpop.f32.mrb[0].mxu0
    %v827 = vadd.f32 %v712, %v826
    %v828 = vpop.f32.mrb[0].mxu0
    %829 = vmatprep.mubr.f32.mxu0 0.0
    %v830 = vand.u32 %v83, 4294901760
    %831 = vmatmul.mubr.f32.gmra.mrb[0].mxu0 %v830
    %v832 = vpop.f32.mrb[0].mxu0
    %v833 = vadd.f32 %v718, %v832
    %v834 = vpop.f32.mrb[0].mxu0
    %835 = vmatprep.mubr.f32.mxu0 0.0
    %v836 = vand.u32 %v86, 4294901760
    %837 = vmatmul.mubr.f32.gmra.mrb[0].mxu0 %v836
    %v838 = vpop.f32.mrb[0].mxu0
    %v839 = vadd.f32 %v724, %v838
    %v840 = vpop.f32.mrb[0].mxu0
    %841 = vmatprep.mubr.f32.mxu0 0.0
    %v842 = vand.u32 %v89, 4294901760
    %843 = vmatmul.mubr.f32.gmra.mrb[0].mxu0 %v842
    %v844 = vpop.f32.mrb[0].mxu0
    %v845 = vadd.f32 %v730, %v844
    %v846 = vpop.f32.mrb[0].mxu0
    %847 = vmatprep.mubr.f32.mxu0 0.0
    %v848 = vand.u32 %v92, 4294901760
    %849 = vmatmul.mubr.f32.gmra.mrb[0].mxu0 %v848
    %v850 = vpop.f32.mrb[0].mxu0
    %v851 = vadd.f32 %v736, %v850
    %v852 = vpop.f32.mrb[0].mxu0
    %853 = vdwg.mxu0
    %854 = vst [vmem:[#allocation2] sm:$0xff] %v809
    %855 = vst [vmem:[#allocation2 + $0x8] sm:$0xff] %v815
    %856 = vst [vmem:[#allocation2 + $0x10] sm:$0xff] %v821
    %857 = vst [vmem:[#allocation2 + $0x18] sm:$0xff] %v827
    %858 = vst [vmem:[#allocation2 + $0x20] sm:$0xff] %v833
    %859 = vst [vmem:[#allocation2 + $0x28] sm:$0xff] %v839
    %860 = vst [vmem:[#allocation2 + $0x30] sm:$0xff] %v845
    %861 = vst [vmem:[#allocation2 + $0x38] sm:$0xff] %v851
    %v862 = vld [vmem:[#allocation3] sm:$0xff]
    %v863 = vld [vmem:[#allocation3 + $0x8] sm:$0xff]
    %v864 = vld [vmem:[#allocation3 + $0x10] sm:$0xff]
    %v865 = vld [vmem:[#allocation3 + $0x18] sm:$0xff]
    %v866 = vld [vmem:[#allocation3 + $0x20] sm:$0xff]
    %v867 = vld [vmem:[#allocation3 + $0x28] sm:$0xff]
    %v868 = vld [vmem:[#allocation3 + $0x30] sm:$0xff]
    %v869 = vld [vmem:[#allocation3 + $0x38] sm:$0xff]
    %v870 = vld [vmem:[#allocation3 + $0x40] sm:$0xff]
    %v871 = vld [vmem:[#allocation3 + $0x48] sm:$0xff]
    %v872 = vld [vmem:[#allocation3 + $0x50] sm:$0xff]
    %v873 = vld [vmem:[#allocation3 + $0x58] sm:$0xff]
    %v874 = vld [vmem:[#allocation3 + $0x60] sm:$0xff]
    %v875 = vld [vmem:[#allocation3 + $0x68] sm:$0xff]
    %v876 = vld [vmem:[#allocation3 + $0x70] sm:$0xff]
    %v877 = vld [vmem:[#allocation3 + $0x78] sm:$0xff]
    %v878 = vld [vmem:[#allocation2] sm:$0xff]
    %v879 = vtanh.pop %v878
    %v880 = vld [vmem:[#allocation2 + $0x8] sm:$0xff]
    %881 = vmatprep.subr.mxu0 0.0
    %v882 = vand.u32 %v862, 4294901760
    %883 = vmatpush1.msra.mxu0 %v882
    %884 = vmatprep.subr.mxu0 0.0
    %v885 = vand.u32 %v863, 4294901760
    %886 = vmatpush1.msra.mxu0 %v885
    %887 = vmatprep.subr.mxu0 0.0
    %v888 = vand.u32 %v864, 4294901760
    %889 = vmatpush1.msra.mxu0 %v888
    %890 = vmatprep.subr.mxu0 0.0
    %v891 = vand.u32 %v865, 4294901760
    %892 = vmatpush1.msra.mxu0 %v891
    %893 = vmatprep.subr.mxu0 0.0
    %v894 = vand.u32 %v866, 4294901760
    %895 = vmatpush1.msra.mxu0 %v894
    %896 = vmatprep.subr.mxu0 0.0
    %v897 = vand.u32 %v867, 4294901760
    %898 = vmatpush1.msra.mxu0 %v897
    %899 = vmatprep.subr.mxu0 0.0
    %v900 = vand.u32 %v868, 4294901760
    %901 = vmatpush1.msra.mxu0 %v900
    %902 = vmatprep.subr.mxu0 0.0
    %v903 = vand.u32 %v869, 4294901760
    %904 = vmatpush1.msra.mxu0 %v903
    %905 = vmatprep.subr.mxu0 0.0
    %v906 = vand.u32 %v870, 4294901760
    %907 = vmatpush1.msra.mxu0 %v906
    %908 = vmatprep.subr.mxu0 0.0
    %v909 = vand.u32 %v871, 4294901760
    %910 = vmatpush1.msra.mxu0 %v909
    %911 = vmatprep.subr.mxu0 0.0
    %v912 = vand.u32 %v872, 4294901760
    %913 = vmatpush1.msra.mxu0 %v912
    %914 = vmatprep.subr.mxu0 0.0
    %v915 = vand.u32 %v873, 4294901760
    %916 = vmatpush1.msra.mxu0 %v915
    %917 = vmatprep.subr.mxu0 0.0
    %v918 = vand.u32 %v874, 4294901760
    %919 = vmatpush1.msra.mxu0 %v918
    %920 = vmatprep.subr.mxu0 0.0
    %v921 = vand.u32 %v875, 4294901760
    %922 = vmatpush1.msra.mxu0 %v921
    %923 = vmatprep.subr.mxu0 0.0
    %v924 = vand.u32 %v876, 4294901760
    %925 = vmatpush1.msra.mxu0 %v924
    %926 = vmatprep.subr.mxu0 0.0
    %v927 = vand.u32 %v877, 4294901760
    %928 = vmatpush1.msra.mxu0 %v927
    %929 = vmatprep.subr.mxu0 0.0
    %930 = vmatpush1.msra.mxu0 0.0
    %931 = vmatprep.subr.mxu0 0.0
    %932 = vmatpush1.msra.mxu0 0.0
    %933 = vmatprep.subr.mxu0 0.0
    %934 = vmatpush1.msra.mxu0 0.0
    %935 = vmatprep.subr.mxu0 0.0
    %936 = vmatpush1.msra.mxu0 0.0
    %937 = vmatprep.subr.mxu0 0.0
    %938 = vmatpush1.msra.mxu0 0.0
    %939 = vmatprep.subr.mxu0 0.0
    %940 = vmatpush1.msra.mxu0 0.0
    %941 = vmatprep.subr.mxu0 0.0
    %942 = vmatpush1.msra.mxu0 0.0
    %943 = vmatprep.subr.mxu0 0.0
    %944 = vmatpush1.msra.mxu0 0.0
    %945 = vmatprep.subr.mxu0 0.0
    %946 = vmatpush1.msra.mxu0 0.0
    %947 = vmatprep.subr.mxu0 0.0
    %948 = vmatpush1.msra.mxu0 0.0
    %949 = vmatprep.subr.mxu0 0.0
    %950 = vmatpush1.msra.mxu0 0.0
    %951 = vmatprep.subr.mxu0 0.0
    %952 = vmatpush1.msra.mxu0 0.0
    %953 = vmatprep.subr.mxu0 0.0
    %954 = vmatpush1.msra.mxu0 0.0
    %955 = vmatprep.subr.mxu0 0.0
    %956 = vmatpush1.msra.mxu0 0.0
    %957 = vmatprep.subr.mxu0 0.0
    %958 = vmatpush1.msra.mxu0 0.0
    %959 = vmatprep.subr.mxu0 0.0
    %960 = vmatpush1.msra.mxu0 0.0
    %961 = vmatprep.mubr.f32.mxu0 0.0
    %v962 = vand.u32 %v879, 4294901760
    %v963 = vsub.f32 %v879, %v962
    %v964 = vand.u32 %v963, 4294901760
    %v965 = vsub.f32 %v963, %v964
    %v966 = vand.u32 %v965, 4294901760
    %967 = vmatmul.mubr.f32.gmra.mrb[0].mxu0 %v966
    %v968 = vpop.f32.mrb[0].mxu0
    %v969 = vadd.f32 0.0, %v968
    %v970 = vpop.f32.mrb[0].mxu0
    %971 = vdwg.mxu0
    %972 = vmatprep.subr.mxu0 0.0
    %v973 = vand.u32 %v862, 4294901760
    %v974 = vsub.f32 %v862, %v973
    %v975 = vand.u32 %v974, 4294901760
    %v976 = vsub.f32 %v974, %v975
    %v977 = vand.u32 %v976, 4294901760
    %978 = vmatpush1.msra.mxu0 %v977
    %979 = vmatprep.subr.mxu0 0.0
    %v980 = vand.u32 %v863, 4294901760
    %v981 = vsub.f32 %v863, %v980
    %v982 = vand.u32 %v981, 4294901760
    %v983 = vsub.f32 %v981, %v982
    %v984 = vand.u32 %v983, 4294901760
    %985 = vmatpush1.msra.mxu0 %v984
    %986 = vmatprep.subr.mxu0 0.0
    %v987 = vand.u32 %v864, 4294901760
    %v988 = vsub.f32 %v864, %v987
    %v989 = vand.u32 %v988, 4294901760
    %v990 = vsub.f32 %v988, %v989
    %v991 = vand.u32 %v990, 4294901760
    %992 = vmatpush1.msra.mxu0 %v991
    %993 = vmatprep.subr.mxu0 0.0
    %v994 = vand.u32 %v865, 4294901760
    %v995 = vsub.f32 %v865, %v994
    %v996 = vand.u32 %v995, 4294901760
    %v997 = vsub.f32 %v995, %v996
    %v998 = vand.u32 %v997, 4294901760
    %999 = vmatpush1.msra.mxu0 %v998
    %1000 = vmatprep.subr.mxu0 0.0
    %v1001 = vand.u32 %v866, 4294901760
    %v1002 = vsub.f32 %v866, %v1001
    %v1003 = vand.u32 %v1002, 4294901760
    %v1004 = vsub.f32 %v1002, %v1003
    %v1005 = vand.u32 %v1004, 4294901760
    %1006 = vmatpush1.msra.mxu0 %v1005
    %1007 = vmatprep.subr.mxu0 0.0
    %v1008 = vand.u32 %v867, 4294901760
    %v1009 = vsub.f32 %v867, %v1008
    %v1010 = vand.u32 %v1009, 4294901760
    %v1011 = vsub.f32 %v1009, %v1010
    %v1012 = vand.u32 %v1011, 4294901760
    %1013 = vmatpush1.msra.mxu0 %v1012
    %1014 = vmatprep.subr.mxu0 0.0
    %v1015 = vand.u32 %v868, 4294901760
    %v1016 = vsub.f32 %v868, %v1015
    %v1017 = vand.u32 %v1016, 4294901760
    %v1018 = vsub.f32 %v1016, %v1017
    %v1019 = vand.u32 %v1018, 4294901760
    %1020 = vmatpush1.msra.mxu0 %v1019
    %1021 = vmatprep.subr.mxu0 0.0
    %v1022 = vand.u32 %v869, 4294901760
    %v1023 = vsub.f32 %v869, %v1022
    %v1024 = vand.u32 %v1023, 4294901760
    %v1025 = vsub.f32 %v1023, %v1024
    %v1026 = vand.u32 %v1025, 4294901760
    %1027 = vmatpush1.msra.mxu0 %v1026
    %1028 = vmatprep.subr.mxu0 0.0
    %v1029 = vand.u32 %v870, 4294901760
    %v1030 = vsub.f32 %v870, %v1029
    %v1031 = vand.u32 %v1030, 4294901760
    %v1032 = vsub.f32 %v1030, %v1031
    %v1033 = vand.u32 %v1032, 4294901760
    %1034 = vmatpush1.msra.mxu0 %v1033
    %1035 = vmatprep.subr.mxu0 0.0
    %v1036 = vand.u32 %v871, 4294901760
    %v1037 = vsub.f32 %v871, %v1036
    %v1038 = vand.u32 %v1037, 4294901760
    %v1039 = vsub.f32 %v1037, %v1038
    %v1040 = vand.u32 %v1039, 4294901760
    %1041 = vmatpush1.msra.mxu0 %v1040
    %1042 = vmatprep.subr.mxu0 0.0
    %v1043 = vand.u32 %v872, 4294901760
    %v1044 = vsub.f32 %v872, %v1043
    %v1045 = vand.u32 %v1044, 4294901760
    %v1046 = vsub.f32 %v1044, %v1045
    %v1047 = vand.u32 %v1046, 4294901760
    %1048 = vmatpush1.msra.mxu0 %v1047
    %1049 = vmatprep.subr.mxu0 0.0
    %v1050 = vand.u32 %v873, 4294901760
    %v1051 = vsub.f32 %v873, %v1050
    %v1052 = vand.u32 %v1051, 4294901760
    %v1053 = vsub.f32 %v1051, %v1052
    %v1054 = vand.u32 %v1053, 4294901760
    %1055 = vmatpush1.msra.mxu0 %v1054
    %1056 = vmatprep.subr.mxu0 0.0
    %v1057 = vand.u32 %v874, 4294901760
    %v1058 = vsub.f32 %v874, %v1057
    %v1059 = vand.u32 %v1058, 4294901760
    %v1060 = vsub.f32 %v1058, %v1059
    %v1061 = vand.u32 %v1060, 4294901760
    %1062 = vmatpush1.msra.mxu0 %v1061
    %1063 = vmatprep.subr.mxu0 0.0
    %v1064 = vand.u32 %v875, 4294901760
    %v1065 = vsub.f32 %v875, %v1064
    %v1066 = vand.u32 %v1065, 4294901760
    %v1067 = vsub.f32 %v1065, %v1066
    %v1068 = vand.u32 %v1067, 4294901760
    %1069 = vmatpush1.msra.mxu0 %v1068
    %1070 = vmatprep.subr.mxu0 0.0
    %v1071 = vand.u32 %v876, 4294901760
    %v1072 = vsub.f32 %v876, %v1071
    %v1073 = vand.u32 %v1072, 4294901760
    %v1074 = vsub.f32 %v1072, %v1073
    %v1075 = vand.u32 %v1074, 4294901760
    %1076 = vmatpush1.msra.mxu0 %v1075
    %1077 = vmatprep.subr.mxu0 0.0
    %v1078 = vand.u32 %v877, 4294901760
    %v1079 = vsub.f32 %v877, %v1078
    %v1080 = vand.u32 %v1079, 4294901760
    %v1081 = vsub.f32 %v1079, %v1080
    %v1082 = vand.u32 %v1081, 4294901760
    %1083 = vmatpush1.msra.mxu0 %v1082
    %1084 = vmatprep.subr.mxu0 0.0
    %1085 = vmatpush1.msra.mxu0 0.0
    %1086 = vmatprep.subr.mxu0 0.0
    %1087 = vmatpush1.msra.mxu0 0.0
    %1088 = vmatprep.subr.mxu0 0.0
    %1089 = vmatpush1.msra.mxu0 0.0
    %1090 = vmatprep.subr.mxu0 0.0
    %1091 = vmatpush1.msra.mxu0 0.0
    %1092 = vmatprep.subr.mxu0 0.0
    %1093 = vmatpush1.msra.mxu0 0.0
    %1094 = vmatprep.subr.mxu0 0.0
    %1095 = vmatpush1.msra.mxu0 0.0
    %1096 = vmatprep.subr.mxu0 0.0
    %1097 = vmatpush1.msra.mxu0 0.0
    %1098 = vmatprep.subr.mxu0 0.0
    %1099 = vmatpush1.msra.mxu0 0.0
    %1100 = vmatprep.subr.mxu0 0.0
    %1101 = vmatpush1.msra.mxu0 0.0
    %1102 = vmatprep.subr.mxu0 0.0
    %1103 = vmatpush1.msra.mxu0 0.0
    %1104 = vmatprep.subr.mxu0 0.0
    %1105 = vmatpush1.msra.mxu0 0.0
    %1106 = vmatprep.subr.mxu0 0.0
    %1107 = vmatpush1.msra.mxu0 0.0
    %1108 = vmatprep.subr.mxu0 0.0
    %1109 = vmatpush1.msra.mxu0 0.0
    %1110 = vmatprep.subr.mxu0 0.0
    %1111 = vmatpush1.msra.mxu0 0.0
    %1112 = vmatprep.subr.mxu0 0.0
    %1113 = vmatpush1.msra.mxu0 0.0
    %1114 = vmatprep.subr.mxu0 0.0
    %1115 = vmatpush1.msra.mxu0 0.0
    %1116 = vmatprep.mubr.f32.mxu0 0.0
    %v1117 = vand.u32 %v879, 4294901760
    %1118 = vmatmul.mubr.f32.gmra.mrb[0].mxu0 %v1117
    %v1119 = vpop.f32.mrb[0].mxu0
    %v1120 = vadd.f32 %v969, %v1119
    %v1121 = vpop.f32.mrb[0].mxu0
    %1122 = vdwg.mxu0
    %1123 = vmatprep.subr.mxu0 0.0
    %v1124 = vand.u32 %v862, 4294901760
    %v1125 = vsub.f32 %v862, %v1124
    %1126 = vmatpush1.msra.mxu0 %v1125
    %1127 = vmatprep.subr.mxu0 0.0
    %v1128 = vand.u32 %v863, 4294901760
    %v1129 = vsub.f32 %v863, %v1128
    %1130 = vmatpush1.msra.mxu0 %v1129
    %1131 = vmatprep.subr.mxu0 0.0
    %v1132 = vand.u32 %v864, 4294901760
    %v1133 = vsub.f32 %v864, %v1132
    %1134 = vmatpush1.msra.mxu0 %v1133
    %1135 = vmatprep.subr.mxu0 0.0
    %v1136 = vand.u32 %v865, 4294901760
    %v1137 = vsub.f32 %v865, %v1136
    %1138 = vmatpush1.msra.mxu0 %v1137
    %1139 = vmatprep.subr.mxu0 0.0
    %v1140 = vand.u32 %v866, 4294901760
    %v1141 = vsub.f32 %v866, %v1140
    %1142 = vmatpush1.msra.mxu0 %v1141
    %1143 = vmatprep.subr.mxu0 0.0
    %v1144 = vand.u32 %v867, 4294901760
    %v1145 = vsub.f32 %v867, %v1144
    %1146 = vmatpush1.msra.mxu0 %v1145
    %1147 = vmatprep.subr.mxu0 0.0
    %v1148 = vand.u32 %v868, 4294901760
    %v1149 = vsub.f32 %v868, %v1148
    %1150 = vmatpush1.msra.mxu0 %v1149
    %1151 = vmatprep.subr.mxu0 0.0
    %v1152 = vand.u32 %v869, 4294901760
    %v1153 = vsub.f32 %v869, %v1152
    %1154 = vmatpush1.msra.mxu0 %v1153
    %1155 = vmatprep.subr.mxu0 0.0
    %v1156 = vand.u32 %v870, 4294901760
    %v1157 = vsub.f32 %v870, %v1156
    %1158 = vmatpush1.msra.mxu0 %v1157
    %1159 = vmatprep.subr.mxu0 0.0
    %v1160 = vand.u32 %v871, 4294901760
    %v1161 = vsub.f32 %v871, %v1160
    %1162 = vmatpush1.msra.mxu0 %v1161
    %1163 = vmatprep.subr.mxu0 0.0
    %v1164 = vand.u32 %v872, 4294901760
    %v1165 = vsub.f32 %v872, %v1164
    %1166 = vmatpush1.msra.mxu0 %v1165
    %1167 = vmatprep.subr.mxu0 0.0
    %v1168 = vand.u32 %v873, 4294901760
    %v1169 = vsub.f32 %v873, %v1168
    %1170 = vmatpush1.msra.mxu0 %v1169
    %1171 = vmatprep.subr.mxu0 0.0
    %v1172 = vand.u32 %v874, 4294901760
    %v1173 = vsub.f32 %v874, %v1172
    %1174 = vmatpush1.msra.mxu0 %v1173
    %1175 = vmatprep.subr.mxu0 0.0
    %v1176 = vand.u32 %v875, 4294901760
    %v1177 = vsub.f32 %v875, %v1176
    %1178 = vmatpush1.msra.mxu0 %v1177
    %1179 = vmatprep.subr.mxu0 0.0
    %v1180 = vand.u32 %v876, 4294901760
    %v1181 = vsub.f32 %v876, %v1180
    %1182 = vmatpush1.msra.mxu0 %v1181
    %1183 = vmatprep.subr.mxu0 0.0
    %v1184 = vand.u32 %v877, 4294901760
    %v1185 = vsub.f32 %v877, %v1184
    %1186 = vmatpush1.msra.mxu0 %v1185
    %1187 = vmatprep.subr.mxu0 0.0
    %1188 = vmatpush1.msra.mxu0 0.0
    %1189 = vmatprep.subr.mxu0 0.0
    %1190 = vmatpush1.msra.mxu0 0.0
    %1191 = vmatprep.subr.mxu0 0.0
    %1192 = vmatpush1.msra.mxu0 0.0
    %1193 = vmatprep.subr.mxu0 0.0
    %1194 = vmatpush1.msra.mxu0 0.0
    %1195 = vmatprep.subr.mxu0 0.0
    %1196 = vmatpush1.msra.mxu0 0.0
    %1197 = vmatprep.subr.mxu0 0.0
    %1198 = vmatpush1.msra.mxu0 0.0
    %1199 = vmatprep.subr.mxu0 0.0
    %1200 = vmatpush1.msra.mxu0 0.0
    %1201 = vmatprep.subr.mxu0 0.0
    %1202 = vmatpush1.msra.mxu0 0.0
    %1203 = vmatprep.subr.mxu0 0.0
    %1204 = vmatpush1.msra.mxu0 0.0
    %1205 = vmatprep.subr.mxu0 0.0
    %1206 = vmatpush1.msra.mxu0 0.0
    %1207 = vmatprep.subr.mxu0 0.0
    %1208 = vmatpush1.msra.mxu0 0.0
    %1209 = vmatprep.subr.mxu0 0.0
    %1210 = vmatpush1.msra.mxu0 0.0
    %1211 = vmatprep.subr.mxu0 0.0
    %1212 = vmatpush1.msra.mxu0 0.0
    %1213 = vmatprep.subr.mxu0 0.0
    %1214 = vmatpush1.msra.mxu0 0.0
    %1215 = vmatprep.subr.mxu0 0.0
    %1216 = vmatpush1.msra.mxu0 0.0
    %1217 = vmatprep.subr.mxu0 0.0
    %1218 = vmatpush1.msra.mxu0 0.0
    %1219 = vmatprep.mubr.f32.mxu0 0.0
    %v1220 = vand.u32 %v879, 4294901760
    %v1221 = vsub.f32 %v879, %v1220
    %1222 = vmatmul.mubr.f32.gmra.mrb[0].mxu0 %v1221
    %v1223 = vpop.f32.mrb[0].mxu0
    %v1224 = vadd.f32 %v1120, %v1223
    %v1225 = vpop.f32.mrb[0].mxu0
    %1226 = vdwg.mxu0
    %1227 = vmatprep.subr.mxu0 0.0
    %v1228 = vand.u32 %v862, 4294901760
    %1229 = vmatpush1.msra.mxu0 %v1228
    %1230 = vmatprep.subr.mxu0 0.0
    %v1231 = vand.u32 %v863, 4294901760
    %1232 = vmatpush1.msra.mxu0 %v1231
    %1233 = vmatprep.subr.mxu0 0.0
    %v1234 = vand.u32 %v864, 4294901760
    %1235 = vmatpush1.msra.mxu0 %v1234
    %1236 = vmatprep.subr.mxu0 0.0
    %v1237 = vand.u32 %v865, 4294901760
    %1238 = vmatpush1.msra.mxu0 %v1237
    %1239 = vmatprep.subr.mxu0 0.0
    %v1240 = vand.u32 %v866, 4294901760
    %1241 = vmatpush1.msra.mxu0 %v1240
    %1242 = vmatprep.subr.mxu0 0.0
    %v1243 = vand.u32 %v867, 4294901760
    %1244 = vmatpush1.msra.mxu0 %v1243
    %1245 = vmatprep.subr.mxu0 0.0
    %v1246 = vand.u32 %v868, 4294901760
    %1247 = vmatpush1.msra.mxu0 %v1246
    %1248 = vmatprep.subr.mxu0 0.0
    %v1249 = vand.u32 %v869, 4294901760
    %1250 = vmatpush1.msra.mxu0 %v1249
    %1251 = vmatprep.subr.mxu0 0.0
    %v1252 = vand.u32 %v870, 4294901760
    %1253 = vmatpush1.msra.mxu0 %v1252
    %1254 = vmatprep.subr.mxu0 0.0
    %v1255 = vand.u32 %v871, 4294901760
    %1256 = vmatpush1.msra.mxu0 %v1255
    %1257 = vmatprep.subr.mxu0 0.0
    %v1258 = vand.u32 %v872, 4294901760
    %1259 = vmatpush1.msra.mxu0 %v1258
    %1260 = vmatprep.subr.mxu0 0.0
    %v1261 = vand.u32 %v873, 4294901760
    %1262 = vmatpush1.msra.mxu0 %v1261
    %1263 = vmatprep.subr.mxu0 0.0
    %v1264 = vand.u32 %v874, 4294901760
    %1265 = vmatpush1.msra.mxu0 %v1264
    %1266 = vmatprep.subr.mxu0 0.0
    %v1267 = vand.u32 %v875, 4294901760
    %1268 = vmatpush1.msra.mxu0 %v1267
    %1269 = vmatprep.subr.mxu0 0.0
    %v1270 = vand.u32 %v876, 4294901760
    %1271 = vmatpush1.msra.mxu0 %v1270
    %1272 = vmatprep.subr.mxu0 0.0
    %v1273 = vand.u32 %v877, 4294901760
    %1274 = vmatpush1.msra.mxu0 %v1273
    %1275 = vmatprep.subr.mxu0 0.0
    %1276 = vmatpush1.msra.mxu0 0.0
    %1277 = vmatprep.subr.mxu0 0.0
    %1278 = vmatpush1.msra.mxu0 0.0
    %1279 = vmatprep.subr.mxu0 0.0
    %1280 = vmatpush1.msra.mxu0 0.0
    %1281 = vmatprep.subr.mxu0 0.0
    %1282 = vmatpush1.msra.mxu0 0.0
    %1283 = vmatprep.subr.mxu0 0.0
    %1284 = vmatpush1.msra.mxu0 0.0
    %1285 = vmatprep.subr.mxu0 0.0
    %1286 = vmatpush1.msra.mxu0 0.0
    %1287 = vmatprep.subr.mxu0 0.0
    %1288 = vmatpush1.msra.mxu0 0.0
    %1289 = vmatprep.subr.mxu0 0.0
    %1290 = vmatpush1.msra.mxu0 0.0
    %1291 = vmatprep.subr.mxu0 0.0
    %1292 = vmatpush1.msra.mxu0 0.0
    %1293 = vmatprep.subr.mxu0 0.0
    %1294 = vmatpush1.msra.mxu0 0.0
    %1295 = vmatprep.subr.mxu0 0.0
    %1296 = vmatpush1.msra.mxu0 0.0
    %1297 = vmatprep.subr.mxu0 0.0
    %1298 = vmatpush1.msra.mxu0 0.0
    %1299 = vmatprep.subr.mxu0 0.0
    %1300 = vmatpush1.msra.mxu0 0.0
    %1301 = vmatprep.subr.mxu0 0.0
    %1302 = vmatpush1.msra.mxu0 0.0
    %1303 = vmatprep.subr.mxu0 0.0
    %1304 = vmatpush1.msra.mxu0 0.0
    %1305 = vmatprep.subr.mxu0 0.0
    %1306 = vmatpush1.msra.mxu0 0.0
    %1307 = vmatprep.mubr.f32.mxu0 0.0
    %v1308 = vand.u32 %v879, 4294901760
    %v1309 = vsub.f32 %v879, %v1308
    %v1310 = vand.u32 %v1309, 4294901760
    %1311 = vmatmul.mubr.f32.gmra.mrb[0].mxu0 %v1310
    %v1312 = vpop.f32.mrb[0].mxu0
    %v1313 = vadd.f32 %v1224, %v1312
    %v1314 = vpop.f32.mrb[0].mxu0
    %1315 = vdwg.mxu0
    %1316 = vmatprep.subr.mxu0 0.0
    %v1317 = vand.u32 %v862, 4294901760
    %v1318 = vsub.f32 %v862, %v1317
    %v1319 = vand.u32 %v1318, 4294901760
    %1320 = vmatpush1.msra.mxu0 %v1319
    %1321 = vmatprep.subr.mxu0 0.0
    %v1322 = vand.u32 %v863, 4294901760
    %v1323 = vsub.f32 %v863, %v1322
    %v1324 = vand.u32 %v1323, 4294901760
    %1325 = vmatpush1.msra.mxu0 %v1324
    %1326 = vmatprep.subr.mxu0 0.0
    %v1327 = vand.u32 %v864, 4294901760
    %v1328 = vsub.f32 %v864, %v1327
    %v1329 = vand.u32 %v1328, 4294901760
    %1330 = vmatpush1.msra.mxu0 %v1329
    %1331 = vmatprep.subr.mxu0 0.0
    %v1332 = vand.u32 %v865, 4294901760
    %v1333 = vsub.f32 %v865, %v1332
    %v1334 = vand.u32 %v1333, 4294901760
    %1335 = vmatpush1.msra.mxu0 %v1334
    %1336 = vmatprep.subr.mxu0 0.0
    %v1337 = vand.u32 %v866, 4294901760
    %v1338 = vsub.f32 %v866, %v1337
    %v1339 = vand.u32 %v1338, 4294901760
    %1340 = vmatpush1.msra.mxu0 %v1339
    %1341 = vmatprep.subr.mxu0 0.0
    %v1342 = vand.u32 %v867, 4294901760
    %v1343 = vsub.f32 %v867, %v1342
    %v1344 = vand.u32 %v1343, 4294901760
    %1345 = vmatpush1.msra.mxu0 %v1344
    %1346 = vmatprep.subr.mxu0 0.0
    %v1347 = vand.u32 %v868, 4294901760
    %v1348 = vsub.f32 %v868, %v1347
    %v1349 = vand.u32 %v1348, 4294901760
    %1350 = vmatpush1.msra.mxu0 %v1349
    %1351 = vmatprep.subr.mxu0 0.0
    %v1352 = vand.u32 %v869, 4294901760
    %v1353 = vsub.f32 %v869, %v1352
    %v1354 = vand.u32 %v1353, 4294901760
    %1355 = vmatpush1.msra.mxu0 %v1354
    %1356 = vmatprep.subr.mxu0 0.0
    %v1357 = vand.u32 %v870, 4294901760
    %v1358 = vsub.f32 %v870, %v1357
    %v1359 = vand.u32 %v1358, 4294901760
    %1360 = vmatpush1.msra.mxu0 %v1359
    %1361 = vmatprep.subr.mxu0 0.0
    %v1362 = vand.u32 %v871, 4294901760
    %v1363 = vsub.f32 %v871, %v1362
    %v1364 = vand.u32 %v1363, 4294901760
    %1365 = vmatpush1.msra.mxu0 %v1364
    %1366 = vmatprep.subr.mxu0 0.0
    %v1367 = vand.u32 %v872, 4294901760
    %v1368 = vsub.f32 %v872, %v1367
    %v1369 = vand.u32 %v1368, 4294901760
    %1370 = vmatpush1.msra.mxu0 %v1369
    %1371 = vmatprep.subr.mxu0 0.0
    %v1372 = vand.u32 %v873, 4294901760
    %v1373 = vsub.f32 %v873, %v1372
    %v1374 = vand.u32 %v1373, 4294901760
    %1375 = vmatpush1.msra.mxu0 %v1374
    %1376 = vmatprep.subr.mxu0 0.0
    %v1377 = vand.u32 %v874, 4294901760
    %v1378 = vsub.f32 %v874, %v1377
    %v1379 = vand.u32 %v1378, 4294901760
    %1380 = vmatpush1.msra.mxu0 %v1379
    %1381 = vmatprep.subr.mxu0 0.0
    %v1382 = vand.u32 %v875, 4294901760
    %v1383 = vsub.f32 %v875, %v1382
    %v1384 = vand.u32 %v1383, 4294901760
    %1385 = vmatpush1.msra.mxu0 %v1384
    %1386 = vmatprep.subr.mxu0 0.0
    %v1387 = vand.u32 %v876, 4294901760
    %v1388 = vsub.f32 %v876, %v1387
    %v1389 = vand.u32 %v1388, 4294901760
    %1390 = vmatpush1.msra.mxu0 %v1389
    %1391 = vmatprep.subr.mxu0 0.0
    %v1392 = vand.u32 %v877, 4294901760
    %v1393 = vsub.f32 %v877, %v1392
    %v1394 = vand.u32 %v1393, 4294901760
    %1395 = vmatpush1.msra.mxu0 %v1394
    %1396 = vmatprep.subr.mxu0 0.0
    %1397 = vmatpush1.msra.mxu0 0.0
    %1398 = vmatprep.subr.mxu0 0.0
    %1399 = vmatpush1.msra.mxu0 0.0
    %1400 = vmatprep.subr.mxu0 0.0
    %1401 = vmatpush1.msra.mxu0 0.0
    %1402 = vmatprep.subr.mxu0 0.0
    %1403 = vmatpush1.msra.mxu0 0.0
    %1404 = vmatprep.subr.mxu0 0.0
    %1405 = vmatpush1.msra.mxu0 0.0
    %1406 = vmatprep.subr.mxu0 0.0
    %1407 = vmatpush1.msra.mxu0 0.0
    %1408 = vmatprep.subr.mxu0 0.0
    %1409 = vmatpush1.msra.mxu0 0.0
    %1410 = vmatprep.subr.mxu0 0.0
    %1411 = vmatpush1.msra.mxu0 0.0
    %1412 = vmatprep.subr.mxu0 0.0
    %1413 = vmatpush1.msra.mxu0 0.0
    %1414 = vmatprep.subr.mxu0 0.0
    %1415 = vmatpush1.msra.mxu0 0.0
    %1416 = vmatprep.subr.mxu0 0.0
    %1417 = vmatpush1.msra.mxu0 0.0
    %1418 = vmatprep.subr.mxu0 0.0
    %1419 = vmatpush1.msra.mxu0 0.0
    %1420 = vmatprep.subr.mxu0 0.0
    %1421 = vmatpush1.msra.mxu0 0.0
    %1422 = vmatprep.subr.mxu0 0.0
    %1423 = vmatpush1.msra.mxu0 0.0
    %1424 = vmatprep.subr.mxu0 0.0
    %1425 = vmatpush1.msra.mxu0 0.0
    %1426 = vmatprep.subr.mxu0 0.0
    %1427 = vmatpush1.msra.mxu0 0.0
    %1428 = vmatprep.mubr.f32.mxu0 0.0
    %v1429 = vand.u32 %v879, 4294901760
    %1430 = vmatmul.mubr.f32.gmra.mrb[0].mxu0 %v1429
    %v1431 = vpop.f32.mrb[0].mxu0
    %v1432 = vadd.f32 %v1313, %v1431
    %v1433 = vpop.f32.mrb[0].mxu0
    %1434 = vdwg.mxu0
    %1435 = vmatprep.subr.mxu0 0.0
    %v1436 = vand.u32 %v862, 4294901760
    %1437 = vmatpush1.msra.mxu0 %v1436
    %1438 = vmatprep.subr.mxu0 0.0
    %v1439 = vand.u32 %v863, 4294901760
    %1440 = vmatpush1.msra.mxu0 %v1439
    %1441 = vmatprep.subr.mxu0 0.0
    %v1442 = vand.u32 %v864, 4294901760
    %1443 = vmatpush1.msra.mxu0 %v1442
    %1444 = vmatprep.subr.mxu0 0.0
    %v1445 = vand.u32 %v865, 4294901760
    %1446 = vmatpush1.msra.mxu0 %v1445
    %1447 = vmatprep.subr.mxu0 0.0
    %v1448 = vand.u32 %v866, 4294901760
    %1449 = vmatpush1.msra.mxu0 %v1448
    %1450 = vmatprep.subr.mxu0 0.0
    %v1451 = vand.u32 %v867, 4294901760
    %1452 = vmatpush1.msra.mxu0 %v1451
    %1453 = vmatprep.subr.mxu0 0.0
    %v1454 = vand.u32 %v868, 4294901760
    %1455 = vmatpush1.msra.mxu0 %v1454
    %1456 = vmatprep.subr.mxu0 0.0
    %v1457 = vand.u32 %v869, 4294901760
    %1458 = vmatpush1.msra.mxu0 %v1457
    %1459 = vmatprep.subr.mxu0 0.0
    %v1460 = vand.u32 %v870, 4294901760
    %1461 = vmatpush1.msra.mxu0 %v1460
    %1462 = vmatprep.subr.mxu0 0.0
    %v1463 = vand.u32 %v871, 4294901760
    %1464 = vmatpush1.msra.mxu0 %v1463
    %1465 = vmatprep.subr.mxu0 0.0
    %v1466 = vand.u32 %v872, 4294901760
    %1467 = vmatpush1.msra.mxu0 %v1466
    %1468 = vmatprep.subr.mxu0 0.0
    %v1469 = vand.u32 %v873, 4294901760
    %1470 = vmatpush1.msra.mxu0 %v1469
    %1471 = vmatprep.subr.mxu0 0.0
    %v1472 = vand.u32 %v874, 4294901760
    %1473 = vmatpush1.msra.mxu0 %v1472
    %1474 = vmatprep.subr.mxu0 0.0
    %v1475 = vand.u32 %v875, 4294901760
    %1476 = vmatpush1.msra.mxu0 %v1475
    %1477 = vmatprep.subr.mxu0 0.0
    %v1478 = vand.u32 %v876, 4294901760
    %1479 = vmatpush1.msra.mxu0 %v1478
    %1480 = vmatprep.subr.mxu0 0.0
    %v1481 = vand.u32 %v877, 4294901760
    %1482 = vmatpush1.msra.mxu0 %v1481
    %1483 = vmatprep.subr.mxu0 0.0
    %1484 = vmatpush1.msra.mxu0 0.0
    %1485 = vmatprep.subr.mxu0 0.0
    %1486 = vmatpush1.msra.mxu0 0.0
    %1487 = vmatprep.subr.mxu0 0.0
    %1488 = vmatpush1.msra.mxu0 0.0
    %1489 = vmatprep.subr.mxu0 0.0
    %1490 = vmatpush1.msra.mxu0 0.0
    %1491 = vmatprep.subr.mxu0 0.0
    %1492 = vmatpush1.msra.mxu0 0.0
    %1493 = vmatprep.subr.mxu0 0.0
    %1494 = vmatpush1.msra.mxu0 0.0
    %1495 = vmatprep.subr.mxu0 0.0
    %1496 = vmatpush1.msra.mxu0 0.0
    %1497 = vmatprep.subr.mxu0 0.0
    %1498 = vmatpush1.msra.mxu0 0.0
    %1499 = vmatprep.subr.mxu0 0.0
    %1500 = vmatpush1.msra.mxu0 0.0
    %1501 = vmatprep.subr.mxu0 0.0
    %1502 = vmatpush1.msra.mxu0 0.0
    %1503 = vmatprep.subr.mxu0 0.0
    %1504 = vmatpush1.msra.mxu0 0.0
    %1505 = vmatprep.subr.mxu0 0.0
    %1506 = vmatpush1.msra.mxu0 0.0
    %1507 = vmatprep.subr.mxu0 0.0
    %1508 = vmatpush1.msra.mxu0 0.0
    %1509 = vmatprep.subr.mxu0 0.0
    %1510 = vmatpush1.msra.mxu0 0.0
    %1511 = vmatprep.subr.mxu0 0.0
    %1512 = vmatpush1.msra.mxu0 0.0
    %1513 = vmatprep.subr.mxu0 0.0
    %1514 = vmatpush1.msra.mxu0 0.0
    %1515 = vmatprep.mubr.f32.mxu0 0.0
    %v1516 = vand.u32 %v879, 4294901760
    %1517 = vmatmul.mubr.f32.gmra.mrb[0].mxu0 %v1516
    %v1518 = vpop.f32.mrb[0].mxu0
    %v1519 = vadd.f32 %v1432, %v1518
    %v1520 = vpop.f32.mrb[0].mxu0
    %1521 = vdwg.mxu0
    %v1522 = vadd.f32 %v880, %v1519
    %v1523 = vtanh.pop %v1522
    %v1524 = vld [vmem:[#allocation2 + $0x10] sm:$0xff]
    %1525 = vmatprep.subr.mxu0 0.0
    %v1526 = vand.u32 %v862, 4294901760
    %1527 = vmatpush1.msra.mxu0 %v1526
    %1528 = vmatprep.subr.mxu0 0.0
    %v1529 = vand.u32 %v863, 4294901760
    %1530 = vmatpush1.msra.mxu0 %v1529
    %1531 = vmatprep.subr.mxu0 0.0
    %v1532 = vand.u32 %v864, 4294901760
    %1533 = vmatpush1.msra.mxu0 %v1532
    %1534 = vmatprep.subr.mxu0 0.0
    %v1535 = vand.u32 %v865, 4294901760
    %1536 = vmatpush1.msra.mxu0 %v1535
    %1537 = vmatprep.subr.mxu0 0.0
    %v1538 = vand.u32 %v866, 4294901760
    %1539 = vmatpush1.msra.mxu0 %v1538
    %1540 = vmatprep.subr.mxu0 0.0
    %v1541 = vand.u32 %v867, 4294901760
    %1542 = vmatpush1.msra.mxu0 %v1541
    %1543 = vmatprep.subr.mxu0 0.0
    %v1544 = vand.u32 %v868, 4294901760
    %1545 = vmatpush1.msra.mxu0 %v1544
    %1546 = vmatprep.subr.mxu0 0.0
    %v1547 = vand.u32 %v869, 4294901760
    %1548 = vmatpush1.msra.mxu0 %v1547
    %1549 = vmatprep.subr.mxu0 0.0
    %v1550 = vand.u32 %v870, 4294901760
    %1551 = vmatpush1.msra.mxu0 %v1550
    %1552 = vmatprep.subr.mxu0 0.0
    %v1553 = vand.u32 %v871, 4294901760
    %1554 = vmatpush1.msra.mxu0 %v1553
    %1555 = vmatprep.subr.mxu0 0.0
    %v1556 = vand.u32 %v872, 4294901760
    %1557 = vmatpush1.msra.mxu0 %v1556
    %1558 = vmatprep.subr.mxu0 0.0
    %v1559 = vand.u32 %v873, 4294901760
    %1560 = vmatpush1.msra.mxu0 %v1559
    %1561 = vmatprep.subr.mxu0 0.0
    %v1562 = vand.u32 %v874, 4294901760
    %1563 = vmatpush1.msra.mxu0 %v1562
    %1564 = vmatprep.subr.mxu0 0.0
    %v1565 = vand.u32 %v875, 4294901760
    %1566 = vmatpush1.msra.mxu0 %v1565
    %1567 = vmatprep.subr.mxu0 0.0
    %v1568 = vand.u32 %v876, 4294901760
    %1569 = vmatpush1.msra.mxu0 %v1568
    %1570 = vmatprep.subr.mxu0 0.0
    %v1571 = vand.u32 %v877, 4294901760
    %1572 = vmatpush1.msra.mxu0 %v1571
    %1573 = vmatprep.subr.mxu0 0.0
    %1574 = vmatpush1.msra.mxu0 0.0
    %1575 = vmatprep.subr.mxu0 0.0
    %1576 = vmatpush1.msra.mxu0 0.0
    %1577 = vmatprep.subr.mxu0 0.0
    %1578 = vmatpush1.msra.mxu0 0.0
    %1579 = vmatprep.subr.mxu0 0.0
    %1580 = vmatpush1.msra.mxu0 0.0
    %1581 = vmatprep.subr.mxu0 0.0
    %1582 = vmatpush1.msra.mxu0 0.0
    %1583 = vmatprep.subr.mxu0 0.0
    %1584 = vmatpush1.msra.mxu0 0.0
    %1585 = vmatprep.subr.mxu0 0.0
    %1586 = vmatpush1.msra.mxu0 0.0
    %1587 = vmatprep.subr.mxu0 0.0
    %1588 = vmatpush1.msra.mxu0 0.0
    %1589 = vmatprep.subr.mxu0 0.0
    %1590 = vmatpush1.msra.mxu0 0.0
    %1591 = vmatprep.subr.mxu0 0.0
    %1592 = vmatpush1.msra.mxu0 0.0
    %1593 = vmatprep.subr.mxu0 0.0
    %1594 = vmatpush1.msra.mxu0 0.0
    %1595 = vmatprep.subr.mxu0 0.0
    %1596 = vmatpush1.msra.mxu0 0.0
    %1597 = vmatprep.subr.mxu0 0.0
    %1598 = vmatpush1.msra.mxu0 0.0
    %1599 = vmatprep.subr.mxu0 0.0
    %1600 = vmatpush1.msra.mxu0 0.0
    %1601 = vmatprep.subr.mxu0 0.0
    %1602 = vmatpush1.msra.mxu0 0.0
    %1603 = vmatprep.subr.mxu0 0.0
    %1604 = vmatpush1.msra.mxu0 0.0
    %1605 = vmatprep.mubr.f32.mxu0 0.0
    %v1606 = vand.u32 %v1523, 4294901760
    %v1607 = vsub.f32 %v1523, %v1606
    %v1608 = vand.u32 %v1607, 4294901760
    %v1609 = vsub.f32 %v1607, %v1608
    %v1610 = vand.u32 %v1609, 4294901760
    %1611 = vmatmul.mubr.f32.gmra.mrb[0].mxu0 %v1610
    %v1612 = vpop.f32.mrb[0].mxu0
    %v1613 = vadd.f32 0.0, %v1612
    %v1614 = vpop.f32.mrb[0].mxu0
    %1615 = vdwg.mxu0
    %1616 = vmatprep.subr.mxu0 0.0
    %v1617 = vand.u32 %v862, 4294901760
    %v1618 = vsub.f32 %v862, %v1617
    %v1619 = vand.u32 %v1618, 4294901760
    %v1620 = vsub.f32 %v1618, %v1619
    %v1621 = vand.u32 %v1620, 4294901760
    %1622 = vmatpush1.msra.mxu0 %v1621
    %1623 = vmatprep.subr.mxu0 0.0
    %v1624 = vand.u32 %v863, 4294901760
    %v1625 = vsub.f32 %v863, %v1624
    %v1626 = vand.u32 %v1625, 4294901760
    %v1627 = vsub.f32 %v1625, %v1626
    %v1628 = vand.u32 %v1627, 4294901760
    %1629 = vmatpush1.msra.mxu0 %v1628
    %1630 = vmatprep.subr.mxu0 0.0
    %v1631 = vand.u32 %v864, 4294901760
    %v1632 = vsub.f32 %v864, %v1631
    %v1633 = vand.u32 %v1632, 4294901760
    %v1634 = vsub.f32 %v1632, %v1633
    %v1635 = vand.u32 %v1634, 4294901760
    %1636 = vmatpush1.msra.mxu0 %v1635
    %1637 = vmatprep.subr.mxu0 0.0
    %v1638 = vand.u32 %v865, 4294901760
    %v1639 = vsub.f32 %v865, %v1638
    %v1640 = vand.u32 %v1639, 4294901760
    %v1641 = vsub.f32 %v1639, %v1640
    %v1642 = vand.u32 %v1641, 4294901760
    %1643 = vmatpush1.msra.mxu0 %v1642
    %1644 = vmatprep.subr.mxu0 0.0
    %v1645 = vand.u32 %v866, 4294901760
    %v1646 = vsub.f32 %v866, %v1645
    %v1647 = vand.u32 %v1646, 4294901760
    %v1648 = vsub.f32 %v1646, %v1647
    %v1649 = vand.u32 %v1648, 4294901760
    %1650 = vmatpush1.msra.mxu0 %v1649
    %1651 = vmatprep.subr.mxu0 0.0
    %v1652 = vand.u32 %v867, 4294901760
    %v1653 = vsub.f32 %v867, %v1652
    %v1654 = vand.u32 %v1653, 4294901760
    %v1655 = vsub.f32 %v1653, %v1654
    %v1656 = vand.u32 %v1655, 4294901760
    %1657 = vmatpush1.msra.mxu0 %v1656
    %1658 = vmatprep.subr.mxu0 0.0
    %v1659 = vand.u32 %v868, 4294901760
    %v1660 = vsub.f32 %v868, %v1659
    %v1661 = vand.u32 %v1660, 4294901760
    %v1662 = vsub.f32 %v1660, %v1661
    %v1663 = vand.u32 %v1662, 4294901760
    %1664 = vmatpush1.msra.mxu0 %v1663
    %1665 = vmatprep.subr.mxu0 0.0
    %v1666 = vand.u32 %v869, 4294901760
    %v1667 = vsub.f32 %v869, %v1666
    %v1668 = vand.u32 %v1667, 4294901760
    %v1669 = vsub.f32 %v1667, %v1668
    %v1670 = vand.u32 %v1669, 4294901760
    %1671 = vmatpush1.msra.mxu0 %v1670
    %1672 = vmatprep.subr.mxu0 0.0
    %v1673 = vand.u32 %v870, 4294901760
    %v1674 = vsub.f32 %v870, %v1673
    %v1675 = vand.u32 %v1674, 4294901760
    %v1676 = vsub.f32 %v1674, %v1675
    %v1677 = vand.u32 %v1676, 4294901760
    %1678 = vmatpush1.msra.mxu0 %v1677
    %1679 = vmatprep.subr.mxu0 0.0
    %v1680 = vand.u32 %v871, 4294901760
    %v1681 = vsub.f32 %v871, %v1680
    %v1682 = vand.u32 %v1681, 4294901760
    %v1683 = vsub.f32 %v1681, %v1682
    %v1684 = vand.u32 %v1683, 4294901760
    %1685 = vmatpush1.msra.mxu0 %v1684
    %1686 = vmatprep.subr.mxu0 0.0
    %v1687 = vand.u32 %v872, 4294901760
    %v1688 = vsub.f32 %v872, %v1687
    %v1689 = vand.u32 %v1688, 4294901760
    %v1690 = vsub.f32 %v1688, %v1689
    %v1691 = vand.u32 %v1690, 4294901760
    %1692 = vmatpush1.msra.mxu0 %v1691
    %1693 = vmatprep.subr.mxu0 0.0
    %v1694 = vand.u32 %v873, 4294901760
    %v1695 = vsub.f32 %v873, %v1694
    %v1696 = vand.u32 %v1695, 4294901760
    %v1697 = vsub.f32 %v1695, %v1696
    %v1698 = vand.u32 %v1697, 4294901760
    %1699 = vmatpush1.msra.mxu0 %v1698
    %1700 = vmatprep.subr.mxu0 0.0
    %v1701 = vand.u32 %v874, 4294901760
    %v1702 = vsub.f32 %v874, %v1701
    %v1703 = vand.u32 %v1702, 4294901760
    %v1704 = vsub.f32 %v1702, %v1703
    %v1705 = vand.u32 %v1704, 4294901760
    %1706 = vmatpush1.msra.mxu0 %v1705
    %1707 = vmatprep.subr.mxu0 0.0
    %v1708 = vand.u32 %v875, 4294901760
    %v1709 = vsub.f32 %v875, %v1708
    %v1710 = vand.u32 %v1709, 4294901760
    %v1711 = vsub.f32 %v1709, %v1710
    %v1712 = vand.u32 %v1711, 4294901760
    %1713 = vmatpush1.msra.mxu0 %v1712
    %1714 = vmatprep.subr.mxu0 0.0
    %v1715 = vand.u32 %v876, 4294901760
    %v1716 = vsub.f32 %v876, %v1715
    %v1717 = vand.u32 %v1716, 4294901760
    %v1718 = vsub.f32 %v1716, %v1717
    %v1719 = vand.u32 %v1718, 4294901760
    %1720 = vmatpush1.msra.mxu0 %v1719
    %1721 = vmatprep.subr.mxu0 0.0
    %v1722 = vand.u32 %v877, 4294901760
    %v1723 = vsub.f32 %v877, %v1722
    %v1724 = vand.u32 %v1723, 4294901760
    %v1725 = vsub.f32 %v1723, %v1724
    %v1726 = vand.u32 %v1725, 4294901760
    %1727 = vmatpush1.msra.mxu0 %v1726
    %1728 = vmatprep.subr.mxu0 0.0
    %1729 = vmatpush1.msra.mxu0 0.0
    %1730 = vmatprep.subr.mxu0 0.0
    %1731 = vmatpush1.msra.mxu0 0.0
    %1732 = vmatprep.subr.mxu0 0.0
    %1733 = vmatpush1.msra.mxu0 0.0
    %1734 = vmatprep.subr.mxu0 0.0
    %1735 = vmatpush1.msra.mxu0 0.0
    %1736 = vmatprep.subr.mxu0 0.0
    %1737 = vmatpush1.msra.mxu0 0.0
    %1738 = vmatprep.subr.mxu0 0.0
    %1739 = vmatpush1.msra.mxu0 0.0
    %1740 = vmatprep.subr.mxu0 0.0
    %1741 = vmatpush1.msra.mxu0 0.0
    %1742 = vmatprep.subr.mxu0 0.0
    %1743 = vmatpush1.msra.mxu0 0.0
    %1744 = vmatprep.subr.mxu0 0.0
    %1745 = vmatpush1.msra.mxu0 0.0
    %1746 = vmatprep.subr.mxu0 0.0
    %1747 = vmatpush1.msra.mxu0 0.0
    %1748 = vmatprep.subr.mxu0 0.0
    %1749 = vmatpush1.msra.mxu0 0.0
    %1750 = vmatprep.subr.mxu0 0.0
    %1751 = vmatpush1.msra.mxu0 0.0
    %1752 = vmatprep.subr.mxu0 0.0
    %1753 = vmatpush1.msra.mxu0 0.0
    %1754 = vmatprep.subr.mxu0 0.0
    %1755 = vmatpush1.msra.mxu0 0.0
    %1756 = vmatprep.subr.mxu0 0.0
    %1757 = vmatpush1.msra.mxu0 0.0
    %1758 = vmatprep.subr.mxu0 0.0
    %1759 = vmatpush1.msra.mxu0 0.0
    %1760 = vmatprep.mubr.f32.mxu0 0.0
    %v1761 = vand.u32 %v1523, 4294901760
    %1762 = vmatmul.mubr.f32.gmra.mrb[0].mxu0 %v1761
    %v1763 = vpop.f32.mrb[0].mxu0
    %v1764 = vadd.f32 %v1613, %v1763
    %v1765 = vpop.f32.mrb[0].mxu0
    %1766 = vdwg.mxu0
    %1767 = vmatprep.subr.mxu0 0.0
    %v1768 = vand.u32 %v862, 4294901760
    %v1769 = vsub.f32 %v862, %v1768
    %1770 = vmatpush1.msra.mxu0 %v1769
    %1771 = vmatprep.subr.mxu0 0.0
    %v1772 = vand.u32 %v863, 4294901760
    %v1773 = vsub.f32 %v863, %v1772
    %1774 = vmatpush1.msra.mxu0 %v1773
    %1775 = vmatprep.subr.mxu0 0.0
    %v1776 = vand.u32 %v864, 4294901760
    %v1777 = vsub.f32 %v864, %v1776
    %1778 = vmatpush1.msra.mxu0 %v1777
    %1779 = vmatprep.subr.mxu0 0.0
    %v1780 = vand.u32 %v865, 4294901760
    %v1781 = vsub.f32 %v865, %v1780
    %1782 = vmatpush1.msra.mxu0 %v1781
    %1783 = vmatprep.subr.mxu0 0.0
    %v1784 = vand.u32 %v866, 4294901760
    %v1785 = vsub.f32 %v866, %v1784
    %1786 = vmatpush1.msra.mxu0 %v1785
    %1787 = vmatprep.subr.mxu0 0.0
    %v1788 = vand.u32 %v867, 4294901760
    %v1789 = vsub.f32 %v867, %v1788
    %1790 = vmatpush1.msra.mxu0 %v1789
    %1791 = vmatprep.subr.mxu0 0.0
    %v1792 = vand.u32 %v868, 4294901760
    %v1793 = vsub.f32 %v868, %v1792
    %1794 = vmatpush1.msra.mxu0 %v1793
    %1795 = vmatprep.subr.mxu0 0.0
    %v1796 = vand.u32 %v869, 4294901760
    %v1797 = vsub.f32 %v869, %v1796
    %1798 = vmatpush1.msra.mxu0 %v1797
    %1799 = vmatprep.subr.mxu0 0.0
    %v1800 = vand.u32 %v870, 4294901760
    %v1801 = vsub.f32 %v870, %v1800
    %1802 = vmatpush1.msra.mxu0 %v1801
    %1803 = vmatprep.subr.mxu0 0.0
    %v1804 = vand.u32 %v871, 4294901760
    %v1805 = vsub.f32 %v871, %v1804
    %1806 = vmatpush1.msra.mxu0 %v1805
    %1807 = vmatprep.subr.mxu0 0.0
    %v1808 = vand.u32 %v872, 4294901760
    %v1809 = vsub.f32 %v872, %v1808
    %1810 = vmatpush1.msra.mxu0 %v1809
    %1811 = vmatprep.subr.mxu0 0.0
    %v1812 = vand.u32 %v873, 4294901760
    %v1813 = vsub.f32 %v873, %v1812
    %1814 = vmatpush1.msra.mxu0 %v1813
    %1815 = vmatprep.subr.mxu0 0.0
    %v1816 = vand.u32 %v874, 4294901760
    %v1817 = vsub.f32 %v874, %v1816
    %1818 = vmatpush1.msra.mxu0 %v1817
    %1819 = vmatprep.subr.mxu0 0.0
    %v1820 = vand.u32 %v875, 4294901760
    %v1821 = vsub.f32 %v875, %v1820
    %1822 = vmatpush1.msra.mxu0 %v1821
    %1823 = vmatprep.subr.mxu0 0.0
    %v1824 = vand.u32 %v876, 4294901760
    %v1825 = vsub.f32 %v876, %v1824
    %1826 = vmatpush1.msra.mxu0 %v1825
    %1827 = vmatprep.subr.mxu0 0.0
    %v1828 = vand.u32 %v877, 4294901760
    %v1829 = vsub.f32 %v877, %v1828
    %1830 = vmatpush1.msra.mxu0 %v1829
    %1831 = vmatprep.subr.mxu0 0.0
    %1832 = vmatpush1.msra.mxu0 0.0
    %1833 = vmatprep.subr.mxu0 0.0
    %1834 = vmatpush1.msra.mxu0 0.0
    %1835 = vmatprep.subr.mxu0 0.0
    %1836 = vmatpush1.msra.mxu0 0.0
    %1837 = vmatprep.subr.mxu0 0.0
    %1838 = vmatpush1.msra.mxu0 0.0
    %1839 = vmatprep.subr.mxu0 0.0
    %1840 = vmatpush1.msra.mxu0 0.0
    %1841 = vmatprep.subr.mxu0 0.0
    %1842 = vmatpush1.msra.mxu0 0.0
    %1843 = vmatprep.subr.mxu0 0.0
    %1844 = vmatpush1.msra.mxu0 0.0
    %1845 = vmatprep.subr.mxu0 0.0
    %1846 = vmatpush1.msra.mxu0 0.0
    %1847 = vmatprep.subr.mxu0 0.0
    %1848 = vmatpush1.msra.mxu0 0.0
    %1849 = vmatprep.subr.mxu0 0.0
    %1850 = vmatpush1.msra.mxu0 0.0
    %1851 = vmatprep.subr.mxu0 0.0
    %1852 = vmatpush1.msra.mxu0 0.0
    %1853 = vmatprep.subr.mxu0 0.0
    %1854 = vmatpush1.msra.mxu0 0.0
    %1855 = vmatprep.subr.mxu0 0.0
    %1856 = vmatpush1.msra.mxu0 0.0
    %1857 = vmatprep.subr.mxu0 0.0
    %1858 = vmatpush1.msra.mxu0 0.0
    %1859 = vmatprep.subr.mxu0 0.0
    %1860 = vmatpush1.msra.mxu0 0.0
    %1861 = vmatprep.subr.mxu0 0.0
    %1862 = vmatpush1.msra.mxu0 0.0
    %1863 = vmatprep.mubr.f32.mxu0 0.0
    %v1864 = vand.u32 %v1523, 4294901760
    %v1865 = vsub.f32 %v1523, %v1864
    %1866 = vmatmul.mubr.f32.gmra.mrb[0].mxu0 %v1865
    %v1867 = vpop.f32.mrb[0].mxu0
    %v1868 = vadd.f32 %v1764, %v1867
    %v1869 = vpop.f32.mrb[0].mxu0
    %1870 = vdwg.mxu0
    %1871 = vmatprep.subr.mxu0 0.0
    %v1872 = vand.u32 %v862, 4294901760
    %1873 = vmatpush1.msra.mxu0 %v1872
    %1874 = vmatprep.subr.mxu0 0.0
    %v1875 = vand.u32 %v863, 4294901760
    %1876 = vmatpush1.msra.mxu0 %v1875
    %1877 = vmatprep.subr.mxu0 0.0
    %v1878 = vand.u32 %v864, 4294901760
    %1879 = vmatpush1.msra.mxu0 %v1878
    %1880 = vmatprep.subr.mxu0 0.0
    %v1881 = vand.u32 %v865, 4294901760
    %1882 = vmatpush1.msra.mxu0 %v1881
    %1883 = vmatprep.subr.mxu0 0.0
    %v1884 = vand.u32 %v866, 4294901760
    %1885 = vmatpush1.msra.mxu0 %v1884
    %1886 = vmatprep.subr.mxu0 0.0
    %v1887 = vand.u32 %v867, 4294901760
    %1888 = vmatpush1.msra.mxu0 %v1887
    %1889 = vmatprep.subr.mxu0 0.0
    %v1890 = vand.u32 %v868, 4294901760
    %1891 = vmatpush1.msra.mxu0 %v1890
    %1892 = vmatprep.subr.mxu0 0.0
    %v1893 = vand.u32 %v869, 4294901760
    %1894 = vmatpush1.msra.mxu0 %v1893
    %1895 = vmatprep.subr.mxu0 0.0
    %v1896 = vand.u32 %v870, 4294901760
    %1897 = vmatpush1.msra.mxu0 %v1896
    %1898 = vmatprep.subr.mxu0 0.0
    %v1899 = vand.u32 %v871, 4294901760
    %1900 = vmatpush1.msra.mxu0 %v1899
    %1901 = vmatprep.subr.mxu0 0.0
    %v1902 = vand.u32 %v872, 4294901760
    %1903 = vmatpush1.msra.mxu0 %v1902
    %1904 = vmatprep.subr.mxu0 0.0
    %v1905 = vand.u32 %v873, 4294901760
    %1906 = vmatpush1.msra.mxu0 %v1905
    %1907 = vmatprep.subr.mxu0 0.0
    %v1908 = vand.u32 %v874, 4294901760
    %1909 = vmatpush1.msra.mxu0 %v1908
    %1910 = vmatprep.subr.mxu0 0.0
    %v1911 = vand.u32 %v875, 4294901760
    %1912 = vmatpush1.msra.mxu0 %v1911
    %1913 = vmatprep.subr.mxu0 0.0
    %v1914 = vand.u32 %v876, 4294901760
    %1915 = vmatpush1.msra.mxu0 %v1914
    %1916 = vmatprep.subr.mxu0 0.0
    %v1917 = vand.u32 %v877, 4294901760
    %1918 = vmatpush1.msra.mxu0 %v1917
    %1919 = vmatprep.subr.mxu0 0.0
    %1920 = vmatpush1.msra.mxu0 0.0
    %1921 = vmatprep.subr.mxu0 0.0
    %1922 = vmatpush1.msra.mxu0 0.0
    %1923 = vmatprep.subr.mxu0 0.0
    %1924 = vmatpush1.msra.mxu0 0.0
    %1925 = vmatprep.subr.mxu0 0.0
    %1926 = vmatpush1.msra.mxu0 0.0
    %1927 = vmatprep.subr.mxu0 0.0
    %1928 = vmatpush1.msra.mxu0 0.0
    %1929 = vmatprep.subr.mxu0 0.0
    %1930 = vmatpush1.msra.mxu0 0.0
    %1931 = vmatprep.subr.mxu0 0.0
    %1932 = vmatpush1.msra.mxu0 0.0
    %1933 = vmatprep.subr.mxu0 0.0
    %1934 = vmatpush1.msra.mxu0 0.0
    %1935 = vmatprep.subr.mxu0 0.0
    %1936 = vmatpush1.msra.mxu0 0.0
    %1937 = vmatprep.subr.mxu0 0.0
    %1938 = vmatpush1.msra.mxu0 0.0
    %1939 = vmatprep.subr.mxu0 0.0
    %1940 = vmatpush1.msra.mxu0 0.0
    %1941 = vmatprep.subr.mxu0 0.0
    %1942 = vmatpush1.msra.mxu0 0.0
    %1943 = vmatprep.subr.mxu0 0.0
    %1944 = vmatpush1.msra.mxu0 0.0
    %1945 = vmatprep.subr.mxu0 0.0
    %1946 = vmatpush1.msra.mxu0 0.0
    %1947 = vmatprep.subr.mxu0 0.0
    %1948 = vmatpush1.msra.mxu0 0.0
    %1949 = vmatprep.subr.mxu0 0.0
    %1950 = vmatpush1.msra.mxu0 0.0
    %1951 = vmatprep.mubr.f32.mxu0 0.0
    %v1952 = vand.u32 %v1523, 4294901760
    %v1953 = vsub.f32 %v1523, %v1952
    %v1954 = vand.u32 %v1953, 4294901760
    %1955 = vmatmul.mubr.f32.gmra.mrb[0].mxu0 %v1954
    %v1956 = vpop.f32.mrb[0].mxu0
    %v1957 = vadd.f32 %v1868, %v1956
    %v1958 = vpop.f32.mrb[0].mxu0
    %1959 = vdwg.mxu0
    %1960 = vmatprep.subr.mxu0 0.0
    %v1961 = vand.u32 %v862, 4294901760
    %v1962 = vsub.f32 %v862, %v1961
    %v1963 = vand.u32 %v1962, 4294901760
    %1964 = vmatpush1.msra.mxu0 %v1963
    %1965 = vmatprep.subr.mxu0 0.0
    %v1966 = vand.u32 %v863, 4294901760
    %v1967 = vsub.f32 %v863, %v1966
    %v1968 = vand.u32 %v1967, 4294901760
    %1969 = vmatpush1.msra.mxu0 %v1968
    %1970 = vmatprep.subr.mxu0 0.0
    %v1971 = vand.u32 %v864, 4294901760
    %v1972 = vsub.f32 %v864, %v1971
    %v1973 = vand.u32 %v1972, 4294901760
    %1974 = vmatpush1.msra.mxu0 %v1973
    %1975 = vmatprep.subr.mxu0 0.0
    %v1976 = vand.u32 %v865, 4294901760
    %v1977 = vsub.f32 %v865, %v1976
    %v1978 = vand.u32 %v1977, 4294901760
    %1979 = vmatpush1.msra.mxu0 %v1978
    %1980 = vmatprep.subr.mxu0 0.0
    %v1981 = vand.u32 %v866, 4294901760
    %v1982 = vsub.f32 %v866, %v1981
    %v1983 = vand.u32 %v1982, 4294901760
    %1984 = vmatpush1.msra.mxu0 %v1983
    %1985 = vmatprep.subr.mxu0 0.0
    %v1986 = vand.u32 %v867, 4294901760
    %v1987 = vsub.f32 %v867, %v1986
    %v1988 = vand.u32 %v1987, 4294901760
    %1989 = vmatpush1.msra.mxu0 %v1988
    %1990 = vmatprep.subr.mxu0 0.0
    %v1991 = vand.u32 %v868, 4294901760
    %v1992 = vsub.f32 %v868, %v1991
    %v1993 = vand.u32 %v1992, 4294901760
    %1994 = vmatpush1.msra.mxu0 %v1993
    %1995 = vmatprep.subr.mxu0 0.0
    %v1996 = vand.u32 %v869, 4294901760
    %v1997 = vsub.f32 %v869, %v1996
    %v1998 = vand.u32 %v1997, 4294901760
    %1999 = vmatpush1.msra.mxu0 %v1998
    %2000 = vmatprep.subr.mxu0 0.0
    %v2001 = vand.u32 %v870, 4294901760
    %v2002 = vsub.f32 %v870, %v2001
    %v2003 = vand.u32 %v2002, 4294901760
    %2004 = vmatpush1.msra.mxu0 %v2003
    %2005 = vmatprep.subr.mxu0 0.0
    %v2006 = vand.u32 %v871, 4294901760
    %v2007 = vsub.f32 %v871, %v2006
    %v2008 = vand.u32 %v2007, 4294901760
    %2009 = vmatpush1.msra.mxu0 %v2008
    %2010 = vmatprep.subr.mxu0 0.0
    %v2011 = vand.u32 %v872, 4294901760
    %v2012 = vsub.f32 %v872, %v2011
    %v2013 = vand.u32 %v2012, 4294901760
    %2014 = vmatpush1.msra.mxu0 %v2013
    %2015 = vmatprep.subr.mxu0 0.0
    %v2016 = vand.u32 %v873, 4294901760
    %v2017 = vsub.f32 %v873, %v2016
    %v2018 = vand.u32 %v2017, 4294901760
    %2019 = vmatpush1.msra.mxu0 %v2018
    %2020 = vmatprep.subr.mxu0 0.0
    %v2021 = vand.u32 %v874, 4294901760
    %v2022 = vsub.f32 %v874, %v2021
    %v2023 = vand.u32 %v2022, 4294901760
    %2024 = vmatpush1.msra.mxu0 %v2023
    %2025 = vmatprep.subr.mxu0 0.0
    %v2026 = vand.u32 %v875, 4294901760
    %v2027 = vsub.f32 %v875, %v2026
    %v2028 = vand.u32 %v2027, 4294901760
    %2029 = vmatpush1.msra.mxu0 %v2028
    %2030 = vmatprep.subr.mxu0 0.0
    %v2031 = vand.u32 %v876, 4294901760
    %v2032 = vsub.f32 %v876, %v2031
    %v2033 = vand.u32 %v2032, 4294901760
    %2034 = vmatpush1.msra.mxu0 %v2033
    %2035 = vmatprep.subr.mxu0 0.0
    %v2036 = vand.u32 %v877, 4294901760
    %v2037 = vsub.f32 %v877, %v2036
    %v2038 = vand.u32 %v2037, 4294901760
    %2039 = vmatpush1.msra.mxu0 %v2038
    %2040 = vmatprep.subr.mxu0 0.0
    %2041 = vmatpush1.msra.mxu0 0.0
    %2042 = vmatprep.subr.mxu0 0.0
    %2043 = vmatpush1.msra.mxu0 0.0
    %2044 = vmatprep.subr.mxu0 0.0
    %2045 = vmatpush1.msra.mxu0 0.0
    %2046 = vmatprep.subr.mxu0 0.0
    %2047 = vmatpush1.msra.mxu0 0.0
    %2048 = vmatprep.subr.mxu0 0.0
    %2049 = vmatpush1.msra.mxu0 0.0
    %2050 = vmatprep.subr.mxu0 0.0
    %2051 = vmatpush1.msra.mxu0 0.0
    %2052 = vmatprep.subr.mxu0 0.0
    %2053 = vmatpush1.msra.mxu0 0.0
    %2054 = vmatprep.subr.mxu0 0.0
    %2055 = vmatpush1.msra.mxu0 0.0
    %2056 = vmatprep.subr.mxu0 0.0
    %2057 = vmatpush1.msra.mxu0 0.0
    %2058 = vmatprep.subr.mxu0 0.0
    %2059 = vmatpush1.msra.mxu0 0.0
    %2060 = vmatprep.subr.mxu0 0.0
    %2061 = vmatpush1.msra.mxu0 0.0
    %2062 = vmatprep.subr.mxu0 0.0
    %2063 = vmatpush1.msra.mxu0 0.0
    %2064 = vmatprep.subr.mxu0 0.0
    %2065 = vmatpush1.msra.mxu0 0.0
    %2066 = vmatprep.subr.mxu0 0.0
    %2067 = vmatpush1.msra.mxu0 0.0
    %2068 = vmatprep.subr.mxu0 0.0
    %2069 = vmatpush1.msra.mxu0 0.0
    %2070 = vmatprep.subr.mxu0 0.0
    %2071 = vmatpush1.msra.mxu0 0.0
    %2072 = vmatprep.mubr.f32.mxu0 0.0
    %v2073 = vand.u32 %v1523, 4294901760
    %2074 = vmatmul.mubr.f32.gmra.mrb[0].mxu0 %v2073
    %v2075 = vpop.f32.mrb[0].mxu0
    %v2076 = vadd.f32 %v1957, %v2075
    %v2077 = vpop.f32.mrb[0].mxu0
    %2078 = vdwg.mxu0
    %2079 = vmatprep.subr.mxu0 0.0
    %v2080 = vand.u32 %v862, 4294901760
    %2081 = vmatpush1.msra.mxu0 %v2080
    %2082 = vmatprep.subr.mxu0 0.0
    %v2083 = vand.u32 %v863, 4294901760
    %2084 = vmatpush1.msra.mxu0 %v2083
    %2085 = vmatprep.subr.mxu0 0.0
    %v2086 = vand.u32 %v864, 4294901760
    %2087 = vmatpush1.msra.mxu0 %v2086
    %2088 = vmatprep.subr.mxu0 0.0
    %v2089 = vand.u32 %v865, 4294901760
    %2090 = vmatpush1.msra.mxu0 %v2089
    %2091 = vmatprep.subr.mxu0 0.0
    %v2092 = vand.u32 %v866, 4294901760
    %2093 = vmatpush1.msra.mxu0 %v2092
    %2094 = vmatprep.subr.mxu0 0.0
    %v2095 = vand.u32 %v867, 4294901760
    %2096 = vmatpush1.msra.mxu0 %v2095
    %2097 = vmatprep.subr.mxu0 0.0
    %v2098 = vand.u32 %v868, 4294901760
    %2099 = vmatpush1.msra.mxu0 %v2098
    %2100 = vmatprep.subr.mxu0 0.0
    %v2101 = vand.u32 %v869, 4294901760
    %2102 = vmatpush1.msra.mxu0 %v2101
    %2103 = vmatprep.subr.mxu0 0.0
    %v2104 = vand.u32 %v870, 4294901760
    %2105 = vmatpush1.msra.mxu0 %v2104
    %2106 = vmatprep.subr.mxu0 0.0
    %v2107 = vand.u32 %v871, 4294901760
    %2108 = vmatpush1.msra.mxu0 %v2107
    %2109 = vmatprep.subr.mxu0 0.0
    %v2110 = vand.u32 %v872, 4294901760
    %2111 = vmatpush1.msra.mxu0 %v2110
    %2112 = vmatprep.subr.mxu0 0.0
    %v2113 = vand.u32 %v873, 4294901760
    %2114 = vmatpush1.msra.mxu0 %v2113
    %2115 = vmatprep.subr.mxu0 0.0
    %v2116 = vand.u32 %v874, 4294901760
    %2117 = vmatpush1.msra.mxu0 %v2116
    %2118 = vmatprep.subr.mxu0 0.0
    %v2119 = vand.u32 %v875, 4294901760
    %2120 = vmatpush1.msra.mxu0 %v2119
    %2121 = vmatprep.subr.mxu0 0.0
    %v2122 = vand.u32 %v876, 4294901760
    %2123 = vmatpush1.msra.mxu0 %v2122
    %2124 = vmatprep.subr.mxu0 0.0
    %v2125 = vand.u32 %v877, 4294901760
    %2126 = vmatpush1.msra.mxu0 %v2125
    %2127 = vmatprep.subr.mxu0 0.0
    %2128 = vmatpush1.msra.mxu0 0.0
    %2129 = vmatprep.subr.mxu0 0.0
    %2130 = vmatpush1.msra.mxu0 0.0
    %2131 = vmatprep.subr.mxu0 0.0
    %2132 = vmatpush1.msra.mxu0 0.0
    %2133 = vmatprep.subr.mxu0 0.0
    %2134 = vmatpush1.msra.mxu0 0.0
    %2135 = vmatprep.subr.mxu0 0.0
    %2136 = vmatpush1.msra.mxu0 0.0
    %2137 = vmatprep.subr.mxu0 0.0
    %2138 = vmatpush1.msra.mxu0 0.0
    %2139 = vmatprep.subr.mxu0 0.0
    %2140 = vmatpush1.msra.mxu0 0.0
    %2141 = vmatprep.subr.mxu0 0.0
    %2142 = vmatpush1.msra.mxu0 0.0
    %2143 = vmatprep.subr.mxu0 0.0
    %2144 = vmatpush1.msra.mxu0 0.0
    %2145 = vmatprep.subr.mxu0 0.0
    %2146 = vmatpush1.msra.mxu0 0.0
    %2147 = vmatprep.subr.mxu0 0.0
    %2148 = vmatpush1.msra.mxu0 0.0
    %2149 = vmatprep.subr.mxu0 0.0
    %2150 = vmatpush1.msra.mxu0 0.0
    %2151 = vmatprep.subr.mxu0 0.0
    %2152 = vmatpush1.msra.mxu0 0.0
    %2153 = vmatprep.subr.mxu0 0.0
    %2154 = vmatpush1.msra.mxu0 0.0
    %2155 = vmatprep.subr.mxu0 0.0
    %2156 = vmatpush1.msra.mxu0 0.0
    %2157 = vmatprep.subr.mxu0 0.0
    %2158 = vmatpush1.msra.mxu0 0.0
    %2159 = vmatprep.mubr.f32.mxu0 0.0
    %v2160 = vand.u32 %v1523, 4294901760
    %2161 = vmatmul.mubr.f32.gmra.mrb[0].mxu0 %v2160
    %v2162 = vpop.f32.mrb[0].mxu0
    %v2163 = vadd.f32 %v2076, %v2162
    %v2164 = vpop.f32.mrb[0].mxu0
    %2165 = vdwg.mxu0
    %v2166 = vadd.f32 %v1524, %v2163
    %v2167 = vtanh.pop %v2166
    %v2168 = vld [vmem:[#allocation2 + $0x18] sm:$0xff]
    %2169 = vmatprep.subr.mxu0 0.0
    %v2170 = vand.u32 %v862, 4294901760
    %2171 = vmatpush1.msra.mxu0 %v2170
    %2172 = vmatprep.subr.mxu0 0.0
    %v2173 = vand.u32 %v863, 4294901760
    %2174 = vmatpush1.msra.mxu0 %v2173
    %2175 = vmatprep.subr.mxu0 0.0
    %v2176 = vand.u32 %v864, 4294901760
    %2177 = vmatpush1.msra.mxu0 %v2176
    %2178 = vmatprep.subr.mxu0 0.0
    %v2179 = vand.u32 %v865, 4294901760
    %2180 = vmatpush1.msra.mxu0 %v2179
    %2181 = vmatprep.subr.mxu0 0.0
    %v2182 = vand.u32 %v866, 4294901760
    %2183 = vmatpush1.msra.mxu0 %v2182
    %2184 = vmatprep.subr.mxu0 0.0
    %v2185 = vand.u32 %v867, 4294901760
    %2186 = vmatpush1.msra.mxu0 %v2185
    %2187 = vmatprep.subr.mxu0 0.0
    %v2188 = vand.u32 %v868, 4294901760
    %2189 = vmatpush1.msra.mxu0 %v2188
    %2190 = vmatprep.subr.mxu0 0.0
    %v2191 = vand.u32 %v869, 4294901760
    %2192 = vmatpush1.msra.mxu0 %v2191
    %2193 = vmatprep.subr.mxu0 0.0
    %v2194 = vand.u32 %v870, 4294901760
    %2195 = vmatpush1.msra.mxu0 %v2194
    %2196 = vmatprep.subr.mxu0 0.0
    %v2197 = vand.u32 %v871, 4294901760
    %2198 = vmatpush1.msra.mxu0 %v2197
    %2199 = vmatprep.subr.mxu0 0.0
    %v2200 = vand.u32 %v872, 4294901760
    %2201 = vmatpush1.msra.mxu0 %v2200
    %2202 = vmatprep.subr.mxu0 0.0
    %v2203 = vand.u32 %v873, 4294901760
    %2204 = vmatpush1.msra.mxu0 %v2203
    %2205 = vmatprep.subr.mxu0 0.0
    %v2206 = vand.u32 %v874, 4294901760
    %2207 = vmatpush1.msra.mxu0 %v2206
    %2208 = vmatprep.subr.mxu0 0.0
    %v2209 = vand.u32 %v875, 4294901760
    %2210 = vmatpush1.msra.mxu0 %v2209
    %2211 = vmatprep.subr.mxu0 0.0
    %v2212 = vand.u32 %v876, 4294901760
    %2213 = vmatpush1.msra.mxu0 %v2212
    %2214 = vmatprep.subr.mxu0 0.0
    %v2215 = vand.u32 %v877, 4294901760
    %2216 = vmatpush1.msra.mxu0 %v2215
    %2217 = vmatprep.subr.mxu0 0.0
    %2218 = vmatpush1.msra.mxu0 0.0
    %2219 = vmatprep.subr.mxu0 0.0
    %2220 = vmatpush1.msra.mxu0 0.0
    %2221 = vmatprep.subr.mxu0 0.0
    %2222 = vmatpush1.msra.mxu0 0.0
    %2223 = vmatprep.subr.mxu0 0.0
    %2224 = vmatpush1.msra.mxu0 0.0
    %2225 = vmatprep.subr.mxu0 0.0
    %2226 = vmatpush1.msra.mxu0 0.0
    %2227 = vmatprep.subr.mxu0 0.0
    %2228 = vmatpush1.msra.mxu0 0.0
    %2229 = vmatprep.subr.mxu0 0.0
    %2230 = vmatpush1.msra.mxu0 0.0
    %2231 = vmatprep.subr.mxu0 0.0
    %2232 = vmatpush1.msra.mxu0 0.0
    %2233 = vmatprep.subr.mxu0 0.0
    %2234 = vmatpush1.msra.mxu0 0.0
    %2235 = vmatprep.subr.mxu0 0.0
    %2236 = vmatpush1.msra.mxu0 0.0
    %2237 = vmatprep.subr.mxu0 0.0
    %2238 = vmatpush1.msra.mxu0 0.0
    %2239 = vmatprep.subr.mxu0 0.0
    %2240 = vmatpush1.msra.mxu0 0.0
    %2241 = vmatprep.subr.mxu0 0.0
    %2242 = vmatpush1.msra.mxu0 0.0
    %2243 = vmatprep.subr.mxu0 0.0
    %2244 = vmatpush1.msra.mxu0 0.0
    %2245 = vmatprep.subr.mxu0 0.0
    %2246 = vmatpush1.msra.mxu0 0.0
    %2247 = vmatprep.subr.mxu0 0.0
    %2248 = vmatpush1.msra.mxu0 0.0
    %2249 = vmatprep.mubr.f32.mxu0 0.0
    %v2250 = vand.u32 %v2167, 4294901760
    %v2251 = vsub.f32 %v2167, %v2250
    %v2252 = vand.u32 %v2251, 4294901760
    %v2253 = vsub.f32 %v2251, %v2252
    %v2254 = vand.u32 %v2253, 4294901760
    %2255 = vmatmul.mubr.f32.gmra.mrb[0].mxu0 %v2254
    %v2256 = vpop.f32.mrb[0].mxu0
    %v2257 = vadd.f32 0.0, %v2256
    %v2258 = vpop.f32.mrb[0].mxu0
    %2259 = vdwg.mxu0
    %2260 = vmatprep.subr.mxu0 0.0
    %v2261 = vand.u32 %v862, 4294901760
    %v2262 = vsub.f32 %v862, %v2261
    %v2263 = vand.u32 %v2262, 4294901760
    %v2264 = vsub.f32 %v2262, %v2263
    %v2265 = vand.u32 %v2264, 4294901760
    %2266 = vmatpush1.msra.mxu0 %v2265
    %2267 = vmatprep.subr.mxu0 0.0
    %v2268 = vand.u32 %v863, 4294901760
    %v2269 = vsub.f32 %v863, %v2268
    %v2270 = vand.u32 %v2269, 4294901760
    %v2271 = vsub.f32 %v2269, %v2270
    %v2272 = vand.u32 %v2271, 4294901760
    %2273 = vmatpush1.msra.mxu0 %v2272
    %2274 = vmatprep.subr.mxu0 0.0
    %v2275 = vand.u32 %v864, 4294901760
    %v2276 = vsub.f32 %v864, %v2275
    %v2277 = vand.u32 %v2276, 4294901760
    %v2278 = vsub.f32 %v2276, %v2277
    %v2279 = vand.u32 %v2278, 4294901760
    %2280 = vmatpush1.msra.mxu0 %v2279
    %2281 = vmatprep.subr.mxu0 0.0
    %v2282 = vand.u32 %v865, 4294901760
    %v2283 = vsub.f32 %v865, %v2282
    %v2284 = vand.u32 %v2283, 4294901760
    %v2285 = vsub.f32 %v2283, %v2284
    %v2286 = vand.u32 %v2285, 4294901760
    %2287 = vmatpush1.msra.mxu0 %v2286
    %2288 = vmatprep.subr.mxu0 0.0
    %v2289 = vand.u32 %v866, 4294901760
    %v2290 = vsub.f32 %v866, %v2289
    %v2291 = vand.u32 %v2290, 4294901760
    %v2292 = vsub.f32 %v2290, %v2291
    %v2293 = vand.u32 %v2292, 4294901760
    %2294 = vmatpush1.msra.mxu0 %v2293
    %2295 = vmatprep.subr.mxu0 0.0
    %v2296 = vand.u32 %v867, 4294901760
    %v2297 = vsub.f32 %v867, %v2296
    %v2298 = vand.u32 %v2297, 4294901760
    %v2299 = vsub.f32 %v2297, %v2298
    %v2300 = vand.u32 %v2299, 4294901760
    %2301 = vmatpush1.msra.mxu0 %v2300
    %2302 = vmatprep.subr.mxu0 0.0
    %v2303 = vand.u32 %v868, 4294901760
    %v2304 = vsub.f32 %v868, %v2303
    %v2305 = vand.u32 %v2304, 4294901760
    %v2306 = vsub.f32 %v2304, %v2305
    %v2307 = vand.u32 %v2306, 4294901760
    %2308 = vmatpush1.msra.mxu0 %v2307
    %2309 = vmatprep.subr.mxu0 0.0
    %v2310 = vand.u32 %v869, 4294901760
    %v2311 = vsub.f32 %v869, %v2310
    %v2312 = vand.u32 %v2311, 4294901760
    %v2313 = vsub.f32 %v2311, %v2312
    %v2314 = vand.u32 %v2313, 4294901760
    %2315 = vmatpush1.msra.mxu0 %v2314
    %2316 = vmatprep.subr.mxu0 0.0
    %v2317 = vand.u32 %v870, 4294901760
    %v2318 = vsub.f32 %v870, %v2317
    %v2319 = vand.u32 %v2318, 4294901760
    %v2320 = vsub.f32 %v2318, %v2319
    %v2321 = vand.u32 %v2320, 4294901760
    %2322 = vmatpush1.msra.mxu0 %v2321
    %2323 = vmatprep.subr.mxu0 0.0
    %v2324 = vand.u32 %v871, 4294901760
    %v2325 = vsub.f32 %v871, %v2324
    %v2326 = vand.u32 %v2325, 4294901760
    %v2327 = vsub.f32 %v2325, %v2326
    %v2328 = vand.u32 %v2327, 4294901760
    %2329 = vmatpush1.msra.mxu0 %v2328
    %2330 = vmatprep.subr.mxu0 0.0
    %v2331 = vand.u32 %v872, 4294901760
    %v2332 = vsub.f32 %v872, %v2331
    %v2333 = vand.u32 %v2332, 4294901760
    %v2334 = vsub.f32 %v2332, %v2333
    %v2335 = vand.u32 %v2334, 4294901760
    %2336 = vmatpush1.msra.mxu0 %v2335
    %2337 = vmatprep.subr.mxu0 0.0
    %v2338 = vand.u32 %v873, 4294901760
    %v2339 = vsub.f32 %v873, %v2338
    %v2340 = vand.u32 %v2339, 4294901760
    %v2341 = vsub.f32 %v2339, %v2340
    %v2342 = vand.u32 %v2341, 4294901760
    %2343 = vmatpush1.msra.mxu0 %v2342
    %2344 = vmatprep.subr.mxu0 0.0
    %v2345 = vand.u32 %v874, 4294901760
    %v2346 = vsub.f32 %v874, %v2345
    %v2347 = vand.u32 %v2346, 4294901760
    %v2348 = vsub.f32 %v2346, %v2347
    %v2349 = vand.u32 %v2348, 4294901760
    %2350 = vmatpush1.msra.mxu0 %v2349
    %2351 = vmatprep.subr.mxu0 0.0
    %v2352 = vand.u32 %v875, 4294901760
    %v2353 = vsub.f32 %v875, %v2352
    %v2354 = vand.u32 %v2353, 4294901760
    %v2355 = vsub.f32 %v2353, %v2354
    %v2356 = vand.u32 %v2355, 4294901760
    %2357 = vmatpush1.msra.mxu0 %v2356
    %2358 = vmatprep.subr.mxu0 0.0
    %v2359 = vand.u32 %v876, 4294901760
    %v2360 = vsub.f32 %v876, %v2359
    %v2361 = vand.u32 %v2360, 4294901760
    %v2362 = vsub.f32 %v2360, %v2361
    %v2363 = vand.u32 %v2362, 4294901760
    %2364 = vmatpush1.msra.mxu0 %v2363
    %2365 = vmatprep.subr.mxu0 0.0
    %v2366 = vand.u32 %v877, 4294901760
    %v2367 = vsub.f32 %v877, %v2366
    %v2368 = vand.u32 %v2367, 4294901760
    %v2369 = vsub.f32 %v2367, %v2368
    %v2370 = vand.u32 %v2369, 4294901760
    %2371 = vmatpush1.msra.mxu0 %v2370
    %2372 = vmatprep.subr.mxu0 0.0
    %2373 = vmatpush1.msra.mxu0 0.0
    %2374 = vmatprep.subr.mxu0 0.0
    %2375 = vmatpush1.msra.mxu0 0.0
    %2376 = vmatprep.subr.mxu0 0.0
    %2377 = vmatpush1.msra.mxu0 0.0
    %2378 = vmatprep.subr.mxu0 0.0
    %2379 = vmatpush1.msra.mxu0 0.0
    %2380 = vmatprep.subr.mxu0 0.0
    %2381 = vmatpush1.msra.mxu0 0.0
    %2382 = vmatprep.subr.mxu0 0.0
    %2383 = vmatpush1.msra.mxu0 0.0
    %2384 = vmatprep.subr.mxu0 0.0
    %2385 = vmatpush1.msra.mxu0 0.0
    %2386 = vmatprep.subr.mxu0 0.0
    %2387 = vmatpush1.msra.mxu0 0.0
    %2388 = vmatprep.subr.mxu0 0.0
    %2389 = vmatpush1.msra.mxu0 0.0
    %2390 = vmatprep.subr.mxu0 0.0
    %2391 = vmatpush1.msra.mxu0 0.0
    %2392 = vmatprep.subr.mxu0 0.0
    %2393 = vmatpush1.msra.mxu0 0.0
    %2394 = vmatprep.subr.mxu0 0.0
    %2395 = vmatpush1.msra.mxu0 0.0
    %2396 = vmatprep.subr.mxu0 0.0
    %2397 = vmatpush1.msra.mxu0 0.0
    %2398 = vmatprep.subr.mxu0 0.0
    %2399 = vmatpush1.msra.mxu0 0.0
    %2400 = vmatprep.subr.mxu0 0.0
    %2401 = vmatpush1.msra.mxu0 0.0
    %2402 = vmatprep.subr.mxu0 0.0
    %2403 = vmatpush1.msra.mxu0 0.0
    %2404 = vmatprep.mubr.f32.mxu0 0.0
    %v2405 = vand.u32 %v2167, 4294901760
    %2406 = vmatmul.mubr.f32.gmra.mrb[0].mxu0 %v2405
    %v2407 = vpop.f32.mrb[0].mxu0
    %v2408 = vadd.f32 %v2257, %v2407
    %v2409 = vpop.f32.mrb[0].mxu0
    %2410 = vdwg.mxu0
    %2411 = vmatprep.subr.mxu0 0.0
    %v2412 = vand.u32 %v862, 4294901760
    %v2413 = vsub.f32 %v862, %v2412
    %2414 = vmatpush1.msra.mxu0 %v2413
    %2415 = vmatprep.subr.mxu0 0.0
    %v2416 = vand.u32 %v863, 4294901760
    %v2417 = vsub.f32 %v863, %v2416
    %2418 = vmatpush1.msra.mxu0 %v2417
    %2419 = vmatprep.subr.mxu0 0.0
    %v2420 = vand.u32 %v864, 4294901760
    %v2421 = vsub.f32 %v864, %v2420
    %2422 = vmatpush1.msra.mxu0 %v2421
    %2423 = vmatprep.subr.mxu0 0.0
    %v2424 = vand.u32 %v865, 4294901760
    %v2425 = vsub.f32 %v865, %v2424
    %2426 = vmatpush1.msra.mxu0 %v2425
    %2427 = vmatprep.subr.mxu0 0.0
    %v2428 = vand.u32 %v866, 4294901760
    %v2429 = vsub.f32 %v866, %v2428
    %2430 = vmatpush1.msra.mxu0 %v2429
    %2431 = vmatprep.subr.mxu0 0.0
    %v2432 = vand.u32 %v867, 4294901760
    %v2433 = vsub.f32 %v867, %v2432
    %2434 = vmatpush1.msra.mxu0 %v2433
    %2435 = vmatprep.subr.mxu0 0.0
    %v2436 = vand.u32 %v868, 4294901760
    %v2437 = vsub.f32 %v868, %v2436
    %2438 = vmatpush1.msra.mxu0 %v2437
    %2439 = vmatprep.subr.mxu0 0.0
    %v2440 = vand.u32 %v869, 4294901760
    %v2441 = vsub.f32 %v869, %v2440
    %2442 = vmatpush1.msra.mxu0 %v2441
    %2443 = vmatprep.subr.mxu0 0.0
    %v2444 = vand.u32 %v870, 4294901760
    %v2445 = vsub.f32 %v870, %v2444
    %2446 = vmatpush1.msra.mxu0 %v2445
    %2447 = vmatprep.subr.mxu0 0.0
    %v2448 = vand.u32 %v871, 4294901760
    %v2449 = vsub.f32 %v871, %v2448
    %2450 = vmatpush1.msra.mxu0 %v2449
    %2451 = vmatprep.subr.mxu0 0.0
    %v2452 = vand.u32 %v872, 4294901760
    %v2453 = vsub.f32 %v872, %v2452
    %2454 = vmatpush1.msra.mxu0 %v2453
    %2455 = vmatprep.subr.mxu0 0.0
    %v2456 = vand.u32 %v873, 4294901760
    %v2457 = vsub.f32 %v873, %v2456
    %2458 = vmatpush1.msra.mxu0 %v2457
    %2459 = vmatprep.subr.mxu0 0.0
    %v2460 = vand.u32 %v874, 4294901760
    %v2461 = vsub.f32 %v874, %v2460
    %2462 = vmatpush1.msra.mxu0 %v2461
    %2463 = vmatprep.subr.mxu0 0.0
    %v2464 = vand.u32 %v875, 4294901760
    %v2465 = vsub.f32 %v875, %v2464
    %2466 = vmatpush1.msra.mxu0 %v2465
    %2467 = vmatprep.subr.mxu0 0.0
    %v2468 = vand.u32 %v876, 4294901760
    %v2469 = vsub.f32 %v876, %v2468
    %2470 = vmatpush1.msra.mxu0 %v2469
    %2471 = vmatprep.subr.mxu0 0.0
    %v2472 = vand.u32 %v877, 4294901760
    %v2473 = vsub.f32 %v877, %v2472
    %2474 = vmatpush1.msra.mxu0 %v2473
    %2475 = vmatprep.subr.mxu0 0.0
    %2476 = vmatpush1.msra.mxu0 0.0
    %2477 = vmatprep.subr.mxu0 0.0
    %2478 = vmatpush1.msra.mxu0 0.0
    %2479 = vmatprep.subr.mxu0 0.0
    %2480 = vmatpush1.msra.mxu0 0.0
    %2481 = vmatprep.subr.mxu0 0.0
    %2482 = vmatpush1.msra.mxu0 0.0
    %2483 = vmatprep.subr.mxu0 0.0
    %2484 = vmatpush1.msra.mxu0 0.0
    %2485 = vmatprep.subr.mxu0 0.0
    %2486 = vmatpush1.msra.mxu0 0.0
    %2487 = vmatprep.subr.mxu0 0.0
    %2488 = vmatpush1.msra.mxu0 0.0
    %2489 = vmatprep.subr.mxu0 0.0
    %2490 = vmatpush1.msra.mxu0 0.0
    %2491 = vmatprep.subr.mxu0 0.0
    %2492 = vmatpush1.msra.mxu0 0.0
    %2493 = vmatprep.subr.mxu0 0.0
    %2494 = vmatpush1.msra.mxu0 0.0
    %2495 = vmatprep.subr.mxu0 0.0
    %2496 = vmatpush1.msra.mxu0 0.0
    %2497 = vmatprep.subr.mxu0 0.0
    %2498 = vmatpush1.msra.mxu0 0.0
    %2499 = vmatprep.subr.mxu0 0.0
    %2500 = vmatpush1.msra.mxu0 0.0
    %2501 = vmatprep.subr.mxu0 0.0
    %2502 = vmatpush1.msra.mxu0 0.0
    %2503 = vmatprep.subr.mxu0 0.0
    %2504 = vmatpush1.msra.mxu0 0.0
    %2505 = vmatprep.subr.mxu0 0.0
    %2506 = vmatpush1.msra.mxu0 0.0
    %2507 = vmatprep.mubr.f32.mxu0 0.0
    %v2508 = vand.u32 %v2167, 4294901760
    %v2509 = vsub.f32 %v2167, %v2508
    %2510 = vmatmul.mubr.f32.gmra.mrb[0].mxu0 %v2509
    %v2511 = vpop.f32.mrb[0].mxu0
    %v2512 = vadd.f32 %v2408, %v2511
    %v2513 = vpop.f32.mrb[0].mxu0
    %2514 = vdwg.mxu0
    %2515 = vmatprep.subr.mxu0 0.0
    %v2516 = vand.u32 %v862, 4294901760
    %2517 = vmatpush1.msra.mxu0 %v2516
    %2518 = vmatprep.subr.mxu0 0.0
    %v2519 = vand.u32 %v863, 4294901760
    %2520 = vmatpush1.msra.mxu0 %v2519
    %2521 = vmatprep.subr.mxu0 0.0
    %v2522 = vand.u32 %v864, 4294901760
    %2523 = vmatpush1.msra.mxu0 %v2522
    %2524 = vmatprep.subr.mxu0 0.0
    %v2525 = vand.u32 %v865, 4294901760
    %2526 = vmatpush1.msra.mxu0 %v2525
    %2527 = vmatprep.subr.mxu0 0.0
    %v2528 = vand.u32 %v866, 4294901760
    %2529 = vmatpush1.msra.mxu0 %v2528
    %2530 = vmatprep.subr.mxu0 0.0
    %v2531 = vand.u32 %v867, 4294901760
    %2532 = vmatpush1.msra.mxu0 %v2531
    %2533 = vmatprep.subr.mxu0 0.0
    %v2534 = vand.u32 %v868, 4294901760
    %2535 = vmatpush1.msra.mxu0 %v2534
    %2536 = vmatprep.subr.mxu0 0.0
    %v2537 = vand.u32 %v869, 4294901760
    %2538 = vmatpush1.msra.mxu0 %v2537
    %2539 = vmatprep.subr.mxu0 0.0
    %v2540 = vand.u32 %v870, 4294901760
    %2541 = vmatpush1.msra.mxu0 %v2540
    %2542 = vmatprep.subr.mxu0 0.0
    %v2543 = vand.u32 %v871, 4294901760
    %2544 = vmatpush1.msra.mxu0 %v2543
    %2545 = vmatprep.subr.mxu0 0.0
    %v2546 = vand.u32 %v872, 4294901760
    %2547 = vmatpush1.msra.mxu0 %v2546
    %2548 = vmatprep.subr.mxu0 0.0
    %v2549 = vand.u32 %v873, 4294901760
    %2550 = vmatpush1.msra.mxu0 %v2549
    %2551 = vmatprep.subr.mxu0 0.0
    %v2552 = vand.u32 %v874, 4294901760
    %2553 = vmatpush1.msra.mxu0 %v2552
    %2554 = vmatprep.subr.mxu0 0.0
    %v2555 = vand.u32 %v875, 4294901760
    %2556 = vmatpush1.msra.mxu0 %v2555
    %2557 = vmatprep.subr.mxu0 0.0
    %v2558 = vand.u32 %v876, 4294901760
    %2559 = vmatpush1.msra.mxu0 %v2558
    %2560 = vmatprep.subr.mxu0 0.0
    %v2561 = vand.u32 %v877, 4294901760
    %2562 = vmatpush1.msra.mxu0 %v2561
    %2563 = vmatprep.subr.mxu0 0.0
    %2564 = vmatpush1.msra.mxu0 0.0
    %2565 = vmatprep.subr.mxu0 0.0
    %2566 = vmatpush1.msra.mxu0 0.0
    %2567 = vmatprep.subr.mxu0 0.0
    %2568 = vmatpush1.msra.mxu0 0.0
    %2569 = vmatprep.subr.mxu0 0.0
    %2570 = vmatpush1.msra.mxu0 0.0
    %2571 = vmatprep.subr.mxu0 0.0
    %2572 = vmatpush1.msra.mxu0 0.0
    %2573 = vmatprep.subr.mxu0 0.0
    %2574 = vmatpush1.msra.mxu0 0.0
    %2575 = vmatprep.subr.mxu0 0.0
    %2576 = vmatpush1.msra.mxu0 0.0
    %2577 = vmatprep.subr.mxu0 0.0
    %2578 = vmatpush1.msra.mxu0 0.0
    %2579 = vmatprep.subr.mxu0 0.0
    %2580 = vmatpush1.msra.mxu0 0.0
    %2581 = vmatprep.subr.mxu0 0.0
    %2582 = vmatpush1.msra.mxu0 0.0
    %2583 = vmatprep.subr.mxu0 0.0
    %2584 = vmatpush1.msra.mxu0 0.0
    %2585 = vmatprep.subr.mxu0 0.0
    %2586 = vmatpush1.msra.mxu0 0.0
    %2587 = vmatprep.subr.mxu0 0.0
    %2588 = vmatpush1.msra.mxu0 0.0
    %2589 = vmatprep.subr.mxu0 0.0
    %2590 = vmatpush1.msra.mxu0 0.0
    %2591 = vmatprep.subr.mxu0 0.0
    %2592 = vmatpush1.msra.mxu0 0.0
    %2593 = vmatprep.subr.mxu0 0.0
    %2594 = vmatpush1.msra.mxu0 0.0
    %2595 = vmatprep.mubr.f32.mxu0 0.0
    %v2596 = vand.u32 %v2167, 4294901760
    %v2597 = vsub.f32 %v2167, %v2596
    %v2598 = vand.u32 %v2597, 4294901760
    %2599 = vmatmul.mubr.f32.gmra.mrb[0].mxu0 %v2598
    %v2600 = vpop.f32.mrb[0].mxu0
    %v2601 = vadd.f32 %v2512, %v2600
    %v2602 = vpop.f32.mrb[0].mxu0
    %2603 = vdwg.mxu0
    %2604 = vmatprep.subr.mxu0 0.0
    %v2605 = vand.u32 %v862, 4294901760
    %v2606 = vsub.f32 %v862, %v2605
    %v2607 = vand.u32 %v2606, 4294901760
    %2608 = vmatpush1.msra.mxu0 %v2607
    %2609 = vmatprep.subr.mxu0 0.0
    %v2610 = vand.u32 %v863, 4294901760
    %v2611 = vsub.f32 %v863, %v2610
    %v2612 = vand.u32 %v2611, 4294901760
    %2613 = vmatpush1.msra.mxu0 %v2612
    %2614 = vmatprep.subr.mxu0 0.0
    %v2615 = vand.u32 %v864, 4294901760
    %v2616 = vsub.f32 %v864, %v2615
    %v2617 = vand.u32 %v2616, 4294901760
    %2618 = vmatpush1.msra.mxu0 %v2617
    %2619 = vmatprep.subr.mxu0 0.0
    %v2620 = vand.u32 %v865, 4294901760
    %v2621 = vsub.f32 %v865, %v2620
    %v2622 = vand.u32 %v2621, 4294901760
    %2623 = vmatpush1.msra.mxu0 %v2622
    %2624 = vmatprep.subr.mxu0 0.0
    %v2625 = vand.u32 %v866, 4294901760
    %v2626 = vsub.f32 %v866, %v2625
    %v2627 = vand.u32 %v2626, 4294901760
    %2628 = vmatpush1.msra.mxu0 %v2627
    %2629 = vmatprep.subr.mxu0 0.0
    %v2630 = vand.u32 %v867, 4294901760
    %v2631 = vsub.f32 %v867, %v2630
    %v2632 = vand.u32 %v2631, 4294901760
    %2633 = vmatpush1.msra.mxu0 %v2632
    %2634 = vmatprep.subr.mxu0 0.0
    %v2635 = vand.u32 %v868, 4294901760
    %v2636 = vsub.f32 %v868, %v2635
    %v2637 = vand.u32 %v2636, 4294901760
    %2638 = vmatpush1.msra.mxu0 %v2637
    %2639 = vmatprep.subr.mxu0 0.0
    %v2640 = vand.u32 %v869, 4294901760
    %v2641 = vsub.f32 %v869, %v2640
    %v2642 = vand.u32 %v2641, 4294901760
    %2643 = vmatpush1.msra.mxu0 %v2642
    %2644 = vmatprep.subr.mxu0 0.0
    %v2645 = vand.u32 %v870, 4294901760
    %v2646 = vsub.f32 %v870, %v2645
    %v2647 = vand.u32 %v2646, 4294901760
    %2648 = vmatpush1.msra.mxu0 %v2647
    %2649 = vmatprep.subr.mxu0 0.0
    %v2650 = vand.u32 %v871, 4294901760
    %v2651 = vsub.f32 %v871, %v2650
    %v2652 = vand.u32 %v2651, 4294901760
    %2653 = vmatpush1.msra.mxu0 %v2652
    %2654 = vmatprep.subr.mxu0 0.0
    %v2655 = vand.u32 %v872, 4294901760
    %v2656 = vsub.f32 %v872, %v2655
    %v2657 = vand.u32 %v2656, 4294901760
    %2658 = vmatpush1.msra.mxu0 %v2657
    %2659 = vmatprep.subr.mxu0 0.0
    %v2660 = vand.u32 %v873, 4294901760
    %v2661 = vsub.f32 %v873, %v2660
    %v2662 = vand.u32 %v2661, 4294901760
    %2663 = vmatpush1.msra.mxu0 %v2662
    %2664 = vmatprep.subr.mxu0 0.0
    %v2665 = vand.u32 %v874, 4294901760
    %v2666 = vsub.f32 %v874, %v2665
    %v2667 = vand.u32 %v2666, 4294901760
    %2668 = vmatpush1.msra.mxu0 %v2667
    %2669 = vmatprep.subr.mxu0 0.0
    %v2670 = vand.u32 %v875, 4294901760
    %v2671 = vsub.f32 %v875, %v2670
    %v2672 = vand.u32 %v2671, 4294901760
    %2673 = vmatpush1.msra.mxu0 %v2672
    %2674 = vmatprep.subr.mxu0 0.0
    %v2675 = vand.u32 %v876, 4294901760
    %v2676 = vsub.f32 %v876, %v2675
    %v2677 = vand.u32 %v2676, 4294901760
    %2678 = vmatpush1.msra.mxu0 %v2677
    %2679 = vmatprep.subr.mxu0 0.0
    %v2680 = vand.u32 %v877, 4294901760
    %v2681 = vsub.f32 %v877, %v2680
    %v2682 = vand.u32 %v2681, 4294901760
    %2683 = vmatpush1.msra.mxu0 %v2682
    %2684 = vmatprep.subr.mxu0 0.0
    %2685 = vmatpush1.msra.mxu0 0.0
    %2686 = vmatprep.subr.mxu0 0.0
    %2687 = vmatpush1.msra.mxu0 0.0
    %2688 = vmatprep.subr.mxu0 0.0
    %2689 = vmatpush1.msra.mxu0 0.0
    %2690 = vmatprep.subr.mxu0 0.0
    %2691 = vmatpush1.msra.mxu0 0.0
    %2692 = vmatprep.subr.mxu0 0.0
    %2693 = vmatpush1.msra.mxu0 0.0
    %2694 = vmatprep.subr.mxu0 0.0
    %2695 = vmatpush1.msra.mxu0 0.0
    %2696 = vmatprep.subr.mxu0 0.0
    %2697 = vmatpush1.msra.mxu0 0.0
    %2698 = vmatprep.subr.mxu0 0.0
    %2699 = vmatpush1.msra.mxu0 0.0
    %2700 = vmatprep.subr.mxu0 0.0
    %2701 = vmatpush1.msra.mxu0 0.0
    %2702 = vmatprep.subr.mxu0 0.0
    %2703 = vmatpush1.msra.mxu0 0.0
    %2704 = vmatprep.subr.mxu0 0.0
    %2705 = vmatpush1.msra.mxu0 0.0
    %2706 = vmatprep.subr.mxu0 0.0
    %2707 = vmatpush1.msra.mxu0 0.0
    %2708 = vmatprep.subr.mxu0 0.0
    %2709 = vmatpush1.msra.mxu0 0.0
    %2710 = vmatprep.subr.mxu0 0.0
    %2711 = vmatpush1.msra.mxu0 0.0
    %2712 = vmatprep.subr.mxu0 0.0
    %2713 = vmatpush1.msra.mxu0 0.0
    %2714 = vmatprep.subr.mxu0 0.0
    %2715 = vmatpush1.msra.mxu0 0.0
    %2716 = vmatprep.mubr.f32.mxu0 0.0
    %v2717 = vand.u32 %v2167, 4294901760
    %2718 = vmatmul.mubr.f32.gmra.mrb[0].mxu0 %v2717
    %v2719 = vpop.f32.mrb[0].mxu0
    %v2720 = vadd.f32 %v2601, %v2719
    %v2721 = vpop.f32.mrb[0].mxu0
    %2722 = vdwg.mxu0
    %2723 = vmatprep.subr.mxu0 0.0
    %v2724 = vand.u32 %v862, 4294901760
    %2725 = vmatpush1.msra.mxu0 %v2724
    %2726 = vmatprep.subr.mxu0 0.0
    %v2727 = vand.u32 %v863, 4294901760
    %2728 = vmatpush1.msra.mxu0 %v2727
    %2729 = vmatprep.subr.mxu0 0.0
    %v2730 = vand.u32 %v864, 4294901760
    %2731 = vmatpush1.msra.mxu0 %v2730
    %2732 = vmatprep.subr.mxu0 0.0
    %v2733 = vand.u32 %v865, 4294901760
    %2734 = vmatpush1.msra.mxu0 %v2733
    %2735 = vmatprep.subr.mxu0 0.0
    %v2736 = vand.u32 %v866, 4294901760
    %2737 = vmatpush1.msra.mxu0 %v2736
    %2738 = vmatprep.subr.mxu0 0.0
    %v2739 = vand.u32 %v867, 4294901760
    %2740 = vmatpush1.msra.mxu0 %v2739
    %2741 = vmatprep.subr.mxu0 0.0
    %v2742 = vand.u32 %v868, 4294901760
    %2743 = vmatpush1.msra.mxu0 %v2742
    %2744 = vmatprep.subr.mxu0 0.0
    %v2745 = vand.u32 %v869, 4294901760
    %2746 = vmatpush1.msra.mxu0 %v2745
    %2747 = vmatprep.subr.mxu0 0.0
    %v2748 = vand.u32 %v870, 4294901760
    %2749 = vmatpush1.msra.mxu0 %v2748
    %2750 = vmatprep.subr.mxu0 0.0
    %v2751 = vand.u32 %v871, 4294901760
    %2752 = vmatpush1.msra.mxu0 %v2751
    %2753 = vmatprep.subr.mxu0 0.0
    %v2754 = vand.u32 %v872, 4294901760
    %2755 = vmatpush1.msra.mxu0 %v2754
    %2756 = vmatprep.subr.mxu0 0.0
    %v2757 = vand.u32 %v873, 4294901760
    %2758 = vmatpush1.msra.mxu0 %v2757
    %2759 = vmatprep.subr.mxu0 0.0
    %v2760 = vand.u32 %v874, 4294901760
    %2761 = vmatpush1.msra.mxu0 %v2760
    %2762 = vmatprep.subr.mxu0 0.0
    %v2763 = vand.u32 %v875, 4294901760
    %2764 = vmatpush1.msra.mxu0 %v2763
    %2765 = vmatprep.subr.mxu0 0.0
    %v2766 = vand.u32 %v876, 4294901760
    %2767 = vmatpush1.msra.mxu0 %v2766
    %2768 = vmatprep.subr.mxu0 0.0
    %v2769 = vand.u32 %v877, 4294901760
    %2770 = vmatpush1.msra.mxu0 %v2769
    %2771 = vmatprep.subr.mxu0 0.0
    %2772 = vmatpush1.msra.mxu0 0.0
    %2773 = vmatprep.subr.mxu0 0.0
    %2774 = vmatpush1.msra.mxu0 0.0
    %2775 = vmatprep.subr.mxu0 0.0
    %2776 = vmatpush1.msra.mxu0 0.0
    %2777 = vmatprep.subr.mxu0 0.0
    %2778 = vmatpush1.msra.mxu0 0.0
    %2779 = vmatprep.subr.mxu0 0.0
    %2780 = vmatpush1.msra.mxu0 0.0
    %2781 = vmatprep.subr.mxu0 0.0
    %2782 = vmatpush1.msra.mxu0 0.0
    %2783 = vmatprep.subr.mxu0 0.0
    %2784 = vmatpush1.msra.mxu0 0.0
    %2785 = vmatprep.subr.mxu0 0.0
    %2786 = vmatpush1.msra.mxu0 0.0
    %2787 = vmatprep.subr.mxu0 0.0
    %2788 = vmatpush1.msra.mxu0 0.0
    %2789 = vmatprep.subr.mxu0 0.0
    %2790 = vmatpush1.msra.mxu0 0.0
    %2791 = vmatprep.subr.mxu0 0.0
    %2792 = vmatpush1.msra.mxu0 0.0
    %2793 = vmatprep.subr.mxu0 0.0
    %2794 = vmatpush1.msra.mxu0 0.0
    %2795 = vmatprep.subr.mxu0 0.0
    %2796 = vmatpush1.msra.mxu0 0.0
    %2797 = vmatprep.subr.mxu0 0.0
    %2798 = vmatpush1.msra.mxu0 0.0
    %2799 = vmatprep.subr.mxu0 0.0
    %2800 = vmatpush1.msra.mxu0 0.0
    %2801 = vmatprep.subr.mxu0 0.0
    %2802 = vmatpush1.msra.mxu0 0.0
    %2803 = vmatprep.mubr.f32.mxu0 0.0
    %v2804 = vand.u32 %v2167, 4294901760
    %2805 = vmatmul.mubr.f32.gmra.mrb[0].mxu0 %v2804
    %v2806 = vpop.f32.mrb[0].mxu0
    %v2807 = vadd.f32 %v2720, %v2806
    %v2808 = vpop.f32.mrb[0].mxu0
    %2809 = vdwg.mxu0
    %v2810 = vadd.f32 %v2168, %v2807
    %v2811 = vtanh.pop %v2810
    %v2812 = vld [vmem:[#allocation2 + $0x20] sm:$0xff]
    %2813 = vmatprep.subr.mxu0 0.0
    %v2814 = vand.u32 %v862, 4294901760
    %2815 = vmatpush1.msra.mxu0 %v2814
    %2816 = vmatprep.subr.mxu0 0.0
    %v2817 = vand.u32 %v863, 4294901760
    %2818 = vmatpush1.msra.mxu0 %v2817
    %2819 = vmatprep.subr.mxu0 0.0
    %v2820 = vand.u32 %v864, 4294901760
    %2821 = vmatpush1.msra.mxu0 %v2820
    %2822 = vmatprep.subr.mxu0 0.0
    %v2823 = vand.u32 %v865, 4294901760
    %2824 = vmatpush1.msra.mxu0 %v2823
    %2825 = vmatprep.subr.mxu0 0.0
    %v2826 = vand.u32 %v866, 4294901760
    %2827 = vmatpush1.msra.mxu0 %v2826
    %2828 = vmatprep.subr.mxu0 0.0
    %v2829 = vand.u32 %v867, 4294901760
    %2830 = vmatpush1.msra.mxu0 %v2829
    %2831 = vmatprep.subr.mxu0 0.0
    %v2832 = vand.u32 %v868, 4294901760
    %2833 = vmatpush1.msra.mxu0 %v2832
    %2834 = vmatprep.subr.mxu0 0.0
    %v2835 = vand.u32 %v869, 4294901760
    %2836 = vmatpush1.msra.mxu0 %v2835
    %2837 = vmatprep.subr.mxu0 0.0
    %v2838 = vand.u32 %v870, 4294901760
    %2839 = vmatpush1.msra.mxu0 %v2838
    %2840 = vmatprep.subr.mxu0 0.0
    %v2841 = vand.u32 %v871, 4294901760
    %2842 = vmatpush1.msra.mxu0 %v2841
    %2843 = vmatprep.subr.mxu0 0.0
    %v2844 = vand.u32 %v872, 4294901760
    %2845 = vmatpush1.msra.mxu0 %v2844
    %2846 = vmatprep.subr.mxu0 0.0
    %v2847 = vand.u32 %v873, 4294901760
    %2848 = vmatpush1.msra.mxu0 %v2847
    %2849 = vmatprep.subr.mxu0 0.0
    %v2850 = vand.u32 %v874, 4294901760
    %2851 = vmatpush1.msra.mxu0 %v2850
    %2852 = vmatprep.subr.mxu0 0.0
    %v2853 = vand.u32 %v875, 4294901760
    %2854 = vmatpush1.msra.mxu0 %v2853
    %2855 = vmatprep.subr.mxu0 0.0
    %v2856 = vand.u32 %v876, 4294901760
    %2857 = vmatpush1.msra.mxu0 %v2856
    %2858 = vmatprep.subr.mxu0 0.0
    %v2859 = vand.u32 %v877, 4294901760
    %2860 = vmatpush1.msra.mxu0 %v2859
    %2861 = vmatprep.subr.mxu0 0.0
    %2862 = vmatpush1.msra.mxu0 0.0
    %2863 = vmatprep.subr.mxu0 0.0
    %2864 = vmatpush1.msra.mxu0 0.0
    %2865 = vmatprep.subr.mxu0 0.0
    %2866 = vmatpush1.msra.mxu0 0.0
    %2867 = vmatprep.subr.mxu0 0.0
    %2868 = vmatpush1.msra.mxu0 0.0
    %2869 = vmatprep.subr.mxu0 0.0
    %2870 = vmatpush1.msra.mxu0 0.0
    %2871 = vmatprep.subr.mxu0 0.0
    %2872 = vmatpush1.msra.mxu0 0.0
    %2873 = vmatprep.subr.mxu0 0.0
    %2874 = vmatpush1.msra.mxu0 0.0
    %2875 = vmatprep.subr.mxu0 0.0
    %2876 = vmatpush1.msra.mxu0 0.0
    %2877 = vmatprep.subr.mxu0 0.0
    %2878 = vmatpush1.msra.mxu0 0.0
    %2879 = vmatprep.subr.mxu0 0.0
    %2880 = vmatpush1.msra.mxu0 0.0
    %2881 = vmatprep.subr.mxu0 0.0
    %2882 = vmatpush1.msra.mxu0 0.0
    %2883 = vmatprep.subr.mxu0 0.0
    %2884 = vmatpush1.msra.mxu0 0.0
    %2885 = vmatprep.subr.mxu0 0.0
    %2886 = vmatpush1.msra.mxu0 0.0
    %2887 = vmatprep.subr.mxu0 0.0
    %2888 = vmatpush1.msra.mxu0 0.0
    %2889 = vmatprep.subr.mxu0 0.0
    %2890 = vmatpush1.msra.mxu0 0.0
    %2891 = vmatprep.subr.mxu0 0.0
    %2892 = vmatpush1.msra.mxu0 0.0
    %2893 = vmatprep.mubr.f32.mxu0 0.0
    %v2894 = vand.u32 %v2811, 4294901760
    %v2895 = vsub.f32 %v2811, %v2894
    %v2896 = vand.u32 %v2895, 4294901760
    %v2897 = vsub.f32 %v2895, %v2896
    %v2898 = vand.u32 %v2897, 4294901760
    %2899 = vmatmul.mubr.f32.gmra.mrb[0].mxu0 %v2898
    %v2900 = vpop.f32.mrb[0].mxu0
    %v2901 = vadd.f32 0.0, %v2900
    %v2902 = vpop.f32.mrb[0].mxu0
    %2903 = vdwg.mxu0
    %2904 = vmatprep.subr.mxu0 0.0
    %v2905 = vand.u32 %v862, 4294901760
    %v2906 = vsub.f32 %v862, %v2905
    %v2907 = vand.u32 %v2906, 4294901760
    %v2908 = vsub.f32 %v2906, %v2907
    %v2909 = vand.u32 %v2908, 4294901760
    %2910 = vmatpush1.msra.mxu0 %v2909
    %2911 = vmatprep.subr.mxu0 0.0
    %v2912 = vand.u32 %v863, 4294901760
    %v2913 = vsub.f32 %v863, %v2912
    %v2914 = vand.u32 %v2913, 4294901760
    %v2915 = vsub.f32 %v2913, %v2914
    %v2916 = vand.u32 %v2915, 4294901760
    %2917 = vmatpush1.msra.mxu0 %v2916
    %2918 = vmatprep.subr.mxu0 0.0
    %v2919 = vand.u32 %v864, 4294901760
    %v2920 = vsub.f32 %v864, %v2919
    %v2921 = vand.u32 %v2920, 4294901760
    %v2922 = vsub.f32 %v2920, %v2921
    %v2923 = vand.u32 %v2922, 4294901760
    %2924 = vmatpush1.msra.mxu0 %v2923
    %2925 = vmatprep.subr.mxu0 0.0
    %v2926 = vand.u32 %v865, 4294901760
    %v2927 = vsub.f32 %v865, %v2926
    %v2928 = vand.u32 %v2927, 4294901760
    %v2929 = vsub.f32 %v2927, %v2928
    %v2930 = vand.u32 %v2929, 4294901760
    %2931 = vmatpush1.msra.mxu0 %v2930
    %2932 = vmatprep.subr.mxu0 0.0
    %v2933 = vand.u32 %v866, 4294901760
    %v2934 = vsub.f32 %v866, %v2933
    %v2935 = vand.u32 %v2934, 4294901760
    %v2936 = vsub.f32 %v2934, %v2935
    %v2937 = vand.u32 %v2936, 4294901760
    %2938 = vmatpush1.msra.mxu0 %v2937
    %2939 = vmatprep.subr.mxu0 0.0
    %v2940 = vand.u32 %v867, 4294901760
    %v2941 = vsub.f32 %v867, %v2940
    %v2942 = vand.u32 %v2941, 4294901760
    %v2943 = vsub.f32 %v2941, %v2942
    %v2944 = vand.u32 %v2943, 4294901760
    %2945 = vmatpush1.msra.mxu0 %v2944
    %2946 = vmatprep.subr.mxu0 0.0
    %v2947 = vand.u32 %v868, 4294901760
    %v2948 = vsub.f32 %v868, %v2947
    %v2949 = vand.u32 %v2948, 4294901760
    %v2950 = vsub.f32 %v2948, %v2949
    %v2951 = vand.u32 %v2950, 4294901760
    %2952 = vmatpush1.msra.mxu0 %v2951
    %2953 = vmatprep.subr.mxu0 0.0
    %v2954 = vand.u32 %v869, 4294901760
    %v2955 = vsub.f32 %v869, %v2954
    %v2956 = vand.u32 %v2955, 4294901760
    %v2957 = vsub.f32 %v2955, %v2956
    %v2958 = vand.u32 %v2957, 4294901760
    %2959 = vmatpush1.msra.mxu0 %v2958
    %2960 = vmatprep.subr.mxu0 0.0
    %v2961 = vand.u32 %v870, 4294901760
    %v2962 = vsub.f32 %v870, %v2961
    %v2963 = vand.u32 %v2962, 4294901760
    %v2964 = vsub.f32 %v2962, %v2963
    %v2965 = vand.u32 %v2964, 4294901760
    %2966 = vmatpush1.msra.mxu0 %v2965
    %2967 = vmatprep.subr.mxu0 0.0
    %v2968 = vand.u32 %v871, 4294901760
    %v2969 = vsub.f32 %v871, %v2968
    %v2970 = vand.u32 %v2969, 4294901760
    %v2971 = vsub.f32 %v2969, %v2970
    %v2972 = vand.u32 %v2971, 4294901760
    %2973 = vmatpush1.msra.mxu0 %v2972
    %2974 = vmatprep.subr.mxu0 0.0
    %v2975 = vand.u32 %v872, 4294901760
    %v2976 = vsub.f32 %v872, %v2975
    %v2977 = vand.u32 %v2976, 4294901760
    %v2978 = vsub.f32 %v2976, %v2977
    %v2979 = vand.u32 %v2978, 4294901760
    %2980 = vmatpush1.msra.mxu0 %v2979
    %2981 = vmatprep.subr.mxu0 0.0
    %v2982 = vand.u32 %v873, 4294901760
    %v2983 = vsub.f32 %v873, %v2982
    %v2984 = vand.u32 %v2983, 4294901760
    %v2985 = vsub.f32 %v2983, %v2984
    %v2986 = vand.u32 %v2985, 4294901760
    %2987 = vmatpush1.msra.mxu0 %v2986
    %2988 = vmatprep.subr.mxu0 0.0
    %v2989 = vand.u32 %v874, 4294901760
    %v2990 = vsub.f32 %v874, %v2989
    %v2991 = vand.u32 %v2990, 4294901760
    %v2992 = vsub.f32 %v2990, %v2991
    %v2993 = vand.u32 %v2992, 4294901760
    %2994 = vmatpush1.msra.mxu0 %v2993
    %2995 = vmatprep.subr.mxu0 0.0
    %v2996 = vand.u32 %v875, 4294901760
    %v2997 = vsub.f32 %v875, %v2996
    %v2998 = vand.u32 %v2997, 4294901760
    %v2999 = vsub.f32 %v2997, %v2998
    %v3000 = vand.u32 %v2999, 4294901760
    %3001 = vmatpush1.msra.mxu0 %v3000
    %3002 = vmatprep.subr.mxu0 0.0
    %v3003 = vand.u32 %v876, 4294901760
    %v3004 = vsub.f32 %v876, %v3003
    %v3005 = vand.u32 %v3004, 4294901760
    %v3006 = vsub.f32 %v3004, %v3005
    %v3007 = vand.u32 %v3006, 4294901760
    %3008 = vmatpush1.msra.mxu0 %v3007
    %3009 = vmatprep.subr.mxu0 0.0
    %v3010 = vand.u32 %v877, 4294901760
    %v3011 = vsub.f32 %v877, %v3010
    %v3012 = vand.u32 %v3011, 4294901760
    %v3013 = vsub.f32 %v3011, %v3012
    %v3014 = vand.u32 %v3013, 4294901760
    %3015 = vmatpush1.msra.mxu0 %v3014
    %3016 = vmatprep.subr.mxu0 0.0
    %3017 = vmatpush1.msra.mxu0 0.0
    %3018 = vmatprep.subr.mxu0 0.0
    %3019 = vmatpush1.msra.mxu0 0.0
    %3020 = vmatprep.subr.mxu0 0.0
    %3021 = vmatpush1.msra.mxu0 0.0
    %3022 = vmatprep.subr.mxu0 0.0
    %3023 = vmatpush1.msra.mxu0 0.0
    %3024 = vmatprep.subr.mxu0 0.0
    %3025 = vmatpush1.msra.mxu0 0.0
    %3026 = vmatprep.subr.mxu0 0.0
    %3027 = vmatpush1.msra.mxu0 0.0
    %3028 = vmatprep.subr.mxu0 0.0
    %3029 = vmatpush1.msra.mxu0 0.0
    %3030 = vmatprep.subr.mxu0 0.0
    %3031 = vmatpush1.msra.mxu0 0.0
    %3032 = vmatprep.subr.mxu0 0.0
    %3033 = vmatpush1.msra.mxu0 0.0
    %3034 = vmatprep.subr.mxu0 0.0
    %3035 = vmatpush1.msra.mxu0 0.0
    %3036 = vmatprep.subr.mxu0 0.0
    %3037 = vmatpush1.msra.mxu0 0.0
    %3038 = vmatprep.subr.mxu0 0.0
    %3039 = vmatpush1.msra.mxu0 0.0
    %3040 = vmatprep.subr.mxu0 0.0
    %3041 = vmatpush1.msra.mxu0 0.0
    %3042 = vmatprep.subr.mxu0 0.0
    %3043 = vmatpush1.msra.mxu0 0.0
    %3044 = vmatprep.subr.mxu0 0.0
    %3045 = vmatpush1.msra.mxu0 0.0
    %3046 = vmatprep.subr.mxu0 0.0
    %3047 = vmatpush1.msra.mxu0 0.0
    %3048 = vmatprep.mubr.f32.mxu0 0.0
    %v3049 = vand.u32 %v2811, 4294901760
    %3050 = vmatmul.mubr.f32.gmra.mrb[0].mxu0 %v3049
    %v3051 = vpop.f32.mrb[0].mxu0
    %v3052 = vadd.f32 %v2901, %v3051
    %v3053 = vpop.f32.mrb[0].mxu0
    %3054 = vdwg.mxu0
    %3055 = vmatprep.subr.mxu0 0.0
    %v3056 = vand.u32 %v862, 4294901760
    %v3057 = vsub.f32 %v862, %v3056
    %3058 = vmatpush1.msra.mxu0 %v3057
    %3059 = vmatprep.subr.mxu0 0.0
    %v3060 = vand.u32 %v863, 4294901760
    %v3061 = vsub.f32 %v863, %v3060
    %3062 = vmatpush1.msra.mxu0 %v3061
    %3063 = vmatprep.subr.mxu0 0.0
    %v3064 = vand.u32 %v864, 4294901760
    %v3065 = vsub.f32 %v864, %v3064
    %3066 = vmatpush1.msra.mxu0 %v3065
    %3067 = vmatprep.subr.mxu0 0.0
    %v3068 = vand.u32 %v865, 4294901760
    %v3069 = vsub.f32 %v865, %v3068
    %3070 = vmatpush1.msra.mxu0 %v3069
    %3071 = vmatprep.subr.mxu0 0.0
    %v3072 = vand.u32 %v866, 4294901760
    %v3073 = vsub.f32 %v866, %v3072
    %3074 = vmatpush1.msra.mxu0 %v3073
    %3075 = vmatprep.subr.mxu0 0.0
    %v3076 = vand.u32 %v867, 4294901760
    %v3077 = vsub.f32 %v867, %v3076
    %3078 = vmatpush1.msra.mxu0 %v3077
    %3079 = vmatprep.subr.mxu0 0.0
    %v3080 = vand.u32 %v868, 4294901760
    %v3081 = vsub.f32 %v868, %v3080
    %3082 = vmatpush1.msra.mxu0 %v3081
    %3083 = vmatprep.subr.mxu0 0.0
    %v3084 = vand.u32 %v869, 4294901760
    %v3085 = vsub.f32 %v869, %v3084
    %3086 = vmatpush1.msra.mxu0 %v3085
    %3087 = vmatprep.subr.mxu0 0.0
    %v3088 = vand.u32 %v870, 4294901760
    %v3089 = vsub.f32 %v870, %v3088
    %3090 = vmatpush1.msra.mxu0 %v3089
    %3091 = vmatprep.subr.mxu0 0.0
    %v3092 = vand.u32 %v871, 4294901760
    %v3093 = vsub.f32 %v871, %v3092
    %3094 = vmatpush1.msra.mxu0 %v3093
    %3095 = vmatprep.subr.mxu0 0.0
    %v3096 = vand.u32 %v872, 4294901760
    %v3097 = vsub.f32 %v872, %v3096
    %3098 = vmatpush1.msra.mxu0 %v3097
    %3099 = vmatprep.subr.mxu0 0.0
    %v3100 = vand.u32 %v873, 4294901760
    %v3101 = vsub.f32 %v873, %v3100
    %3102 = vmatpush1.msra.mxu0 %v3101
    %3103 = vmatprep.subr.mxu0 0.0
    %v3104 = vand.u32 %v874, 4294901760
    %v3105 = vsub.f32 %v874, %v3104
    %3106 = vmatpush1.msra.mxu0 %v3105
    %3107 = vmatprep.subr.mxu0 0.0
    %v3108 = vand.u32 %v875, 4294901760
    %v3109 = vsub.f32 %v875, %v3108
    %3110 = vmatpush1.msra.mxu0 %v3109
    %3111 = vmatprep.subr.mxu0 0.0
    %v3112 = vand.u32 %v876, 4294901760
    %v3113 = vsub.f32 %v876, %v3112
    %3114 = vmatpush1.msra.mxu0 %v3113
    %3115 = vmatprep.subr.mxu0 0.0
    %v3116 = vand.u32 %v877, 4294901760
    %v3117 = vsub.f32 %v877, %v3116
    %3118 = vmatpush1.msra.mxu0 %v3117
    %3119 = vmatprep.subr.mxu0 0.0
    %3120 = vmatpush1.msra.mxu0 0.0
    %3121 = vmatprep.subr.mxu0 0.0
    %3122 = vmatpush1.msra.mxu0 0.0
    %3123 = vmatprep.subr.mxu0 0.0
    %3124 = vmatpush1.msra.mxu0 0.0
    %3125 = vmatprep.subr.mxu0 0.0
    %3126 = vmatpush1.msra.mxu0 0.0
    %3127 = vmatprep.subr.mxu0 0.0
    %3128 = vmatpush1.msra.mxu0 0.0
    %3129 = vmatprep.subr.mxu0 0.0
    %3130 = vmatpush1.msra.mxu0 0.0
    %3131 = vmatprep.subr.mxu0 0.0
    %3132 = vmatpush1.msra.mxu0 0.0
    %3133 = vmatprep.subr.mxu0 0.0
    %3134 = vmatpush1.msra.mxu0 0.0
    %3135 = vmatprep.subr.mxu0 0.0
    %3136 = vmatpush1.msra.mxu0 0.0
    %3137 = vmatprep.subr.mxu0 0.0
    %3138 = vmatpush1.msra.mxu0 0.0
    %3139 = vmatprep.subr.mxu0 0.0
    %3140 = vmatpush1.msra.mxu0 0.0
    %3141 = vmatprep.subr.mxu0 0.0
    %3142 = vmatpush1.msra.mxu0 0.0
    %3143 = vmatprep.subr.mxu0 0.0
    %3144 = vmatpush1.msra.mxu0 0.0
    %3145 = vmatprep.subr.mxu0 0.0
    %3146 = vmatpush1.msra.mxu0 0.0
    %3147 = vmatprep.subr.mxu0 0.0
    %3148 = vmatpush1.msra.mxu0 0.0
    %3149 = vmatprep.subr.mxu0 0.0
    %3150 = vmatpush1.msra.mxu0 0.0
    %3151 = vmatprep.mubr.f32.mxu0 0.0
    %v3152 = vand.u32 %v2811, 4294901760
    %v3153 = vsub.f32 %v2811, %v3152
    %3154 = vmatmul.mubr.f32.gmra.mrb[0].mxu0 %v3153
    %v3155 = vpop.f32.mrb[0].mxu0
    %v3156 = vadd.f32 %v3052, %v3155
    %v3157 = vpop.f32.mrb[0].mxu0
    %3158 = vdwg.mxu0
    %3159 = vmatprep.subr.mxu0 0.0
    %v3160 = vand.u32 %v862, 4294901760
    %3161 = vmatpush1.msra.mxu0 %v3160
    %3162 = vmatprep.subr.mxu0 0.0
    %v3163 = vand.u32 %v863, 4294901760
    %3164 = vmatpush1.msra.mxu0 %v3163
    %3165 = vmatprep.subr.mxu0 0.0
    %v3166 = vand.u32 %v864, 4294901760
    %3167 = vmatpush1.msra.mxu0 %v3166
    %3168 = vmatprep.subr.mxu0 0.0
    %v3169 = vand.u32 %v865, 4294901760
    %3170 = vmatpush1.msra.mxu0 %v3169
    %3171 = vmatprep.subr.mxu0 0.0
    %v3172 = vand.u32 %v866, 4294901760
    %3173 = vmatpush1.msra.mxu0 %v3172
    %3174 = vmatprep.subr.mxu0 0.0
    %v3175 = vand.u32 %v867, 4294901760
    %3176 = vmatpush1.msra.mxu0 %v3175
    %3177 = vmatprep.subr.mxu0 0.0
    %v3178 = vand.u32 %v868, 4294901760
    %3179 = vmatpush1.msra.mxu0 %v3178
    %3180 = vmatprep.subr.mxu0 0.0
    %v3181 = vand.u32 %v869, 4294901760
    %3182 = vmatpush1.msra.mxu0 %v3181
    %3183 = vmatprep.subr.mxu0 0.0
    %v3184 = vand.u32 %v870, 4294901760
    %3185 = vmatpush1.msra.mxu0 %v3184
    %3186 = vmatprep.subr.mxu0 0.0
    %v3187 = vand.u32 %v871, 4294901760
    %3188 = vmatpush1.msra.mxu0 %v3187
    %3189 = vmatprep.subr.mxu0 0.0
    %v3190 = vand.u32 %v872, 4294901760
    %3191 = vmatpush1.msra.mxu0 %v3190
    %3192 = vmatprep.subr.mxu0 0.0
    %v3193 = vand.u32 %v873, 4294901760
    %3194 = vmatpush1.msra.mxu0 %v3193
    %3195 = vmatprep.subr.mxu0 0.0
    %v3196 = vand.u32 %v874, 4294901760
    %3197 = vmatpush1.msra.mxu0 %v3196
    %3198 = vmatprep.subr.mxu0 0.0
    %v3199 = vand.u32 %v875, 4294901760
    %3200 = vmatpush1.msra.mxu0 %v3199
    %3201 = vmatprep.subr.mxu0 0.0
    %v3202 = vand.u32 %v876, 4294901760
    %3203 = vmatpush1.msra.mxu0 %v3202
    %3204 = vmatprep.subr.mxu0 0.0
    %v3205 = vand.u32 %v877, 4294901760
    %3206 = vmatpush1.msra.mxu0 %v3205
    %3207 = vmatprep.subr.mxu0 0.0
    %3208 = vmatpush1.msra.mxu0 0.0
    %3209 = vmatprep.subr.mxu0 0.0
    %3210 = vmatpush1.msra.mxu0 0.0
    %3211 = vmatprep.subr.mxu0 0.0
    %3212 = vmatpush1.msra.mxu0 0.0
    %3213 = vmatprep.subr.mxu0 0.0
    %3214 = vmatpush1.msra.mxu0 0.0
    %3215 = vmatprep.subr.mxu0 0.0
    %3216 = vmatpush1.msra.mxu0 0.0
    %3217 = vmatprep.subr.mxu0 0.0
    %3218 = vmatpush1.msra.mxu0 0.0
    %3219 = vmatprep.subr.mxu0 0.0
    %3220 = vmatpush1.msra.mxu0 0.0
    %3221 = vmatprep.subr.mxu0 0.0
    %3222 = vmatpush1.msra.mxu0 0.0
    %3223 = vmatprep.subr.mxu0 0.0
    %3224 = vmatpush1.msra.mxu0 0.0
    %3225 = vmatprep.subr.mxu0 0.0
    %3226 = vmatpush1.msra.mxu0 0.0
    %3227 = vmatprep.subr.mxu0 0.0
    %3228 = vmatpush1.msra.mxu0 0.0
    %3229 = vmatprep.subr.mxu0 0.0
    %3230 = vmatpush1.msra.mxu0 0.0
    %3231 = vmatprep.subr.mxu0 0.0
    %3232 = vmatpush1.msra.mxu0 0.0
    %3233 = vmatprep.subr.mxu0 0.0
    %3234 = vmatpush1.msra.mxu0 0.0
    %3235 = vmatprep.subr.mxu0 0.0
    %3236 = vmatpush1.msra.mxu0 0.0
    %3237 = vmatprep.subr.mxu0 0.0
    %3238 = vmatpush1.msra.mxu0 0.0
    %3239 = vmatprep.mubr.f32.mxu0 0.0
    %v3240 = vand.u32 %v2811, 4294901760
    %v3241 = vsub.f32 %v2811, %v3240
    %v3242 = vand.u32 %v3241, 4294901760
    %3243 = vmatmul.mubr.f32.gmra.mrb[0].mxu0 %v3242
    %v3244 = vpop.f32.mrb[0].mxu0
    %v3245 = vadd.f32 %v3156, %v3244
    %v3246 = vpop.f32.mrb[0].mxu0
    %3247 = vdwg.mxu0
    %3248 = vmatprep.subr.mxu0 0.0
    %v3249 = vand.u32 %v862, 4294901760
    %v3250 = vsub.f32 %v862, %v3249
    %v3251 = vand.u32 %v3250, 4294901760
    %3252 = vmatpush1.msra.mxu0 %v3251
    %3253 = vmatprep.subr.mxu0 0.0
    %v3254 = vand.u32 %v863, 4294901760
    %v3255 = vsub.f32 %v863, %v3254
    %v3256 = vand.u32 %v3255, 4294901760
    %3257 = vmatpush1.msra.mxu0 %v3256
    %3258 = vmatprep.subr.mxu0 0.0
    %v3259 = vand.u32 %v864, 4294901760
    %v3260 = vsub.f32 %v864, %v3259
    %v3261 = vand.u32 %v3260, 4294901760
    %3262 = vmatpush1.msra.mxu0 %v3261
    %3263 = vmatprep.subr.mxu0 0.0
    %v3264 = vand.u32 %v865, 4294901760
    %v3265 = vsub.f32 %v865, %v3264
    %v3266 = vand.u32 %v3265, 4294901760
    %3267 = vmatpush1.msra.mxu0 %v3266
    %3268 = vmatprep.subr.mxu0 0.0
    %v3269 = vand.u32 %v866, 4294901760
    %v3270 = vsub.f32 %v866, %v3269
    %v3271 = vand.u32 %v3270, 4294901760
    %3272 = vmatpush1.msra.mxu0 %v3271
    %3273 = vmatprep.subr.mxu0 0.0
    %v3274 = vand.u32 %v867, 4294901760
    %v3275 = vsub.f32 %v867, %v3274
    %v3276 = vand.u32 %v3275, 4294901760
    %3277 = vmatpush1.msra.mxu0 %v3276
    %3278 = vmatprep.subr.mxu0 0.0
    %v3279 = vand.u32 %v868, 4294901760
    %v3280 = vsub.f32 %v868, %v3279
    %v3281 = vand.u32 %v3280, 4294901760
    %3282 = vmatpush1.msra.mxu0 %v3281
    %3283 = vmatprep.subr.mxu0 0.0
    %v3284 = vand.u32 %v869, 4294901760
    %v3285 = vsub.f32 %v869, %v3284
    %v3286 = vand.u32 %v3285, 4294901760
    %3287 = vmatpush1.msra.mxu0 %v3286
    %3288 = vmatprep.subr.mxu0 0.0
    %v3289 = vand.u32 %v870, 4294901760
    %v3290 = vsub.f32 %v870, %v3289
    %v3291 = vand.u32 %v3290, 4294901760
    %3292 = vmatpush1.msra.mxu0 %v3291
    %3293 = vmatprep.subr.mxu0 0.0
    %v3294 = vand.u32 %v871, 4294901760
    %v3295 = vsub.f32 %v871, %v3294
    %v3296 = vand.u32 %v3295, 4294901760
    %3297 = vmatpush1.msra.mxu0 %v3296
    %3298 = vmatprep.subr.mxu0 0.0
    %v3299 = vand.u32 %v872, 4294901760
    %v3300 = vsub.f32 %v872, %v3299
    %v3301 = vand.u32 %v3300, 4294901760
    %3302 = vmatpush1.msra.mxu0 %v3301
    %3303 = vmatprep.subr.mxu0 0.0
    %v3304 = vand.u32 %v873, 4294901760
    %v3305 = vsub.f32 %v873, %v3304
    %v3306 = vand.u32 %v3305, 4294901760
    %3307 = vmatpush1.msra.mxu0 %v3306
    %3308 = vmatprep.subr.mxu0 0.0
    %v3309 = vand.u32 %v874, 4294901760
    %v3310 = vsub.f32 %v874, %v3309
    %v3311 = vand.u32 %v3310, 4294901760
    %3312 = vmatpush1.msra.mxu0 %v3311
    %3313 = vmatprep.subr.mxu0 0.0
    %v3314 = vand.u32 %v875, 4294901760
    %v3315 = vsub.f32 %v875, %v3314
    %v3316 = vand.u32 %v3315, 4294901760
    %3317 = vmatpush1.msra.mxu0 %v3316
    %3318 = vmatprep.subr.mxu0 0.0
    %v3319 = vand.u32 %v876, 4294901760
    %v3320 = vsub.f32 %v876, %v3319
    %v3321 = vand.u32 %v3320, 4294901760
    %3322 = vmatpush1.msra.mxu0 %v3321
    %3323 = vmatprep.subr.mxu0 0.0
    %v3324 = vand.u32 %v877, 4294901760
    %v3325 = vsub.f32 %v877, %v3324
    %v3326 = vand.u32 %v3325, 4294901760
    %3327 = vmatpush1.msra.mxu0 %v3326
    %3328 = vmatprep.subr.mxu0 0.0
    %3329 = vmatpush1.msra.mxu0 0.0
    %3330 = vmatprep.subr.mxu0 0.0
    %3331 = vmatpush1.msra.mxu0 0.0
    %3332 = vmatprep.subr.mxu0 0.0
    %3333 = vmatpush1.msra.mxu0 0.0
    %3334 = vmatprep.subr.mxu0 0.0
    %3335 = vmatpush1.msra.mxu0 0.0
    %3336 = vmatprep.subr.mxu0 0.0
    %3337 = vmatpush1.msra.mxu0 0.0
    %3338 = vmatprep.subr.mxu0 0.0
    %3339 = vmatpush1.msra.mxu0 0.0
    %3340 = vmatprep.subr.mxu0 0.0
    %3341 = vmatpush1.msra.mxu0 0.0
    %3342 = vmatprep.subr.mxu0 0.0
    %3343 = vmatpush1.msra.mxu0 0.0
    %3344 = vmatprep.subr.mxu0 0.0
    %3345 = vmatpush1.msra.mxu0 0.0
    %3346 = vmatprep.subr.mxu0 0.0
    %3347 = vmatpush1.msra.mxu0 0.0
    %3348 = vmatprep.subr.mxu0 0.0
    %3349 = vmatpush1.msra.mxu0 0.0
    %3350 = vmatprep.subr.mxu0 0.0
    %3351 = vmatpush1.msra.mxu0 0.0
    %3352 = vmatprep.subr.mxu0 0.0
    %3353 = vmatpush1.msra.mxu0 0.0
    %3354 = vmatprep.subr.mxu0 0.0
    %3355 = vmatpush1.msra.mxu0 0.0
    %3356 = vmatprep.subr.mxu0 0.0
    %3357 = vmatpush1.msra.mxu0 0.0
    %3358 = vmatprep.subr.mxu0 0.0
    %3359 = vmatpush1.msra.mxu0 0.0
    %3360 = vmatprep.mubr.f32.mxu0 0.0
    %v3361 = vand.u32 %v2811, 4294901760
    %3362 = vmatmul.mubr.f32.gmra.mrb[0].mxu0 %v3361
    %v3363 = vpop.f32.mrb[0].mxu0
    %v3364 = vadd.f32 %v3245, %v3363
    %v3365 = vpop.f32.mrb[0].mxu0
    %3366 = vdwg.mxu0
    %3367 = vmatprep.subr.mxu0 0.0
    %v3368 = vand.u32 %v862, 4294901760
    %3369 = vmatpush1.msra.mxu0 %v3368
    %3370 = vmatprep.subr.mxu0 0.0
    %v3371 = vand.u32 %v863, 4294901760
    %3372 = vmatpush1.msra.mxu0 %v3371
    %3373 = vmatprep.subr.mxu0 0.0
    %v3374 = vand.u32 %v864, 4294901760
    %3375 = vmatpush1.msra.mxu0 %v3374
    %3376 = vmatprep.subr.mxu0 0.0
    %v3377 = vand.u32 %v865, 4294901760
    %3378 = vmatpush1.msra.mxu0 %v3377
    %3379 = vmatprep.subr.mxu0 0.0
    %v3380 = vand.u32 %v866, 4294901760
    %3381 = vmatpush1.msra.mxu0 %v3380
    %3382 = vmatprep.subr.mxu0 0.0
    %v3383 = vand.u32 %v867, 4294901760
    %3384 = vmatpush1.msra.mxu0 %v3383
    %3385 = vmatprep.subr.mxu0 0.0
    %v3386 = vand.u32 %v868, 4294901760
    %3387 = vmatpush1.msra.mxu0 %v3386
    %3388 = vmatprep.subr.mxu0 0.0
    %v3389 = vand.u32 %v869, 4294901760
    %3390 = vmatpush1.msra.mxu0 %v3389
    %3391 = vmatprep.subr.mxu0 0.0
    %v3392 = vand.u32 %v870, 4294901760
    %3393 = vmatpush1.msra.mxu0 %v3392
    %3394 = vmatprep.subr.mxu0 0.0
    %v3395 = vand.u32 %v871, 4294901760
    %3396 = vmatpush1.msra.mxu0 %v3395
    %3397 = vmatprep.subr.mxu0 0.0
    %v3398 = vand.u32 %v872, 4294901760
    %3399 = vmatpush1.msra.mxu0 %v3398
    %3400 = vmatprep.subr.mxu0 0.0
    %v3401 = vand.u32 %v873, 4294901760
    %3402 = vmatpush1.msra.mxu0 %v3401
    %3403 = vmatprep.subr.mxu0 0.0
    %v3404 = vand.u32 %v874, 4294901760
    %3405 = vmatpush1.msra.mxu0 %v3404
    %3406 = vmatprep.subr.mxu0 0.0
    %v3407 = vand.u32 %v875, 4294901760
    %3408 = vmatpush1.msra.mxu0 %v3407
    %3409 = vmatprep.subr.mxu0 0.0
    %v3410 = vand.u32 %v876, 4294901760
    %3411 = vmatpush1.msra.mxu0 %v3410
    %3412 = vmatprep.subr.mxu0 0.0
    %v3413 = vand.u32 %v877, 4294901760
    %3414 = vmatpush1.msra.mxu0 %v3413
    %3415 = vmatprep.subr.mxu0 0.0
    %3416 = vmatpush1.msra.mxu0 0.0
    %3417 = vmatprep.subr.mxu0 0.0
    %3418 = vmatpush1.msra.mxu0 0.0
    %3419 = vmatprep.subr.mxu0 0.0
    %3420 = vmatpush1.msra.mxu0 0.0
    %3421 = vmatprep.subr.mxu0 0.0
    %3422 = vmatpush1.msra.mxu0 0.0
    %3423 = vmatprep.subr.mxu0 0.0
    %3424 = vmatpush1.msra.mxu0 0.0
    %3425 = vmatprep.subr.mxu0 0.0
    %3426 = vmatpush1.msra.mxu0 0.0
    %3427 = vmatprep.subr.mxu0 0.0
    %3428 = vmatpush1.msra.mxu0 0.0
    %3429 = vmatprep.subr.mxu0 0.0
    %3430 = vmatpush1.msra.mxu0 0.0
    %3431 = vmatprep.subr.mxu0 0.0
    %3432 = vmatpush1.msra.mxu0 0.0
    %3433 = vmatprep.subr.mxu0 0.0
    %3434 = vmatpush1.msra.mxu0 0.0
    %3435 = vmatprep.subr.mxu0 0.0
    %3436 = vmatpush1.msra.mxu0 0.0
    %3437 = vmatprep.subr.mxu0 0.0
    %3438 = vmatpush1.msra.mxu0 0.0
    %3439 = vmatprep.subr.mxu0 0.0
    %3440 = vmatpush1.msra.mxu0 0.0
    %3441 = vmatprep.subr.mxu0 0.0
    %3442 = vmatpush1.msra.mxu0 0.0
    %3443 = vmatprep.subr.mxu0 0.0
    %3444 = vmatpush1.msra.mxu0 0.0
    %3445 = vmatprep.subr.mxu0 0.0
    %3446 = vmatpush1.msra.mxu0 0.0
    %3447 = vmatprep.mubr.f32.mxu0 0.0
    %v3448 = vand.u32 %v2811, 4294901760
    %3449 = vmatmul.mubr.f32.gmra.mrb[0].mxu0 %v3448
    %v3450 = vpop.f32.mrb[0].mxu0
    %v3451 = vadd.f32 %v3364, %v3450
    %v3452 = vpop.f32.mrb[0].mxu0
    %3453 = vdwg.mxu0
    %v3454 = vadd.f32 %v2812, %v3451
    %v3455 = vtanh.pop %v3454
    %v3456 = vld [vmem:[#allocation2 + $0x28] sm:$0xff]
    %3457 = vmatprep.subr.mxu0 0.0
    %v3458 = vand.u32 %v862, 4294901760
    %3459 = vmatpush1.msra.mxu0 %v3458
    %3460 = vmatprep.subr.mxu0 0.0
    %v3461 = vand.u32 %v863, 4294901760
    %3462 = vmatpush1.msra.mxu0 %v3461
    %3463 = vmatprep.subr.mxu0 0.0
    %v3464 = vand.u32 %v864, 4294901760
    %3465 = vmatpush1.msra.mxu0 %v3464
    %3466 = vmatprep.subr.mxu0 0.0
    %v3467 = vand.u32 %v865, 4294901760
    %3468 = vmatpush1.msra.mxu0 %v3467
    %3469 = vmatprep.subr.mxu0 0.0
    %v3470 = vand.u32 %v866, 4294901760
    %3471 = vmatpush1.msra.mxu0 %v3470
    %3472 = vmatprep.subr.mxu0 0.0
    %v3473 = vand.u32 %v867, 4294901760
    %3474 = vmatpush1.msra.mxu0 %v3473
    %3475 = vmatprep.subr.mxu0 0.0
    %v3476 = vand.u32 %v868, 4294901760
    %3477 = vmatpush1.msra.mxu0 %v3476
    %3478 = vmatprep.subr.mxu0 0.0
    %v3479 = vand.u32 %v869, 4294901760
    %3480 = vmatpush1.msra.mxu0 %v3479
    %3481 = vmatprep.subr.mxu0 0.0
    %v3482 = vand.u32 %v870, 4294901760
    %3483 = vmatpush1.msra.mxu0 %v3482
    %3484 = vmatprep.subr.mxu0 0.0
    %v3485 = vand.u32 %v871, 4294901760
    %3486 = vmatpush1.msra.mxu0 %v3485
    %3487 = vmatprep.subr.mxu0 0.0
    %v3488 = vand.u32 %v872, 4294901760
    %3489 = vmatpush1.msra.mxu0 %v3488
    %3490 = vmatprep.subr.mxu0 0.0
    %v3491 = vand.u32 %v873, 4294901760
    %3492 = vmatpush1.msra.mxu0 %v3491
    %3493 = vmatprep.subr.mxu0 0.0
    %v3494 = vand.u32 %v874, 4294901760
    %3495 = vmatpush1.msra.mxu0 %v3494
    %3496 = vmatprep.subr.mxu0 0.0
    %v3497 = vand.u32 %v875, 4294901760
    %3498 = vmatpush1.msra.mxu0 %v3497
    %3499 = vmatprep.subr.mxu0 0.0
    %v3500 = vand.u32 %v876, 4294901760
    %3501 = vmatpush1.msra.mxu0 %v3500
    %3502 = vmatprep.subr.mxu0 0.0
    %v3503 = vand.u32 %v877, 4294901760
    %3504 = vmatpush1.msra.mxu0 %v3503
    %3505 = vmatprep.subr.mxu0 0.0
    %3506 = vmatpush1.msra.mxu0 0.0
    %3507 = vmatprep.subr.mxu0 0.0
    %3508 = vmatpush1.msra.mxu0 0.0
    %3509 = vmatprep.subr.mxu0 0.0
    %3510 = vmatpush1.msra.mxu0 0.0
    %3511 = vmatprep.subr.mxu0 0.0
    %3512 = vmatpush1.msra.mxu0 0.0
    %3513 = vmatprep.subr.mxu0 0.0
    %3514 = vmatpush1.msra.mxu0 0.0
    %3515 = vmatprep.subr.mxu0 0.0
    %3516 = vmatpush1.msra.mxu0 0.0
    %3517 = vmatprep.subr.mxu0 0.0
    %3518 = vmatpush1.msra.mxu0 0.0
    %3519 = vmatprep.subr.mxu0 0.0
    %3520 = vmatpush1.msra.mxu0 0.0
    %3521 = vmatprep.subr.mxu0 0.0
    %3522 = vmatpush1.msra.mxu0 0.0
    %3523 = vmatprep.subr.mxu0 0.0
    %3524 = vmatpush1.msra.mxu0 0.0
    %3525 = vmatprep.subr.mxu0 0.0
    %3526 = vmatpush1.msra.mxu0 0.0
    %3527 = vmatprep.subr.mxu0 0.0
    %3528 = vmatpush1.msra.mxu0 0.0
    %3529 = vmatprep.subr.mxu0 0.0
    %3530 = vmatpush1.msra.mxu0 0.0
    %3531 = vmatprep.subr.mxu0 0.0
    %3532 = vmatpush1.msra.mxu0 0.0
    %3533 = vmatprep.subr.mxu0 0.0
    %3534 = vmatpush1.msra.mxu0 0.0
    %3535 = vmatprep.subr.mxu0 0.0
    %3536 = vmatpush1.msra.mxu0 0.0
    %3537 = vmatprep.mubr.f32.mxu0 0.0
    %v3538 = vand.u32 %v3455, 4294901760
    %v3539 = vsub.f32 %v3455, %v3538
    %v3540 = vand.u32 %v3539, 4294901760
    %v3541 = vsub.f32 %v3539, %v3540
    %v3542 = vand.u32 %v3541, 4294901760
    %3543 = vmatmul.mubr.f32.gmra.mrb[0].mxu0 %v3542
    %v3544 = vpop.f32.mrb[0].mxu0
    %v3545 = vadd.f32 0.0, %v3544
    %v3546 = vpop.f32.mrb[0].mxu0
    %3547 = vdwg.mxu0
    %3548 = vmatprep.subr.mxu0 0.0
    %v3549 = vand.u32 %v862, 4294901760
    %v3550 = vsub.f32 %v862, %v3549
    %v3551 = vand.u32 %v3550, 4294901760
    %v3552 = vsub.f32 %v3550, %v3551
    %v3553 = vand.u32 %v3552, 4294901760
    %3554 = vmatpush1.msra.mxu0 %v3553
    %3555 = vmatprep.subr.mxu0 0.0
    %v3556 = vand.u32 %v863, 4294901760
    %v3557 = vsub.f32 %v863, %v3556
    %v3558 = vand.u32 %v3557, 4294901760
    %v3559 = vsub.f32 %v3557, %v3558
    %v3560 = vand.u32 %v3559, 4294901760
    %3561 = vmatpush1.msra.mxu0 %v3560
    %3562 = vmatprep.subr.mxu0 0.0
    %v3563 = vand.u32 %v864, 4294901760
    %v3564 = vsub.f32 %v864, %v3563
    %v3565 = vand.u32 %v3564, 4294901760
    %v3566 = vsub.f32 %v3564, %v3565
    %v3567 = vand.u32 %v3566, 4294901760
    %3568 = vmatpush1.msra.mxu0 %v3567
    %3569 = vmatprep.subr.mxu0 0.0
    %v3570 = vand.u32 %v865, 4294901760
    %v3571 = vsub.f32 %v865, %v3570
    %v3572 = vand.u32 %v3571, 4294901760
    %v3573 = vsub.f32 %v3571, %v3572
    %v3574 = vand.u32 %v3573, 4294901760
    %3575 = vmatpush1.msra.mxu0 %v3574
    %3576 = vmatprep.subr.mxu0 0.0
    %v3577 = vand.u32 %v866, 4294901760
    %v3578 = vsub.f32 %v866, %v3577
    %v3579 = vand.u32 %v3578, 4294901760
    %v3580 = vsub.f32 %v3578, %v3579
    %v3581 = vand.u32 %v3580, 4294901760
    %3582 = vmatpush1.msra.mxu0 %v3581
    %3583 = vmatprep.subr.mxu0 0.0
    %v3584 = vand.u32 %v867, 4294901760
    %v3585 = vsub.f32 %v867, %v3584
    %v3586 = vand.u32 %v3585, 4294901760
    %v3587 = vsub.f32 %v3585, %v3586
    %v3588 = vand.u32 %v3587, 4294901760
    %3589 = vmatpush1.msra.mxu0 %v3588
    %3590 = vmatprep.subr.mxu0 0.0
    %v3591 = vand.u32 %v868, 4294901760
    %v3592 = vsub.f32 %v868, %v3591
    %v3593 = vand.u32 %v3592, 4294901760
    %v3594 = vsub.f32 %v3592, %v3593
    %v3595 = vand.u32 %v3594, 4294901760
    %3596 = vmatpush1.msra.mxu0 %v3595
    %3597 = vmatprep.subr.mxu0 0.0
    %v3598 = vand.u32 %v869, 4294901760
    %v3599 = vsub.f32 %v869, %v3598
    %v3600 = vand.u32 %v3599, 4294901760
    %v3601 = vsub.f32 %v3599, %v3600
    %v3602 = vand.u32 %v3601, 4294901760
    %3603 = vmatpush1.msra.mxu0 %v3602
    %3604 = vmatprep.subr.mxu0 0.0
    %v3605 = vand.u32 %v870, 4294901760
    %v3606 = vsub.f32 %v870, %v3605
    %v3607 = vand.u32 %v3606, 4294901760
    %v3608 = vsub.f32 %v3606, %v3607
    %v3609 = vand.u32 %v3608, 4294901760
    %3610 = vmatpush1.msra.mxu0 %v3609
    %3611 = vmatprep.subr.mxu0 0.0
    %v3612 = vand.u32 %v871, 4294901760
    %v3613 = vsub.f32 %v871, %v3612
    %v3614 = vand.u32 %v3613, 4294901760
    %v3615 = vsub.f32 %v3613, %v3614
    %v3616 = vand.u32 %v3615, 4294901760
    %3617 = vmatpush1.msra.mxu0 %v3616
    %3618 = vmatprep.subr.mxu0 0.0
    %v3619 = vand.u32 %v872, 4294901760
    %v3620 = vsub.f32 %v872, %v3619
    %v3621 = vand.u32 %v3620, 4294901760
    %v3622 = vsub.f32 %v3620, %v3621
    %v3623 = vand.u32 %v3622, 4294901760
    %3624 = vmatpush1.msra.mxu0 %v3623
    %3625 = vmatprep.subr.mxu0 0.0
    %v3626 = vand.u32 %v873, 4294901760
    %v3627 = vsub.f32 %v873, %v3626
    %v3628 = vand.u32 %v3627, 4294901760
    %v3629 = vsub.f32 %v3627, %v3628
    %v3630 = vand.u32 %v3629, 4294901760
    %3631 = vmatpush1.msra.mxu0 %v3630
    %3632 = vmatprep.subr.mxu0 0.0
    %v3633 = vand.u32 %v874, 4294901760
    %v3634 = vsub.f32 %v874, %v3633
    %v3635 = vand.u32 %v3634, 4294901760
    %v3636 = vsub.f32 %v3634, %v3635
    %v3637 = vand.u32 %v3636, 4294901760
    %3638 = vmatpush1.msra.mxu0 %v3637
    %3639 = vmatprep.subr.mxu0 0.0
    %v3640 = vand.u32 %v875, 4294901760
    %v3641 = vsub.f32 %v875, %v3640
    %v3642 = vand.u32 %v3641, 4294901760
    %v3643 = vsub.f32 %v3641, %v3642
    %v3644 = vand.u32 %v3643, 4294901760
    %3645 = vmatpush1.msra.mxu0 %v3644
    %3646 = vmatprep.subr.mxu0 0.0
    %v3647 = vand.u32 %v876, 4294901760
    %v3648 = vsub.f32 %v876, %v3647
    %v3649 = vand.u32 %v3648, 4294901760
    %v3650 = vsub.f32 %v3648, %v3649
    %v3651 = vand.u32 %v3650, 4294901760
    %3652 = vmatpush1.msra.mxu0 %v3651
    %3653 = vmatprep.subr.mxu0 0.0
    %v3654 = vand.u32 %v877, 4294901760
    %v3655 = vsub.f32 %v877, %v3654
    %v3656 = vand.u32 %v3655, 4294901760
    %v3657 = vsub.f32 %v3655, %v3656
    %v3658 = vand.u32 %v3657, 4294901760
    %3659 = vmatpush1.msra.mxu0 %v3658
    %3660 = vmatprep.subr.mxu0 0.0
    %3661 = vmatpush1.msra.mxu0 0.0
    %3662 = vmatprep.subr.mxu0 0.0
    %3663 = vmatpush1.msra.mxu0 0.0
    %3664 = vmatprep.subr.mxu0 0.0
    %3665 = vmatpush1.msra.mxu0 0.0
    %3666 = vmatprep.subr.mxu0 0.0
    %3667 = vmatpush1.msra.mxu0 0.0
    %3668 = vmatprep.subr.mxu0 0.0
    %3669 = vmatpush1.msra.mxu0 0.0
    %3670 = vmatprep.subr.mxu0 0.0
    %3671 = vmatpush1.msra.mxu0 0.0
    %3672 = vmatprep.subr.mxu0 0.0
    %3673 = vmatpush1.msra.mxu0 0.0
    %3674 = vmatprep.subr.mxu0 0.0
    %3675 = vmatpush1.msra.mxu0 0.0
    %3676 = vmatprep.subr.mxu0 0.0
    %3677 = vmatpush1.msra.mxu0 0.0
    %3678 = vmatprep.subr.mxu0 0.0
    %3679 = vmatpush1.msra.mxu0 0.0
    %3680 = vmatprep.subr.mxu0 0.0
    %3681 = vmatpush1.msra.mxu0 0.0
    %3682 = vmatprep.subr.mxu0 0.0
    %3683 = vmatpush1.msra.mxu0 0.0
    %3684 = vmatprep.subr.mxu0 0.0
    %3685 = vmatpush1.msra.mxu0 0.0
    %3686 = vmatprep.subr.mxu0 0.0
    %3687 = vmatpush1.msra.mxu0 0.0
    %3688 = vmatprep.subr.mxu0 0.0
    %3689 = vmatpush1.msra.mxu0 0.0
    %3690 = vmatprep.subr.mxu0 0.0
    %3691 = vmatpush1.msra.mxu0 0.0
    %3692 = vmatprep.mubr.f32.mxu0 0.0
    %v3693 = vand.u32 %v3455, 4294901760
    %3694 = vmatmul.mubr.f32.gmra.mrb[0].mxu0 %v3693
    %v3695 = vpop.f32.mrb[0].mxu0
    %v3696 = vadd.f32 %v3545, %v3695
    %v3697 = vpop.f32.mrb[0].mxu0
    %3698 = vdwg.mxu0
    %3699 = vmatprep.subr.mxu0 0.0
    %v3700 = vand.u32 %v862, 4294901760
    %v3701 = vsub.f32 %v862, %v3700
    %3702 = vmatpush1.msra.mxu0 %v3701
    %3703 = vmatprep.subr.mxu0 0.0
    %v3704 = vand.u32 %v863, 4294901760
    %v3705 = vsub.f32 %v863, %v3704
    %3706 = vmatpush1.msra.mxu0 %v3705
    %3707 = vmatprep.subr.mxu0 0.0
    %v3708 = vand.u32 %v864, 4294901760
    %v3709 = vsub.f32 %v864, %v3708
    %3710 = vmatpush1.msra.mxu0 %v3709
    %3711 = vmatprep.subr.mxu0 0.0
    %v3712 = vand.u32 %v865, 4294901760
    %v3713 = vsub.f32 %v865, %v3712
    %3714 = vmatpush1.msra.mxu0 %v3713
    %3715 = vmatprep.subr.mxu0 0.0
    %v3716 = vand.u32 %v866, 4294901760
    %v3717 = vsub.f32 %v866, %v3716
    %3718 = vmatpush1.msra.mxu0 %v3717
    %3719 = vmatprep.subr.mxu0 0.0
    %v3720 = vand.u32 %v867, 4294901760
    %v3721 = vsub.f32 %v867, %v3720
    %3722 = vmatpush1.msra.mxu0 %v3721
    %3723 = vmatprep.subr.mxu0 0.0
    %v3724 = vand.u32 %v868, 4294901760
    %v3725 = vsub.f32 %v868, %v3724
    %3726 = vmatpush1.msra.mxu0 %v3725
    %3727 = vmatprep.subr.mxu0 0.0
    %v3728 = vand.u32 %v869, 4294901760
    %v3729 = vsub.f32 %v869, %v3728
    %3730 = vmatpush1.msra.mxu0 %v3729
    %3731 = vmatprep.subr.mxu0 0.0
    %v3732 = vand.u32 %v870, 4294901760
    %v3733 = vsub.f32 %v870, %v3732
    %3734 = vmatpush1.msra.mxu0 %v3733
    %3735 = vmatprep.subr.mxu0 0.0
    %v3736 = vand.u32 %v871, 4294901760
    %v3737 = vsub.f32 %v871, %v3736
    %3738 = vmatpush1.msra.mxu0 %v3737
    %3739 = vmatprep.subr.mxu0 0.0
    %v3740 = vand.u32 %v872, 4294901760
    %v3741 = vsub.f32 %v872, %v3740
    %3742 = vmatpush1.msra.mxu0 %v3741
    %3743 = vmatprep.subr.mxu0 0.0
    %v3744 = vand.u32 %v873, 4294901760
    %v3745 = vsub.f32 %v873, %v3744
    %3746 = vmatpush1.msra.mxu0 %v3745
    %3747 = vmatprep.subr.mxu0 0.0
    %v3748 = vand.u32 %v874, 4294901760
    %v3749 = vsub.f32 %v874, %v3748
    %3750 = vmatpush1.msra.mxu0 %v3749
    %3751 = vmatprep.subr.mxu0 0.0
    %v3752 = vand.u32 %v875, 4294901760
    %v3753 = vsub.f32 %v875, %v3752
    %3754 = vmatpush1.msra.mxu0 %v3753
    %3755 = vmatprep.subr.mxu0 0.0
    %v3756 = vand.u32 %v876, 4294901760
    %v3757 = vsub.f32 %v876, %v3756
    %3758 = vmatpush1.msra.mxu0 %v3757
    %3759 = vmatprep.subr.mxu0 0.0
    %v3760 = vand.u32 %v877, 4294901760
    %v3761 = vsub.f32 %v877, %v3760
    %3762 = vmatpush1.msra.mxu0 %v3761
    %3763 = vmatprep.subr.mxu0 0.0
    %3764 = vmatpush1.msra.mxu0 0.0
    %3765 = vmatprep.subr.mxu0 0.0
    %3766 = vmatpush1.msra.mxu0 0.0
    %3767 = vmatprep.subr.mxu0 0.0
    %3768 = vmatpush1.msra.mxu0 0.0
    %3769 = vmatprep.subr.mxu0 0.0
    %3770 = vmatpush1.msra.mxu0 0.0
    %3771 = vmatprep.subr.mxu0 0.0
    %3772 = vmatpush1.msra.mxu0 0.0
    %3773 = vmatprep.subr.mxu0 0.0
    %3774 = vmatpush1.msra.mxu0 0.0
    %3775 = vmatprep.subr.mxu0 0.0
    %3776 = vmatpush1.msra.mxu0 0.0
    %3777 = vmatprep.subr.mxu0 0.0
    %3778 = vmatpush1.msra.mxu0 0.0
    %3779 = vmatprep.subr.mxu0 0.0
    %3780 = vmatpush1.msra.mxu0 0.0
    %3781 = vmatprep.subr.mxu0 0.0
    %3782 = vmatpush1.msra.mxu0 0.0
    %3783 = vmatprep.subr.mxu0 0.0
    %3784 = vmatpush1.msra.mxu0 0.0
    %3785 = vmatprep.subr.mxu0 0.0
    %3786 = vmatpush1.msra.mxu0 0.0
    %3787 = vmatprep.subr.mxu0 0.0
    %3788 = vmatpush1.msra.mxu0 0.0
    %3789 = vmatprep.subr.mxu0 0.0
    %3790 = vmatpush1.msra.mxu0 0.0
    %3791 = vmatprep.subr.mxu0 0.0
    %3792 = vmatpush1.msra.mxu0 0.0
    %3793 = vmatprep.subr.mxu0 0.0
    %3794 = vmatpush1.msra.mxu0 0.0
    %3795 = vmatprep.mubr.f32.mxu0 0.0
    %v3796 = vand.u32 %v3455, 4294901760
    %v3797 = vsub.f32 %v3455, %v3796
    %3798 = vmatmul.mubr.f32.gmra.mrb[0].mxu0 %v3797
    %v3799 = vpop.f32.mrb[0].mxu0
    %v3800 = vadd.f32 %v3696, %v3799
    %v3801 = vpop.f32.mrb[0].mxu0
    %3802 = vdwg.mxu0
    %3803 = vmatprep.subr.mxu0 0.0
    %v3804 = vand.u32 %v862, 4294901760
    %3805 = vmatpush1.msra.mxu0 %v3804
    %3806 = vmatprep.subr.mxu0 0.0
    %v3807 = vand.u32 %v863, 4294901760
    %3808 = vmatpush1.msra.mxu0 %v3807
    %3809 = vmatprep.subr.mxu0 0.0
    %v3810 = vand.u32 %v864, 4294901760
    %3811 = vmatpush1.msra.mxu0 %v3810
    %3812 = vmatprep.subr.mxu0 0.0
    %v3813 = vand.u32 %v865, 4294901760
    %3814 = vmatpush1.msra.mxu0 %v3813
    %3815 = vmatprep.subr.mxu0 0.0
    %v3816 = vand.u32 %v866, 4294901760
    %3817 = vmatpush1.msra.mxu0 %v3816
    %3818 = vmatprep.subr.mxu0 0.0
    %v3819 = vand.u32 %v867, 4294901760
    %3820 = vmatpush1.msra.mxu0 %v3819
    %3821 = vmatprep.subr.mxu0 0.0
    %v3822 = vand.u32 %v868, 4294901760
    %3823 = vmatpush1.msra.mxu0 %v3822
    %3824 = vmatprep.subr.mxu0 0.0
    %v3825 = vand.u32 %v869, 4294901760
    %3826 = vmatpush1.msra.mxu0 %v3825
    %3827 = vmatprep.subr.mxu0 0.0
    %v3828 = vand.u32 %v870, 4294901760
    %3829 = vmatpush1.msra.mxu0 %v3828
    %3830 = vmatprep.subr.mxu0 0.0
    %v3831 = vand.u32 %v871, 4294901760
    %3832 = vmatpush1.msra.mxu0 %v3831
    %3833 = vmatprep.subr.mxu0 0.0
    %v3834 = vand.u32 %v872, 4294901760
    %3835 = vmatpush1.msra.mxu0 %v3834
    %3836 = vmatprep.subr.mxu0 0.0
    %v3837 = vand.u32 %v873, 4294901760
    %3838 = vmatpush1.msra.mxu0 %v3837
    %3839 = vmatprep.subr.mxu0 0.0
    %v3840 = vand.u32 %v874, 4294901760
    %3841 = vmatpush1.msra.mxu0 %v3840
    %3842 = vmatprep.subr.mxu0 0.0
    %v3843 = vand.u32 %v875, 4294901760
    %3844 = vmatpush1.msra.mxu0 %v3843
    %3845 = vmatprep.subr.mxu0 0.0
    %v3846 = vand.u32 %v876, 4294901760
    %3847 = vmatpush1.msra.mxu0 %v3846
    %3848 = vmatprep.subr.mxu0 0.0
    %v3849 = vand.u32 %v877, 4294901760
    %3850 = vmatpush1.msra.mxu0 %v3849
    %3851 = vmatprep.subr.mxu0 0.0
    %3852 = vmatpush1.msra.mxu0 0.0
    %3853 = vmatprep.subr.mxu0 0.0
    %3854 = vmatpush1.msra.mxu0 0.0
    %3855 = vmatprep.subr.mxu0 0.0
    %3856 = vmatpush1.msra.mxu0 0.0
    %3857 = vmatprep.subr.mxu0 0.0
    %3858 = vmatpush1.msra.mxu0 0.0
    %3859 = vmatprep.subr.mxu0 0.0
    %3860 = vmatpush1.msra.mxu0 0.0
    %3861 = vmatprep.subr.mxu0 0.0
    %3862 = vmatpush1.msra.mxu0 0.0
    %3863 = vmatprep.subr.mxu0 0.0
    %3864 = vmatpush1.msra.mxu0 0.0
    %3865 = vmatprep.subr.mxu0 0.0
    %3866 = vmatpush1.msra.mxu0 0.0
    %3867 = vmatprep.subr.mxu0 0.0
    %3868 = vmatpush1.msra.mxu0 0.0
    %3869 = vmatprep.subr.mxu0 0.0
    %3870 = vmatpush1.msra.mxu0 0.0
    %3871 = vmatprep.subr.mxu0 0.0
    %3872 = vmatpush1.msra.mxu0 0.0
    %3873 = vmatprep.subr.mxu0 0.0
    %3874 = vmatpush1.msra.mxu0 0.0
    %3875 = vmatprep.subr.mxu0 0.0
    %3876 = vmatpush1.msra.mxu0 0.0
    %3877 = vmatprep.subr.mxu0 0.0
    %3878 = vmatpush1.msra.mxu0 0.0
    %3879 = vmatprep.subr.mxu0 0.0
    %3880 = vmatpush1.msra.mxu0 0.0
    %3881 = vmatprep.subr.mxu0 0.0
    %3882 = vmatpush1.msra.mxu0 0.0
    %3883 = vmatprep.mubr.f32.mxu0 0.0
    %v3884 = vand.u32 %v3455, 4294901760
    %v3885 = vsub.f32 %v3455, %v3884
    %v3886 = vand.u32 %v3885, 4294901760
    %3887 = vmatmul.mubr.f32.gmra.mrb[0].mxu0 %v3886
    %v3888 = vpop.f32.mrb[0].mxu0
    %v3889 = vadd.f32 %v3800, %v3888
    %v3890 = vpop.f32.mrb[0].mxu0
    %3891 = vdwg.mxu0
    %3892 = vmatprep.subr.mxu0 0.0
    %v3893 = vand.u32 %v862, 4294901760
    %v3894 = vsub.f32 %v862, %v3893
    %v3895 = vand.u32 %v3894, 4294901760
    %3896 = vmatpush1.msra.mxu0 %v3895
    %3897 = vmatprep.subr.mxu0 0.0
    %v3898 = vand.u32 %v863, 4294901760
    %v3899 = vsub.f32 %v863, %v3898
    %v3900 = vand.u32 %v3899, 4294901760
    %3901 = vmatpush1.msra.mxu0 %v3900
    %3902 = vmatprep.subr.mxu0 0.0
    %v3903 = vand.u32 %v864, 4294901760
    %v3904 = vsub.f32 %v864, %v3903
    %v3905 = vand.u32 %v3904, 4294901760
    %3906 = vmatpush1.msra.mxu0 %v3905
    %3907 = vmatprep.subr.mxu0 0.0
    %v3908 = vand.u32 %v865, 4294901760
    %v3909 = vsub.f32 %v865, %v3908
    %v3910 = vand.u32 %v3909, 4294901760
    %3911 = vmatpush1.msra.mxu0 %v3910
    %3912 = vmatprep.subr.mxu0 0.0
    %v3913 = vand.u32 %v866, 4294901760
    %v3914 = vsub.f32 %v866, %v3913
    %v3915 = vand.u32 %v3914, 4294901760
    %3916 = vmatpush1.msra.mxu0 %v3915
    %3917 = vmatprep.subr.mxu0 0.0
    %v3918 = vand.u32 %v867, 4294901760
    %v3919 = vsub.f32 %v867, %v3918
    %v3920 = vand.u32 %v3919, 4294901760
    %3921 = vmatpush1.msra.mxu0 %v3920
    %3922 = vmatprep.subr.mxu0 0.0
    %v3923 = vand.u32 %v868, 4294901760
    %v3924 = vsub.f32 %v868, %v3923
    %v3925 = vand.u32 %v3924, 4294901760
    %3926 = vmatpush1.msra.mxu0 %v3925
    %3927 = vmatprep.subr.mxu0 0.0
    %v3928 = vand.u32 %v869, 4294901760
    %v3929 = vsub.f32 %v869, %v3928
    %v3930 = vand.u32 %v3929, 4294901760
    %3931 = vmatpush1.msra.mxu0 %v3930
    %3932 = vmatprep.subr.mxu0 0.0
    %v3933 = vand.u32 %v870, 4294901760
    %v3934 = vsub.f32 %v870, %v3933
    %v3935 = vand.u32 %v3934, 4294901760
    %3936 = vmatpush1.msra.mxu0 %v3935
    %3937 = vmatprep.subr.mxu0 0.0
    %v3938 = vand.u32 %v871, 4294901760
    %v3939 = vsub.f32 %v871, %v3938
    %v3940 = vand.u32 %v3939, 4294901760
    %3941 = vmatpush1.msra.mxu0 %v3940
    %3942 = vmatprep.subr.mxu0 0.0
    %v3943 = vand.u32 %v872, 4294901760
    %v3944 = vsub.f32 %v872, %v3943
    %v3945 = vand.u32 %v3944, 4294901760
    %3946 = vmatpush1.msra.mxu0 %v3945
    %3947 = vmatprep.subr.mxu0 0.0
    %v3948 = vand.u32 %v873, 4294901760
    %v3949 = vsub.f32 %v873, %v3948
    %v3950 = vand.u32 %v3949, 4294901760
    %3951 = vmatpush1.msra.mxu0 %v3950
    %3952 = vmatprep.subr.mxu0 0.0
    %v3953 = vand.u32 %v874, 4294901760
    %v3954 = vsub.f32 %v874, %v3953
    %v3955 = vand.u32 %v3954, 4294901760
    %3956 = vmatpush1.msra.mxu0 %v3955
    %3957 = vmatprep.subr.mxu0 0.0
    %v3958 = vand.u32 %v875, 4294901760
    %v3959 = vsub.f32 %v875, %v3958
    %v3960 = vand.u32 %v3959, 4294901760
    %3961 = vmatpush1.msra.mxu0 %v3960
    %3962 = vmatprep.subr.mxu0 0.0
    %v3963 = vand.u32 %v876, 4294901760
    %v3964 = vsub.f32 %v876, %v3963
    %v3965 = vand.u32 %v3964, 4294901760
    %3966 = vmatpush1.msra.mxu0 %v3965
    %3967 = vmatprep.subr.mxu0 0.0
    %v3968 = vand.u32 %v877, 4294901760
    %v3969 = vsub.f32 %v877, %v3968
    %v3970 = vand.u32 %v3969, 4294901760
    %3971 = vmatpush1.msra.mxu0 %v3970
    %3972 = vmatprep.subr.mxu0 0.0
    %3973 = vmatpush1.msra.mxu0 0.0
    %3974 = vmatprep.subr.mxu0 0.0
    %3975 = vmatpush1.msra.mxu0 0.0
    %3976 = vmatprep.subr.mxu0 0.0
    %3977 = vmatpush1.msra.mxu0 0.0
    %3978 = vmatprep.subr.mxu0 0.0
    %3979 = vmatpush1.msra.mxu0 0.0
    %3980 = vmatprep.subr.mxu0 0.0
    %3981 = vmatpush1.msra.mxu0 0.0
    %3982 = vmatprep.subr.mxu0 0.0
    %3983 = vmatpush1.msra.mxu0 0.0
    %3984 = vmatprep.subr.mxu0 0.0
    %3985 = vmatpush1.msra.mxu0 0.0
    %3986 = vmatprep.subr.mxu0 0.0
    %3987 = vmatpush1.msra.mxu0 0.0
    %3988 = vmatprep.subr.mxu0 0.0
    %3989 = vmatpush1.msra.mxu0 0.0
    %3990 = vmatprep.subr.mxu0 0.0
    %3991 = vmatpush1.msra.mxu0 0.0
    %3992 = vmatprep.subr.mxu0 0.0
    %3993 = vmatpush1.msra.mxu0 0.0
    %3994 = vmatprep.subr.mxu0 0.0
    %3995 = vmatpush1.msra.mxu0 0.0
    %3996 = vmatprep.subr.mxu0 0.0
    %3997 = vmatpush1.msra.mxu0 0.0
    %3998 = vmatprep.subr.mxu0 0.0
    %3999 = vmatpush1.msra.mxu0 0.0
    %4000 = vmatprep.subr.mxu0 0.0
    %4001 = vmatpush1.msra.mxu0 0.0
    %4002 = vmatprep.subr.mxu0 0.0
    %4003 = vmatpush1.msra.mxu0 0.0
    %4004 = vmatprep.mubr.f32.mxu0 0.0
    %v4005 = vand.u32 %v3455, 4294901760
    %4006 = vmatmul.mubr.f32.gmra.mrb[0].mxu0 %v4005
    %v4007 = vpop.f32.mrb[0].mxu0
    %v4008 = vadd.f32 %v3889, %v4007
    %v4009 = vpop.f32.mrb[0].mxu0
    %4010 = vdwg.mxu0
    %4011 = vmatprep.subr.mxu0 0.0
    %v4012 = vand.u32 %v862, 4294901760
    %4013 = vmatpush1.msra.mxu0 %v4012
    %4014 = vmatprep.subr.mxu0 0.0
    %v4015 = vand.u32 %v863, 4294901760
    %4016 = vmatpush1.msra.mxu0 %v4015
    %4017 = vmatprep.subr.mxu0 0.0
    %v4018 = vand.u32 %v864, 4294901760
    %4019 = vmatpush1.msra.mxu0 %v4018
    %4020 = vmatprep.subr.mxu0 0.0
    %v4021 = vand.u32 %v865, 4294901760
    %4022 = vmatpush1.msra.mxu0 %v4021
    %4023 = vmatprep.subr.mxu0 0.0
    %v4024 = vand.u32 %v866, 4294901760
    %4025 = vmatpush1.msra.mxu0 %v4024
    %4026 = vmatprep.subr.mxu0 0.0
    %v4027 = vand.u32 %v867, 4294901760
    %4028 = vmatpush1.msra.mxu0 %v4027
    %4029 = vmatprep.subr.mxu0 0.0
    %v4030 = vand.u32 %v868, 4294901760
    %4031 = vmatpush1.msra.mxu0 %v4030
    %4032 = vmatprep.subr.mxu0 0.0
    %v4033 = vand.u32 %v869, 4294901760
    %4034 = vmatpush1.msra.mxu0 %v4033
    %4035 = vmatprep.subr.mxu0 0.0
    %v4036 = vand.u32 %v870, 4294901760
    %4037 = vmatpush1.msra.mxu0 %v4036
    %4038 = vmatprep.subr.mxu0 0.0
    %v4039 = vand.u32 %v871, 4294901760
    %4040 = vmatpush1.msra.mxu0 %v4039
    %4041 = vmatprep.subr.mxu0 0.0
    %v4042 = vand.u32 %v872, 4294901760
    %4043 = vmatpush1.msra.mxu0 %v4042
    %4044 = vmatprep.subr.mxu0 0.0
    %v4045 = vand.u32 %v873, 4294901760
    %4046 = vmatpush1.msra.mxu0 %v4045
    %4047 = vmatprep.subr.mxu0 0.0
    %v4048 = vand.u32 %v874, 4294901760
    %4049 = vmatpush1.msra.mxu0 %v4048
    %4050 = vmatprep.subr.mxu0 0.0
    %v4051 = vand.u32 %v875, 4294901760
    %4052 = vmatpush1.msra.mxu0 %v4051
    %4053 = vmatprep.subr.mxu0 0.0
    %v4054 = vand.u32 %v876, 4294901760
    %4055 = vmatpush1.msra.mxu0 %v4054
    %4056 = vmatprep.subr.mxu0 0.0
    %v4057 = vand.u32 %v877, 4294901760
    %4058 = vmatpush1.msra.mxu0 %v4057
    %4059 = vmatprep.subr.mxu0 0.0
    %4060 = vmatpush1.msra.mxu0 0.0
    %4061 = vmatprep.subr.mxu0 0.0
    %4062 = vmatpush1.msra.mxu0 0.0
    %4063 = vmatprep.subr.mxu0 0.0
    %4064 = vmatpush1.msra.mxu0 0.0
    %4065 = vmatprep.subr.mxu0 0.0
    %4066 = vmatpush1.msra.mxu0 0.0
    %4067 = vmatprep.subr.mxu0 0.0
    %4068 = vmatpush1.msra.mxu0 0.0
    %4069 = vmatprep.subr.mxu0 0.0
    %4070 = vmatpush1.msra.mxu0 0.0
    %4071 = vmatprep.subr.mxu0 0.0
    %4072 = vmatpush1.msra.mxu0 0.0
    %4073 = vmatprep.subr.mxu0 0.0
    %4074 = vmatpush1.msra.mxu0 0.0
    %4075 = vmatprep.subr.mxu0 0.0
    %4076 = vmatpush1.msra.mxu0 0.0
    %4077 = vmatprep.subr.mxu0 0.0
    %4078 = vmatpush1.msra.mxu0 0.0
    %4079 = vmatprep.subr.mxu0 0.0
    %4080 = vmatpush1.msra.mxu0 0.0
    %4081 = vmatprep.subr.mxu0 0.0
    %4082 = vmatpush1.msra.mxu0 0.0
    %4083 = vmatprep.subr.mxu0 0.0
    %4084 = vmatpush1.msra.mxu0 0.0
    %4085 = vmatprep.subr.mxu0 0.0
    %4086 = vmatpush1.msra.mxu0 0.0
    %4087 = vmatprep.subr.mxu0 0.0
    %4088 = vmatpush1.msra.mxu0 0.0
    %4089 = vmatprep.subr.mxu0 0.0
    %4090 = vmatpush1.msra.mxu0 0.0
    %4091 = vmatprep.mubr.f32.mxu0 0.0
    %v4092 = vand.u32 %v3455, 4294901760
    %4093 = vmatmul.mubr.f32.gmra.mrb[0].mxu0 %v4092
    %v4094 = vpop.f32.mrb[0].mxu0
    %v4095 = vadd.f32 %v4008, %v4094
    %v4096 = vpop.f32.mrb[0].mxu0
    %4097 = vdwg.mxu0
    %v4098 = vadd.f32 %v3456, %v4095
    %v4099 = vtanh.pop %v4098
    %v4100 = vld [vmem:[#allocation2 + $0x30] sm:$0xff]
    %4101 = vmatprep.subr.mxu0 0.0
    %v4102 = vand.u32 %v862, 4294901760
    %4103 = vmatpush1.msra.mxu0 %v4102
    %4104 = vmatprep.subr.mxu0 0.0
    %v4105 = vand.u32 %v863, 4294901760
    %4106 = vmatpush1.msra.mxu0 %v4105
    %4107 = vmatprep.subr.mxu0 0.0
    %v4108 = vand.u32 %v864, 4294901760
    %4109 = vmatpush1.msra.mxu0 %v4108
    %4110 = vmatprep.subr.mxu0 0.0
    %v4111 = vand.u32 %v865, 4294901760
    %4112 = vmatpush1.msra.mxu0 %v4111
    %4113 = vmatprep.subr.mxu0 0.0
    %v4114 = vand.u32 %v866, 4294901760
    %4115 = vmatpush1.msra.mxu0 %v4114
    %4116 = vmatprep.subr.mxu0 0.0
    %v4117 = vand.u32 %v867, 4294901760
    %4118 = vmatpush1.msra.mxu0 %v4117
    %4119 = vmatprep.subr.mxu0 0.0
    %v4120 = vand.u32 %v868, 4294901760
    %4121 = vmatpush1.msra.mxu0 %v4120
    %4122 = vmatprep.subr.mxu0 0.0
    %v4123 = vand.u32 %v869, 4294901760
    %4124 = vmatpush1.msra.mxu0 %v4123
    %4125 = vmatprep.subr.mxu0 0.0
    %v4126 = vand.u32 %v870, 4294901760
    %4127 = vmatpush1.msra.mxu0 %v4126
    %4128 = vmatprep.subr.mxu0 0.0
    %v4129 = vand.u32 %v871, 4294901760
    %4130 = vmatpush1.msra.mxu0 %v4129
    %4131 = vmatprep.subr.mxu0 0.0
    %v4132 = vand.u32 %v872, 4294901760
    %4133 = vmatpush1.msra.mxu0 %v4132
    %4134 = vmatprep.subr.mxu0 0.0
    %v4135 = vand.u32 %v873, 4294901760
    %4136 = vmatpush1.msra.mxu0 %v4135
    %4137 = vmatprep.subr.mxu0 0.0
    %v4138 = vand.u32 %v874, 4294901760
    %4139 = vmatpush1.msra.mxu0 %v4138
    %4140 = vmatprep.subr.mxu0 0.0
    %v4141 = vand.u32 %v875, 4294901760
    %4142 = vmatpush1.msra.mxu0 %v4141
    %4143 = vmatprep.subr.mxu0 0.0
    %v4144 = vand.u32 %v876, 4294901760
    %4145 = vmatpush1.msra.mxu0 %v4144
    %4146 = vmatprep.subr.mxu0 0.0
    %v4147 = vand.u32 %v877, 4294901760
    %4148 = vmatpush1.msra.mxu0 %v4147
    %4149 = vmatprep.subr.mxu0 0.0
    %4150 = vmatpush1.msra.mxu0 0.0
    %4151 = vmatprep.subr.mxu0 0.0
    %4152 = vmatpush1.msra.mxu0 0.0
    %4153 = vmatprep.subr.mxu0 0.0
    %4154 = vmatpush1.msra.mxu0 0.0
    %4155 = vmatprep.subr.mxu0 0.0
    %4156 = vmatpush1.msra.mxu0 0.0
    %4157 = vmatprep.subr.mxu0 0.0
    %4158 = vmatpush1.msra.mxu0 0.0
    %4159 = vmatprep.subr.mxu0 0.0
    %4160 = vmatpush1.msra.mxu0 0.0
    %4161 = vmatprep.subr.mxu0 0.0
    %4162 = vmatpush1.msra.mxu0 0.0
    %4163 = vmatprep.subr.mxu0 0.0
    %4164 = vmatpush1.msra.mxu0 0.0
    %4165 = vmatprep.subr.mxu0 0.0
    %4166 = vmatpush1.msra.mxu0 0.0
    %4167 = vmatprep.subr.mxu0 0.0
    %4168 = vmatpush1.msra.mxu0 0.0
    %4169 = vmatprep.subr.mxu0 0.0
    %4170 = vmatpush1.msra.mxu0 0.0
    %4171 = vmatprep.subr.mxu0 0.0
    %4172 = vmatpush1.msra.mxu0 0.0
    %4173 = vmatprep.subr.mxu0 0.0
    %4174 = vmatpush1.msra.mxu0 0.0
    %4175 = vmatprep.subr.mxu0 0.0
    %4176 = vmatpush1.msra.mxu0 0.0
    %4177 = vmatprep.subr.mxu0 0.0
    %4178 = vmatpush1.msra.mxu0 0.0
    %4179 = vmatprep.subr.mxu0 0.0
    %4180 = vmatpush1.msra.mxu0 0.0
    %4181 = vmatprep.mubr.f32.mxu0 0.0
    %v4182 = vand.u32 %v4099, 4294901760
    %v4183 = vsub.f32 %v4099, %v4182
    %v4184 = vand.u32 %v4183, 4294901760
    %v4185 = vsub.f32 %v4183, %v4184
    %v4186 = vand.u32 %v4185, 4294901760
    %4187 = vmatmul.mubr.f32.gmra.mrb[0].mxu0 %v4186
    %v4188 = vpop.f32.mrb[0].mxu0
    %v4189 = vadd.f32 0.0, %v4188
    %v4190 = vpop.f32.mrb[0].mxu0
    %4191 = vdwg.mxu0
    %4192 = vmatprep.subr.mxu0 0.0
    %v4193 = vand.u32 %v862, 4294901760
    %v4194 = vsub.f32 %v862, %v4193
    %v4195 = vand.u32 %v4194, 4294901760
    %v4196 = vsub.f32 %v4194, %v4195
    %v4197 = vand.u32 %v4196, 4294901760
    %4198 = vmatpush1.msra.mxu0 %v4197
    %4199 = vmatprep.subr.mxu0 0.0
    %v4200 = vand.u32 %v863, 4294901760
    %v4201 = vsub.f32 %v863, %v4200
    %v4202 = vand.u32 %v4201, 4294901760
    %v4203 = vsub.f32 %v4201, %v4202
    %v4204 = vand.u32 %v4203, 4294901760
    %4205 = vmatpush1.msra.mxu0 %v4204
    %4206 = vmatprep.subr.mxu0 0.0
    %v4207 = vand.u32 %v864, 4294901760
    %v4208 = vsub.f32 %v864, %v4207
    %v4209 = vand.u32 %v4208, 4294901760
    %v4210 = vsub.f32 %v4208, %v4209
    %v4211 = vand.u32 %v4210, 4294901760
    %4212 = vmatpush1.msra.mxu0 %v4211
    %4213 = vmatprep.subr.mxu0 0.0
    %v4214 = vand.u32 %v865, 4294901760
    %v4215 = vsub.f32 %v865, %v4214
    %v4216 = vand.u32 %v4215, 4294901760
    %v4217 = vsub.f32 %v4215, %v4216
    %v4218 = vand.u32 %v4217, 4294901760
    %4219 = vmatpush1.msra.mxu0 %v4218
    %4220 = vmatprep.subr.mxu0 0.0
    %v4221 = vand.u32 %v866, 4294901760
    %v4222 = vsub.f32 %v866, %v4221
    %v4223 = vand.u32 %v4222, 4294901760
    %v4224 = vsub.f32 %v4222, %v4223
    %v4225 = vand.u32 %v4224, 4294901760
    %4226 = vmatpush1.msra.mxu0 %v4225
    %4227 = vmatprep.subr.mxu0 0.0
    %v4228 = vand.u32 %v867, 4294901760
    %v4229 = vsub.f32 %v867, %v4228
    %v4230 = vand.u32 %v4229, 4294901760
    %v4231 = vsub.f32 %v4229, %v4230
    %v4232 = vand.u32 %v4231, 4294901760
    %4233 = vmatpush1.msra.mxu0 %v4232
    %4234 = vmatprep.subr.mxu0 0.0
    %v4235 = vand.u32 %v868, 4294901760
    %v4236 = vsub.f32 %v868, %v4235
    %v4237 = vand.u32 %v4236, 4294901760
    %v4238 = vsub.f32 %v4236, %v4237
    %v4239 = vand.u32 %v4238, 4294901760
    %4240 = vmatpush1.msra.mxu0 %v4239
    %4241 = vmatprep.subr.mxu0 0.0
    %v4242 = vand.u32 %v869, 4294901760
    %v4243 = vsub.f32 %v869, %v4242
    %v4244 = vand.u32 %v4243, 4294901760
    %v4245 = vsub.f32 %v4243, %v4244
    %v4246 = vand.u32 %v4245, 4294901760
    %4247 = vmatpush1.msra.mxu0 %v4246
    %4248 = vmatprep.subr.mxu0 0.0
    %v4249 = vand.u32 %v870, 4294901760
    %v4250 = vsub.f32 %v870, %v4249
    %v4251 = vand.u32 %v4250, 4294901760
    %v4252 = vsub.f32 %v4250, %v4251
    %v4253 = vand.u32 %v4252, 4294901760
    %4254 = vmatpush1.msra.mxu0 %v4253
    %4255 = vmatprep.subr.mxu0 0.0
    %v4256 = vand.u32 %v871, 4294901760
    %v4257 = vsub.f32 %v871, %v4256
    %v4258 = vand.u32 %v4257, 4294901760
    %v4259 = vsub.f32 %v4257, %v4258
    %v4260 = vand.u32 %v4259, 4294901760
    %4261 = vmatpush1.msra.mxu0 %v4260
    %4262 = vmatprep.subr.mxu0 0.0
    %v4263 = vand.u32 %v872, 4294901760
    %v4264 = vsub.f32 %v872, %v4263
    %v4265 = vand.u32 %v4264, 4294901760
    %v4266 = vsub.f32 %v4264, %v4265
    %v4267 = vand.u32 %v4266, 4294901760
    %4268 = vmatpush1.msra.mxu0 %v4267
    %4269 = vmatprep.subr.mxu0 0.0
    %v4270 = vand.u32 %v873, 4294901760
    %v4271 = vsub.f32 %v873, %v4270
    %v4272 = vand.u32 %v4271, 4294901760
    %v4273 = vsub.f32 %v4271, %v4272
    %v4274 = vand.u32 %v4273, 4294901760
    %4275 = vmatpush1.msra.mxu0 %v4274
    %4276 = vmatprep.subr.mxu0 0.0
    %v4277 = vand.u32 %v874, 4294901760
    %v4278 = vsub.f32 %v874, %v4277
    %v4279 = vand.u32 %v4278, 4294901760
    %v4280 = vsub.f32 %v4278, %v4279
    %v4281 = vand.u32 %v4280, 4294901760
    %4282 = vmatpush1.msra.mxu0 %v4281
    %4283 = vmatprep.subr.mxu0 0.0
    %v4284 = vand.u32 %v875, 4294901760
    %v4285 = vsub.f32 %v875, %v4284
    %v4286 = vand.u32 %v4285, 4294901760
    %v4287 = vsub.f32 %v4285, %v4286
    %v4288 = vand.u32 %v4287, 4294901760
    %4289 = vmatpush1.msra.mxu0 %v4288
    %4290 = vmatprep.subr.mxu0 0.0
    %v4291 = vand.u32 %v876, 4294901760
    %v4292 = vsub.f32 %v876, %v4291
    %v4293 = vand.u32 %v4292, 4294901760
    %v4294 = vsub.f32 %v4292, %v4293
    %v4295 = vand.u32 %v4294, 4294901760
    %4296 = vmatpush1.msra.mxu0 %v4295
    %4297 = vmatprep.subr.mxu0 0.0
    %v4298 = vand.u32 %v877, 4294901760
    %v4299 = vsub.f32 %v877, %v4298
    %v4300 = vand.u32 %v4299, 4294901760
    %v4301 = vsub.f32 %v4299, %v4300
    %v4302 = vand.u32 %v4301, 4294901760
    %4303 = vmatpush1.msra.mxu0 %v4302
    %4304 = vmatprep.subr.mxu0 0.0
    %4305 = vmatpush1.msra.mxu0 0.0
    %4306 = vmatprep.subr.mxu0 0.0
    %4307 = vmatpush1.msra.mxu0 0.0
    %4308 = vmatprep.subr.mxu0 0.0
    %4309 = vmatpush1.msra.mxu0 0.0
    %4310 = vmatprep.subr.mxu0 0.0
    %4311 = vmatpush1.msra.mxu0 0.0
    %4312 = vmatprep.subr.mxu0 0.0
    %4313 = vmatpush1.msra.mxu0 0.0
    %4314 = vmatprep.subr.mxu0 0.0
    %4315 = vmatpush1.msra.mxu0 0.0
    %4316 = vmatprep.subr.mxu0 0.0
    %4317 = vmatpush1.msra.mxu0 0.0
    %4318 = vmatprep.subr.mxu0 0.0
    %4319 = vmatpush1.msra.mxu0 0.0
    %4320 = vmatprep.subr.mxu0 0.0
    %4321 = vmatpush1.msra.mxu0 0.0
    %4322 = vmatprep.subr.mxu0 0.0
    %4323 = vmatpush1.msra.mxu0 0.0
    %4324 = vmatprep.subr.mxu0 0.0
    %4325 = vmatpush1.msra.mxu0 0.0
    %4326 = vmatprep.subr.mxu0 0.0
    %4327 = vmatpush1.msra.mxu0 0.0
    %4328 = vmatprep.subr.mxu0 0.0
    %4329 = vmatpush1.msra.mxu0 0.0
    %4330 = vmatprep.subr.mxu0 0.0
    %4331 = vmatpush1.msra.mxu0 0.0
    %4332 = vmatprep.subr.mxu0 0.0
    %4333 = vmatpush1.msra.mxu0 0.0
    %4334 = vmatprep.subr.mxu0 0.0
    %4335 = vmatpush1.msra.mxu0 0.0
    %4336 = vmatprep.mubr.f32.mxu0 0.0
    %v4337 = vand.u32 %v4099, 4294901760
    %4338 = vmatmul.mubr.f32.gmra.mrb[0].mxu0 %v4337
    %v4339 = vpop.f32.mrb[0].mxu0
    %v4340 = vadd.f32 %v4189, %v4339
    %v4341 = vpop.f32.mrb[0].mxu0
    %4342 = vdwg.mxu0
    %4343 = vmatprep.subr.mxu0 0.0
    %v4344 = vand.u32 %v862, 4294901760
    %v4345 = vsub.f32 %v862, %v4344
    %4346 = vmatpush1.msra.mxu0 %v4345
    %4347 = vmatprep.subr.mxu0 0.0
    %v4348 = vand.u32 %v863, 4294901760
    %v4349 = vsub.f32 %v863, %v4348
    %4350 = vmatpush1.msra.mxu0 %v4349
    %4351 = vmatprep.subr.mxu0 0.0
    %v4352 = vand.u32 %v864, 4294901760
    %v4353 = vsub.f32 %v864, %v4352
    %4354 = vmatpush1.msra.mxu0 %v4353
    %4355 = vmatprep.subr.mxu0 0.0
    %v4356 = vand.u32 %v865, 4294901760
    %v4357 = vsub.f32 %v865, %v4356
    %4358 = vmatpush1.msra.mxu0 %v4357
    %4359 = vmatprep.subr.mxu0 0.0
    %v4360 = vand.u32 %v866, 4294901760
    %v4361 = vsub.f32 %v866, %v4360
    %4362 = vmatpush1.msra.mxu0 %v4361
    %4363 = vmatprep.subr.mxu0 0.0
    %v4364 = vand.u32 %v867, 4294901760
    %v4365 = vsub.f32 %v867, %v4364
    %4366 = vmatpush1.msra.mxu0 %v4365
    %4367 = vmatprep.subr.mxu0 0.0
    %v4368 = vand.u32 %v868, 4294901760
    %v4369 = vsub.f32 %v868, %v4368
    %4370 = vmatpush1.msra.mxu0 %v4369
    %4371 = vmatprep.subr.mxu0 0.0
    %v4372 = vand.u32 %v869, 4294901760
    %v4373 = vsub.f32 %v869, %v4372
    %4374 = vmatpush1.msra.mxu0 %v4373
    %4375 = vmatprep.subr.mxu0 0.0
    %v4376 = vand.u32 %v870, 4294901760
    %v4377 = vsub.f32 %v870, %v4376
    %4378 = vmatpush1.msra.mxu0 %v4377
    %4379 = vmatprep.subr.mxu0 0.0
    %v4380 = vand.u32 %v871, 4294901760
    %v4381 = vsub.f32 %v871, %v4380
    %4382 = vmatpush1.msra.mxu0 %v4381
    %4383 = vmatprep.subr.mxu0 0.0
    %v4384 = vand.u32 %v872, 4294901760
    %v4385 = vsub.f32 %v872, %v4384
    %4386 = vmatpush1.msra.mxu0 %v4385
    %4387 = vmatprep.subr.mxu0 0.0
    %v4388 = vand.u32 %v873, 4294901760
    %v4389 = vsub.f32 %v873, %v4388
    %4390 = vmatpush1.msra.mxu0 %v4389
    %4391 = vmatprep.subr.mxu0 0.0
    %v4392 = vand.u32 %v874, 4294901760
    %v4393 = vsub.f32 %v874, %v4392
    %4394 = vmatpush1.msra.mxu0 %v4393
    %4395 = vmatprep.subr.mxu0 0.0
    %v4396 = vand.u32 %v875, 4294901760
    %v4397 = vsub.f32 %v875, %v4396
    %4398 = vmatpush1.msra.mxu0 %v4397
    %4399 = vmatprep.subr.mxu0 0.0
    %v4400 = vand.u32 %v876, 4294901760
    %v4401 = vsub.f32 %v876, %v4400
    %4402 = vmatpush1.msra.mxu0 %v4401
    %4403 = vmatprep.subr.mxu0 0.0
    %v4404 = vand.u32 %v877, 4294901760
    %v4405 = vsub.f32 %v877, %v4404
    %4406 = vmatpush1.msra.mxu0 %v4405
    %4407 = vmatprep.subr.mxu0 0.0
    %4408 = vmatpush1.msra.mxu0 0.0
    %4409 = vmatprep.subr.mxu0 0.0
    %4410 = vmatpush1.msra.mxu0 0.0
    %4411 = vmatprep.subr.mxu0 0.0
    %4412 = vmatpush1.msra.mxu0 0.0
    %4413 = vmatprep.subr.mxu0 0.0
    %4414 = vmatpush1.msra.mxu0 0.0
    %4415 = vmatprep.subr.mxu0 0.0
    %4416 = vmatpush1.msra.mxu0 0.0
    %4417 = vmatprep.subr.mxu0 0.0
    %4418 = vmatpush1.msra.mxu0 0.0
    %4419 = vmatprep.subr.mxu0 0.0
    %4420 = vmatpush1.msra.mxu0 0.0
    %4421 = vmatprep.subr.mxu0 0.0
    %4422 = vmatpush1.msra.mxu0 0.0
    %4423 = vmatprep.subr.mxu0 0.0
    %4424 = vmatpush1.msra.mxu0 0.0
    %4425 = vmatprep.subr.mxu0 0.0
    %4426 = vmatpush1.msra.mxu0 0.0
    %4427 = vmatprep.subr.mxu0 0.0
    %4428 = vmatpush1.msra.mxu0 0.0
    %4429 = vmatprep.subr.mxu0 0.0
    %4430 = vmatpush1.msra.mxu0 0.0
    %4431 = vmatprep.subr.mxu0 0.0
    %4432 = vmatpush1.msra.mxu0 0.0
    %4433 = vmatprep.subr.mxu0 0.0
    %4434 = vmatpush1.msra.mxu0 0.0
    %4435 = vmatprep.subr.mxu0 0.0
    %4436 = vmatpush1.msra.mxu0 0.0
    %4437 = vmatprep.subr.mxu0 0.0
    %4438 = vmatpush1.msra.mxu0 0.0
    %4439 = vmatprep.mubr.f32.mxu0 0.0
    %v4440 = vand.u32 %v4099, 4294901760
    %v4441 = vsub.f32 %v4099, %v4440
    %4442 = vmatmul.mubr.f32.gmra.mrb[0].mxu0 %v4441
    %v4443 = vpop.f32.mrb[0].mxu0
    %v4444 = vadd.f32 %v4340, %v4443
    %v4445 = vpop.f32.mrb[0].mxu0
    %4446 = vdwg.mxu0
    %4447 = vmatprep.subr.mxu0 0.0
    %v4448 = vand.u32 %v862, 4294901760
    %4449 = vmatpush1.msra.mxu0 %v4448
    %4450 = vmatprep.subr.mxu0 0.0
    %v4451 = vand.u32 %v863, 4294901760
    %4452 = vmatpush1.msra.mxu0 %v4451
    %4453 = vmatprep.subr.mxu0 0.0
    %v4454 = vand.u32 %v864, 4294901760
    %4455 = vmatpush1.msra.mxu0 %v4454
    %4456 = vmatprep.subr.mxu0 0.0
    %v4457 = vand.u32 %v865, 4294901760
    %4458 = vmatpush1.msra.mxu0 %v4457
    %4459 = vmatprep.subr.mxu0 0.0
    %v4460 = vand.u32 %v866, 4294901760
    %4461 = vmatpush1.msra.mxu0 %v4460
    %4462 = vmatprep.subr.mxu0 0.0
    %v4463 = vand.u32 %v867, 4294901760
    %4464 = vmatpush1.msra.mxu0 %v4463
    %4465 = vmatprep.subr.mxu0 0.0
    %v4466 = vand.u32 %v868, 4294901760
    %4467 = vmatpush1.msra.mxu0 %v4466
    %4468 = vmatprep.subr.mxu0 0.0
    %v4469 = vand.u32 %v869, 4294901760
    %4470 = vmatpush1.msra.mxu0 %v4469
    %4471 = vmatprep.subr.mxu0 0.0
    %v4472 = vand.u32 %v870, 4294901760
    %4473 = vmatpush1.msra.mxu0 %v4472
    %4474 = vmatprep.subr.mxu0 0.0
    %v4475 = vand.u32 %v871, 4294901760
    %4476 = vmatpush1.msra.mxu0 %v4475
    %4477 = vmatprep.subr.mxu0 0.0
    %v4478 = vand.u32 %v872, 4294901760
    %4479 = vmatpush1.msra.mxu0 %v4478
    %4480 = vmatprep.subr.mxu0 0.0
    %v4481 = vand.u32 %v873, 4294901760
    %4482 = vmatpush1.msra.mxu0 %v4481
    %4483 = vmatprep.subr.mxu0 0.0
    %v4484 = vand.u32 %v874, 4294901760
    %4485 = vmatpush1.msra.mxu0 %v4484
    %4486 = vmatprep.subr.mxu0 0.0
    %v4487 = vand.u32 %v875, 4294901760
    %4488 = vmatpush1.msra.mxu0 %v4487
    %4489 = vmatprep.subr.mxu0 0.0
    %v4490 = vand.u32 %v876, 4294901760
    %4491 = vmatpush1.msra.mxu0 %v4490
    %4492 = vmatprep.subr.mxu0 0.0
    %v4493 = vand.u32 %v877, 4294901760
    %4494 = vmatpush1.msra.mxu0 %v4493
    %4495 = vmatprep.subr.mxu0 0.0
    %4496 = vmatpush1.msra.mxu0 0.0
    %4497 = vmatprep.subr.mxu0 0.0
    %4498 = vmatpush1.msra.mxu0 0.0
    %4499 = vmatprep.subr.mxu0 0.0
    %4500 = vmatpush1.msra.mxu0 0.0
    %4501 = vmatprep.subr.mxu0 0.0
    %4502 = vmatpush1.msra.mxu0 0.0
    %4503 = vmatprep.subr.mxu0 0.0
    %4504 = vmatpush1.msra.mxu0 0.0
    %4505 = vmatprep.subr.mxu0 0.0
    %4506 = vmatpush1.msra.mxu0 0.0
    %4507 = vmatprep.subr.mxu0 0.0
    %4508 = vmatpush1.msra.mxu0 0.0
    %4509 = vmatprep.subr.mxu0 0.0
    %4510 = vmatpush1.msra.mxu0 0.0
    %4511 = vmatprep.subr.mxu0 0.0
    %4512 = vmatpush1.msra.mxu0 0.0
    %4513 = vmatprep.subr.mxu0 0.0
    %4514 = vmatpush1.msra.mxu0 0.0
    %4515 = vmatprep.subr.mxu0 0.0
    %4516 = vmatpush1.msra.mxu0 0.0
    %4517 = vmatprep.subr.mxu0 0.0
    %4518 = vmatpush1.msra.mxu0 0.0
    %4519 = vmatprep.subr.mxu0 0.0
    %4520 = vmatpush1.msra.mxu0 0.0
    %4521 = vmatprep.subr.mxu0 0.0
    %4522 = vmatpush1.msra.mxu0 0.0
    %4523 = vmatprep.subr.mxu0 0.0
    %4524 = vmatpush1.msra.mxu0 0.0
    %4525 = vmatprep.subr.mxu0 0.0
    %4526 = vmatpush1.msra.mxu0 0.0
    %4527 = vmatprep.mubr.f32.mxu0 0.0
    %v4528 = vand.u32 %v4099, 4294901760
    %v4529 = vsub.f32 %v4099, %v4528
    %v4530 = vand.u32 %v4529, 4294901760
    %4531 = vmatmul.mubr.f32.gmra.mrb[0].mxu0 %v4530
    %v4532 = vpop.f32.mrb[0].mxu0
    %v4533 = vadd.f32 %v4444, %v4532
    %v4534 = vpop.f32.mrb[0].mxu0
    %4535 = vdwg.mxu0
    %4536 = vmatprep.subr.mxu0 0.0
    %v4537 = vand.u32 %v862, 4294901760
    %v4538 = vsub.f32 %v862, %v4537
    %v4539 = vand.u32 %v4538, 4294901760
    %4540 = vmatpush1.msra.mxu0 %v4539
    %4541 = vmatprep.subr.mxu0 0.0
    %v4542 = vand.u32 %v863, 4294901760
    %v4543 = vsub.f32 %v863, %v4542
    %v4544 = vand.u32 %v4543, 4294901760
    %4545 = vmatpush1.msra.mxu0 %v4544
    %4546 = vmatprep.subr.mxu0 0.0
    %v4547 = vand.u32 %v864, 4294901760
    %v4548 = vsub.f32 %v864, %v4547
    %v4549 = vand.u32 %v4548, 4294901760
    %4550 = vmatpush1.msra.mxu0 %v4549
    %4551 = vmatprep.subr.mxu0 0.0
    %v4552 = vand.u32 %v865, 4294901760
    %v4553 = vsub.f32 %v865, %v4552
    %v4554 = vand.u32 %v4553, 4294901760
    %4555 = vmatpush1.msra.mxu0 %v4554
    %4556 = vmatprep.subr.mxu0 0.0
    %v4557 = vand.u32 %v866, 4294901760
    %v4558 = vsub.f32 %v866, %v4557
    %v4559 = vand.u32 %v4558, 4294901760
    %4560 = vmatpush1.msra.mxu0 %v4559
    %4561 = vmatprep.subr.mxu0 0.0
    %v4562 = vand.u32 %v867, 4294901760
    %v4563 = vsub.f32 %v867, %v4562
    %v4564 = vand.u32 %v4563, 4294901760
    %4565 = vmatpush1.msra.mxu0 %v4564
    %4566 = vmatprep.subr.mxu0 0.0
    %v4567 = vand.u32 %v868, 4294901760
    %v4568 = vsub.f32 %v868, %v4567
    %v4569 = vand.u32 %v4568, 4294901760
    %4570 = vmatpush1.msra.mxu0 %v4569
    %4571 = vmatprep.subr.mxu0 0.0
    %v4572 = vand.u32 %v869, 4294901760
    %v4573 = vsub.f32 %v869, %v4572
    %v4574 = vand.u32 %v4573, 4294901760
    %4575 = vmatpush1.msra.mxu0 %v4574
    %4576 = vmatprep.subr.mxu0 0.0
    %v4577 = vand.u32 %v870, 4294901760
    %v4578 = vsub.f32 %v870, %v4577
    %v4579 = vand.u32 %v4578, 4294901760
    %4580 = vmatpush1.msra.mxu0 %v4579
    %4581 = vmatprep.subr.mxu0 0.0
    %v4582 = vand.u32 %v871, 4294901760
    %v4583 = vsub.f32 %v871, %v4582
    %v4584 = vand.u32 %v4583, 4294901760
    %4585 = vmatpush1.msra.mxu0 %v4584
    %4586 = vmatprep.subr.mxu0 0.0
    %v4587 = vand.u32 %v872, 4294901760
    %v4588 = vsub.f32 %v872, %v4587
    %v4589 = vand.u32 %v4588, 4294901760
    %4590 = vmatpush1.msra.mxu0 %v4589
    %4591 = vmatprep.subr.mxu0 0.0
    %v4592 = vand.u32 %v873, 4294901760
    %v4593 = vsub.f32 %v873, %v4592
    %v4594 = vand.u32 %v4593, 4294901760
    %4595 = vmatpush1.msra.mxu0 %v4594
    %4596 = vmatprep.subr.mxu0 0.0
    %v4597 = vand.u32 %v874, 4294901760
    %v4598 = vsub.f32 %v874, %v4597
    %v4599 = vand.u32 %v4598, 4294901760
    %4600 = vmatpush1.msra.mxu0 %v4599
    %4601 = vmatprep.subr.mxu0 0.0
    %v4602 = vand.u32 %v875, 4294901760
    %v4603 = vsub.f32 %v875, %v4602
    %v4604 = vand.u32 %v4603, 4294901760
    %4605 = vmatpush1.msra.mxu0 %v4604
    %4606 = vmatprep.subr.mxu0 0.0
    %v4607 = vand.u32 %v876, 4294901760
    %v4608 = vsub.f32 %v876, %v4607
    %v4609 = vand.u32 %v4608, 4294901760
    %4610 = vmatpush1.msra.mxu0 %v4609
    %4611 = vmatprep.subr.mxu0 0.0
    %v4612 = vand.u32 %v877, 4294901760
    %v4613 = vsub.f32 %v877, %v4612
    %v4614 = vand.u32 %v4613, 4294901760
    %4615 = vmatpush1.msra.mxu0 %v4614
    %4616 = vmatprep.subr.mxu0 0.0
    %4617 = vmatpush1.msra.mxu0 0.0
    %4618 = vmatprep.subr.mxu0 0.0
    %4619 = vmatpush1.msra.mxu0 0.0
    %4620 = vmatprep.subr.mxu0 0.0
    %4621 = vmatpush1.msra.mxu0 0.0
    %4622 = vmatprep.subr.mxu0 0.0
    %4623 = vmatpush1.msra.mxu0 0.0
    %4624 = vmatprep.subr.mxu0 0.0
    %4625 = vmatpush1.msra.mxu0 0.0
    %4626 = vmatprep.subr.mxu0 0.0
    %4627 = vmatpush1.msra.mxu0 0.0
    %4628 = vmatprep.subr.mxu0 0.0
    %4629 = vmatpush1.msra.mxu0 0.0
    %4630 = vmatprep.subr.mxu0 0.0
    %4631 = vmatpush1.msra.mxu0 0.0
    %4632 = vmatprep.subr.mxu0 0.0
    %4633 = vmatpush1.msra.mxu0 0.0
    %4634 = vmatprep.subr.mxu0 0.0
    %4635 = vmatpush1.msra.mxu0 0.0
    %4636 = vmatprep.subr.mxu0 0.0
    %4637 = vmatpush1.msra.mxu0 0.0
    %4638 = vmatprep.subr.mxu0 0.0
    %4639 = vmatpush1.msra.mxu0 0.0
    %4640 = vmatprep.subr.mxu0 0.0
    %4641 = vmatpush1.msra.mxu0 0.0
    %4642 = vmatprep.subr.mxu0 0.0
    %4643 = vmatpush1.msra.mxu0 0.0
    %4644 = vmatprep.subr.mxu0 0.0
    %4645 = vmatpush1.msra.mxu0 0.0
    %4646 = vmatprep.subr.mxu0 0.0
    %4647 = vmatpush1.msra.mxu0 0.0
    %4648 = vmatprep.mubr.f32.mxu0 0.0
    %v4649 = vand.u32 %v4099, 4294901760
    %4650 = vmatmul.mubr.f32.gmra.mrb[0].mxu0 %v4649
    %v4651 = vpop.f32.mrb[0].mxu0
    %v4652 = vadd.f32 %v4533, %v4651
    %v4653 = vpop.f32.mrb[0].mxu0
    %4654 = vdwg.mxu0
    %4655 = vmatprep.subr.mxu0 0.0
    %v4656 = vand.u32 %v862, 4294901760
    %4657 = vmatpush1.msra.mxu0 %v4656
    %4658 = vmatprep.subr.mxu0 0.0
    %v4659 = vand.u32 %v863, 4294901760
    %4660 = vmatpush1.msra.mxu0 %v4659
    %4661 = vmatprep.subr.mxu0 0.0
    %v4662 = vand.u32 %v864, 4294901760
    %4663 = vmatpush1.msra.mxu0 %v4662
    %4664 = vmatprep.subr.mxu0 0.0
    %v4665 = vand.u32 %v865, 4294901760
    %4666 = vmatpush1.msra.mxu0 %v4665
    %4667 = vmatprep.subr.mxu0 0.0
    %v4668 = vand.u32 %v866, 4294901760
    %4669 = vmatpush1.msra.mxu0 %v4668
    %4670 = vmatprep.subr.mxu0 0.0
    %v4671 = vand.u32 %v867, 4294901760
    %4672 = vmatpush1.msra.mxu0 %v4671
    %4673 = vmatprep.subr.mxu0 0.0
    %v4674 = vand.u32 %v868, 4294901760
    %4675 = vmatpush1.msra.mxu0 %v4674
    %4676 = vmatprep.subr.mxu0 0.0
    %v4677 = vand.u32 %v869, 4294901760
    %4678 = vmatpush1.msra.mxu0 %v4677
    %4679 = vmatprep.subr.mxu0 0.0
    %v4680 = vand.u32 %v870, 4294901760
    %4681 = vmatpush1.msra.mxu0 %v4680
    %4682 = vmatprep.subr.mxu0 0.0
    %v4683 = vand.u32 %v871, 4294901760
    %4684 = vmatpush1.msra.mxu0 %v4683
    %4685 = vmatprep.subr.mxu0 0.0
    %v4686 = vand.u32 %v872, 4294901760
    %4687 = vmatpush1.msra.mxu0 %v4686
    %4688 = vmatprep.subr.mxu0 0.0
    %v4689 = vand.u32 %v873, 4294901760
    %4690 = vmatpush1.msra.mxu0 %v4689
    %4691 = vmatprep.subr.mxu0 0.0
    %v4692 = vand.u32 %v874, 4294901760
    %4693 = vmatpush1.msra.mxu0 %v4692
    %4694 = vmatprep.subr.mxu0 0.0
    %v4695 = vand.u32 %v875, 4294901760
    %4696 = vmatpush1.msra.mxu0 %v4695
    %4697 = vmatprep.subr.mxu0 0.0
    %v4698 = vand.u32 %v876, 4294901760
    %4699 = vmatpush1.msra.mxu0 %v4698
    %4700 = vmatprep.subr.mxu0 0.0
    %v4701 = vand.u32 %v877, 4294901760
    %4702 = vmatpush1.msra.mxu0 %v4701
    %4703 = vmatprep.subr.mxu0 0.0
    %4704 = vmatpush1.msra.mxu0 0.0
    %4705 = vmatprep.subr.mxu0 0.0
    %4706 = vmatpush1.msra.mxu0 0.0
    %4707 = vmatprep.subr.mxu0 0.0
    %4708 = vmatpush1.msra.mxu0 0.0
    %4709 = vmatprep.subr.mxu0 0.0
    %4710 = vmatpush1.msra.mxu0 0.0
    %4711 = vmatprep.subr.mxu0 0.0
    %4712 = vmatpush1.msra.mxu0 0.0
    %4713 = vmatprep.subr.mxu0 0.0
    %4714 = vmatpush1.msra.mxu0 0.0
    %4715 = vmatprep.subr.mxu0 0.0
    %4716 = vmatpush1.msra.mxu0 0.0
    %4717 = vmatprep.subr.mxu0 0.0
    %4718 = vmatpush1.msra.mxu0 0.0
    %4719 = vmatprep.subr.mxu0 0.0
    %4720 = vmatpush1.msra.mxu0 0.0
    %4721 = vmatprep.subr.mxu0 0.0
    %4722 = vmatpush1.msra.mxu0 0.0
    %4723 = vmatprep.subr.mxu0 0.0
    %4724 = vmatpush1.msra.mxu0 0.0
    %4725 = vmatprep.subr.mxu0 0.0
    %4726 = vmatpush1.msra.mxu0 0.0
    %4727 = vmatprep.subr.mxu0 0.0
    %4728 = vmatpush1.msra.mxu0 0.0
    %4729 = vmatprep.subr.mxu0 0.0
    %4730 = vmatpush1.msra.mxu0 0.0
    %4731 = vmatprep.subr.mxu0 0.0
    %4732 = vmatpush1.msra.mxu0 0.0
    %4733 = vmatprep.subr.mxu0 0.0
    %4734 = vmatpush1.msra.mxu0 0.0
    %4735 = vmatprep.mubr.f32.mxu0 0.0
    %v4736 = vand.u32 %v4099, 4294901760
    %4737 = vmatmul.mubr.f32.gmra.mrb[0].mxu0 %v4736
    %v4738 = vpop.f32.mrb[0].mxu0
    %v4739 = vadd.f32 %v4652, %v4738
    %v4740 = vpop.f32.mrb[0].mxu0
    %4741 = vdwg.mxu0
    %v4742 = vadd.f32 %v4100, %v4739
    %v4743 = vtanh.pop %v4742
    %v4744 = vld [vmem:[#allocation2 + $0x38] sm:$0xff]
    %4745 = vmatprep.subr.mxu0 0.0
    %v4746 = vand.u32 %v862, 4294901760
    %4747 = vmatpush1.msra.mxu0 %v4746
    %4748 = vmatprep.subr.mxu0 0.0
    %v4749 = vand.u32 %v863, 4294901760
    %4750 = vmatpush1.msra.mxu0 %v4749
    %4751 = vmatprep.subr.mxu0 0.0
    %v4752 = vand.u32 %v864, 4294901760
    %4753 = vmatpush1.msra.mxu0 %v4752
    %4754 = vmatprep.subr.mxu0 0.0
    %v4755 = vand.u32 %v865, 4294901760
    %4756 = vmatpush1.msra.mxu0 %v4755
    %4757 = vmatprep.subr.mxu0 0.0
    %v4758 = vand.u32 %v866, 4294901760
    %4759 = vmatpush1.msra.mxu0 %v4758
    %4760 = vmatprep.subr.mxu0 0.0
    %v4761 = vand.u32 %v867, 4294901760
    %4762 = vmatpush1.msra.mxu0 %v4761
    %4763 = vmatprep.subr.mxu0 0.0
    %v4764 = vand.u32 %v868, 4294901760
    %4765 = vmatpush1.msra.mxu0 %v4764
    %4766 = vmatprep.subr.mxu0 0.0
    %v4767 = vand.u32 %v869, 4294901760
    %4768 = vmatpush1.msra.mxu0 %v4767
    %4769 = vmatprep.subr.mxu0 0.0
    %v4770 = vand.u32 %v870, 4294901760
    %4771 = vmatpush1.msra.mxu0 %v4770
    %4772 = vmatprep.subr.mxu0 0.0
    %v4773 = vand.u32 %v871, 4294901760
    %4774 = vmatpush1.msra.mxu0 %v4773
    %4775 = vmatprep.subr.mxu0 0.0
    %v4776 = vand.u32 %v872, 4294901760
    %4777 = vmatpush1.msra.mxu0 %v4776
    %4778 = vmatprep.subr.mxu0 0.0
    %v4779 = vand.u32 %v873, 4294901760
    %4780 = vmatpush1.msra.mxu0 %v4779
    %4781 = vmatprep.subr.mxu0 0.0
    %v4782 = vand.u32 %v874, 4294901760
    %4783 = vmatpush1.msra.mxu0 %v4782
    %4784 = vmatprep.subr.mxu0 0.0
    %v4785 = vand.u32 %v875, 4294901760
    %4786 = vmatpush1.msra.mxu0 %v4785
    %4787 = vmatprep.subr.mxu0 0.0
    %v4788 = vand.u32 %v876, 4294901760
    %4789 = vmatpush1.msra.mxu0 %v4788
    %4790 = vmatprep.subr.mxu0 0.0
    %v4791 = vand.u32 %v877, 4294901760
    %4792 = vmatpush1.msra.mxu0 %v4791
    %4793 = vmatprep.subr.mxu0 0.0
    %4794 = vmatpush1.msra.mxu0 0.0
    %4795 = vmatprep.subr.mxu0 0.0
    %4796 = vmatpush1.msra.mxu0 0.0
    %4797 = vmatprep.subr.mxu0 0.0
    %4798 = vmatpush1.msra.mxu0 0.0
    %4799 = vmatprep.subr.mxu0 0.0
    %4800 = vmatpush1.msra.mxu0 0.0
    %4801 = vmatprep.subr.mxu0 0.0
    %4802 = vmatpush1.msra.mxu0 0.0
    %4803 = vmatprep.subr.mxu0 0.0
    %4804 = vmatpush1.msra.mxu0 0.0
    %4805 = vmatprep.subr.mxu0 0.0
    %4806 = vmatpush1.msra.mxu0 0.0
    %4807 = vmatprep.subr.mxu0 0.0
    %4808 = vmatpush1.msra.mxu0 0.0
    %4809 = vmatprep.subr.mxu0 0.0
    %4810 = vmatpush1.msra.mxu0 0.0
    %4811 = vmatprep.subr.mxu0 0.0
    %4812 = vmatpush1.msra.mxu0 0.0
    %4813 = vmatprep.subr.mxu0 0.0
    %4814 = vmatpush1.msra.mxu0 0.0
    %4815 = vmatprep.subr.mxu0 0.0
    %4816 = vmatpush1.msra.mxu0 0.0
    %4817 = vmatprep.subr.mxu0 0.0
    %4818 = vmatpush1.msra.mxu0 0.0
    %4819 = vmatprep.subr.mxu0 0.0
    %4820 = vmatpush1.msra.mxu0 0.0
    %4821 = vmatprep.subr.mxu0 0.0
    %4822 = vmatpush1.msra.mxu0 0.0
    %4823 = vmatprep.subr.mxu0 0.0
    %4824 = vmatpush1.msra.mxu0 0.0
    %4825 = vmatprep.mubr.f32.mxu0 0.0
    %v4826 = vand.u32 %v4743, 4294901760
    %v4827 = vsub.f32 %v4743, %v4826
    %v4828 = vand.u32 %v4827, 4294901760
    %v4829 = vsub.f32 %v4827, %v4828
    %v4830 = vand.u32 %v4829, 4294901760
    %4831 = vmatmul.mubr.f32.gmra.mrb[0].mxu0 %v4830
    %v4832 = vpop.f32.mrb[0].mxu0
    %v4833 = vadd.f32 0.0, %v4832
    %v4834 = vpop.f32.mrb[0].mxu0
    %4835 = vdwg.mxu0
    %4836 = vmatprep.subr.mxu0 0.0
    %v4837 = vand.u32 %v862, 4294901760
    %v4838 = vsub.f32 %v862, %v4837
    %v4839 = vand.u32 %v4838, 4294901760
    %v4840 = vsub.f32 %v4838, %v4839
    %v4841 = vand.u32 %v4840, 4294901760
    %4842 = vmatpush1.msra.mxu0 %v4841
    %4843 = vmatprep.subr.mxu0 0.0
    %v4844 = vand.u32 %v863, 4294901760
    %v4845 = vsub.f32 %v863, %v4844
    %v4846 = vand.u32 %v4845, 4294901760
    %v4847 = vsub.f32 %v4845, %v4846
    %v4848 = vand.u32 %v4847, 4294901760
    %4849 = vmatpush1.msra.mxu0 %v4848
    %4850 = vmatprep.subr.mxu0 0.0
    %v4851 = vand.u32 %v864, 4294901760
    %v4852 = vsub.f32 %v864, %v4851
    %v4853 = vand.u32 %v4852, 4294901760
    %v4854 = vsub.f32 %v4852, %v4853
    %v4855 = vand.u32 %v4854, 4294901760
    %4856 = vmatpush1.msra.mxu0 %v4855
    %4857 = vmatprep.subr.mxu0 0.0
    %v4858 = vand.u32 %v865, 4294901760
    %v4859 = vsub.f32 %v865, %v4858
    %v4860 = vand.u32 %v4859, 4294901760
    %v4861 = vsub.f32 %v4859, %v4860
    %v4862 = vand.u32 %v4861, 4294901760
    %4863 = vmatpush1.msra.mxu0 %v4862
    %4864 = vmatprep.subr.mxu0 0.0
    %v4865 = vand.u32 %v866, 4294901760
    %v4866 = vsub.f32 %v866, %v4865
    %v4867 = vand.u32 %v4866, 4294901760
    %v4868 = vsub.f32 %v4866, %v4867
    %v4869 = vand.u32 %v4868, 4294901760
    %4870 = vmatpush1.msra.mxu0 %v4869
    %4871 = vmatprep.subr.mxu0 0.0
    %v4872 = vand.u32 %v867, 4294901760
    %v4873 = vsub.f32 %v867, %v4872
    %v4874 = vand.u32 %v4873, 4294901760
    %v4875 = vsub.f32 %v4873, %v4874
    %v4876 = vand.u32 %v4875, 4294901760
    %4877 = vmatpush1.msra.mxu0 %v4876
    %4878 = vmatprep.subr.mxu0 0.0
    %v4879 = vand.u32 %v868, 4294901760
    %v4880 = vsub.f32 %v868, %v4879
    %v4881 = vand.u32 %v4880, 4294901760
    %v4882 = vsub.f32 %v4880, %v4881
    %v4883 = vand.u32 %v4882, 4294901760
    %4884 = vmatpush1.msra.mxu0 %v4883
    %4885 = vmatprep.subr.mxu0 0.0
    %v4886 = vand.u32 %v869, 4294901760
    %v4887 = vsub.f32 %v869, %v4886
    %v4888 = vand.u32 %v4887, 4294901760
    %v4889 = vsub.f32 %v4887, %v4888
    %v4890 = vand.u32 %v4889, 4294901760
    %4891 = vmatpush1.msra.mxu0 %v4890
    %4892 = vmatprep.subr.mxu0 0.0
    %v4893 = vand.u32 %v870, 4294901760
    %v4894 = vsub.f32 %v870, %v4893
    %v4895 = vand.u32 %v4894, 4294901760
    %v4896 = vsub.f32 %v4894, %v4895
    %v4897 = vand.u32 %v4896, 4294901760
    %4898 = vmatpush1.msra.mxu0 %v4897
    %4899 = vmatprep.subr.mxu0 0.0
    %v4900 = vand.u32 %v871, 4294901760
    %v4901 = vsub.f32 %v871, %v4900
    %v4902 = vand.u32 %v4901, 4294901760
    %v4903 = vsub.f32 %v4901, %v4902
    %v4904 = vand.u32 %v4903, 4294901760
    %4905 = vmatpush1.msra.mxu0 %v4904
    %4906 = vmatprep.subr.mxu0 0.0
    %v4907 = vand.u32 %v872, 4294901760
    %v4908 = vsub.f32 %v872, %v4907
    %v4909 = vand.u32 %v4908, 4294901760
    %v4910 = vsub.f32 %v4908, %v4909
    %v4911 = vand.u32 %v4910, 4294901760
    %4912 = vmatpush1.msra.mxu0 %v4911
    %4913 = vmatprep.subr.mxu0 0.0
    %v4914 = vand.u32 %v873, 4294901760
    %v4915 = vsub.f32 %v873, %v4914
    %v4916 = vand.u32 %v4915, 4294901760
    %v4917 = vsub.f32 %v4915, %v4916
    %v4918 = vand.u32 %v4917, 4294901760
    %4919 = vmatpush1.msra.mxu0 %v4918
    %4920 = vmatprep.subr.mxu0 0.0
    %v4921 = vand.u32 %v874, 4294901760
    %v4922 = vsub.f32 %v874, %v4921
    %v4923 = vand.u32 %v4922, 4294901760
    %v4924 = vsub.f32 %v4922, %v4923
    %v4925 = vand.u32 %v4924, 4294901760
    %4926 = vmatpush1.msra.mxu0 %v4925
    %4927 = vmatprep.subr.mxu0 0.0
    %v4928 = vand.u32 %v875, 4294901760
    %v4929 = vsub.f32 %v875, %v4928
    %v4930 = vand.u32 %v4929, 4294901760
    %v4931 = vsub.f32 %v4929, %v4930
    %v4932 = vand.u32 %v4931, 4294901760
    %4933 = vmatpush1.msra.mxu0 %v4932
    %4934 = vmatprep.subr.mxu0 0.0
    %v4935 = vand.u32 %v876, 4294901760
    %v4936 = vsub.f32 %v876, %v4935
    %v4937 = vand.u32 %v4936, 4294901760
    %v4938 = vsub.f32 %v4936, %v4937
    %v4939 = vand.u32 %v4938, 4294901760
    %4940 = vmatpush1.msra.mxu0 %v4939
    %4941 = vmatprep.subr.mxu0 0.0
    %v4942 = vand.u32 %v877, 4294901760
    %v4943 = vsub.f32 %v877, %v4942
    %v4944 = vand.u32 %v4943, 4294901760
    %v4945 = vsub.f32 %v4943, %v4944
    %v4946 = vand.u32 %v4945, 4294901760
    %4947 = vmatpush1.msra.mxu0 %v4946
    %4948 = vmatprep.subr.mxu0 0.0
    %4949 = vmatpush1.msra.mxu0 0.0
    %4950 = vmatprep.subr.mxu0 0.0
    %4951 = vmatpush1.msra.mxu0 0.0
    %4952 = vmatprep.subr.mxu0 0.0
    %4953 = vmatpush1.msra.mxu0 0.0
    %4954 = vmatprep.subr.mxu0 0.0
    %4955 = vmatpush1.msra.mxu0 0.0
    %4956 = vmatprep.subr.mxu0 0.0
    %4957 = vmatpush1.msra.mxu0 0.0
    %4958 = vmatprep.subr.mxu0 0.0
    %4959 = vmatpush1.msra.mxu0 0.0
    %4960 = vmatprep.subr.mxu0 0.0
    %4961 = vmatpush1.msra.mxu0 0.0
    %4962 = vmatprep.subr.mxu0 0.0
    %4963 = vmatpush1.msra.mxu0 0.0
    %4964 = vmatprep.subr.mxu0 0.0
    %4965 = vmatpush1.msra.mxu0 0.0
    %4966 = vmatprep.subr.mxu0 0.0
    %4967 = vmatpush1.msra.mxu0 0.0
    %4968 = vmatprep.subr.mxu0 0.0
    %4969 = vmatpush1.msra.mxu0 0.0
    %4970 = vmatprep.subr.mxu0 0.0
    %4971 = vmatpush1.msra.mxu0 0.0
    %4972 = vmatprep.subr.mxu0 0.0
    %4973 = vmatpush1.msra.mxu0 0.0
    %4974 = vmatprep.subr.mxu0 0.0
    %4975 = vmatpush1.msra.mxu0 0.0
    %4976 = vmatprep.subr.mxu0 0.0
    %4977 = vmatpush1.msra.mxu0 0.0
    %4978 = vmatprep.subr.mxu0 0.0
    %4979 = vmatpush1.msra.mxu0 0.0
    %4980 = vmatprep.mubr.f32.mxu0 0.0
    %v4981 = vand.u32 %v4743, 4294901760
    %4982 = vmatmul.mubr.f32.gmra.mrb[0].mxu0 %v4981
    %v4983 = vpop.f32.mrb[0].mxu0
    %v4984 = vadd.f32 %v4833, %v4983
    %v4985 = vpop.f32.mrb[0].mxu0
    %4986 = vdwg.mxu0
    %4987 = vmatprep.subr.mxu0 0.0
    %v4988 = vand.u32 %v862, 4294901760
    %v4989 = vsub.f32 %v862, %v4988
    %4990 = vmatpush1.msra.mxu0 %v4989
    %4991 = vmatprep.subr.mxu0 0.0
    %v4992 = vand.u32 %v863, 4294901760
    %v4993 = vsub.f32 %v863, %v4992
    %4994 = vmatpush1.msra.mxu0 %v4993
    %4995 = vmatprep.subr.mxu0 0.0
    %v4996 = vand.u32 %v864, 4294901760
    %v4997 = vsub.f32 %v864, %v4996
    %4998 = vmatpush1.msra.mxu0 %v4997
    %4999 = vmatprep.subr.mxu0 0.0
    %v5000 = vand.u32 %v865, 4294901760
    %v5001 = vsub.f32 %v865, %v5000
    %5002 = vmatpush1.msra.mxu0 %v5001
    %5003 = vmatprep.subr.mxu0 0.0
    %v5004 = vand.u32 %v866, 4294901760
    %v5005 = vsub.f32 %v866, %v5004
    %5006 = vmatpush1.msra.mxu0 %v5005
    %5007 = vmatprep.subr.mxu0 0.0
    %v5008 = vand.u32 %v867, 4294901760
    %v5009 = vsub.f32 %v867, %v5008
    %5010 = vmatpush1.msra.mxu0 %v5009
    %5011 = vmatprep.subr.mxu0 0.0
    %v5012 = vand.u32 %v868, 4294901760
    %v5013 = vsub.f32 %v868, %v5012
    %5014 = vmatpush1.msra.mxu0 %v5013
    %5015 = vmatprep.subr.mxu0 0.0
    %v5016 = vand.u32 %v869, 4294901760
    %v5017 = vsub.f32 %v869, %v5016
    %5018 = vmatpush1.msra.mxu0 %v5017
    %5019 = vmatprep.subr.mxu0 0.0
    %v5020 = vand.u32 %v870, 4294901760
    %v5021 = vsub.f32 %v870, %v5020
    %5022 = vmatpush1.msra.mxu0 %v5021
    %5023 = vmatprep.subr.mxu0 0.0
    %v5024 = vand.u32 %v871, 4294901760
    %v5025 = vsub.f32 %v871, %v5024
    %5026 = vmatpush1.msra.mxu0 %v5025
    %5027 = vmatprep.subr.mxu0 0.0
    %v5028 = vand.u32 %v872, 4294901760
    %v5029 = vsub.f32 %v872, %v5028
    %5030 = vmatpush1.msra.mxu0 %v5029
    %5031 = vmatprep.subr.mxu0 0.0
    %v5032 = vand.u32 %v873, 4294901760
    %v5033 = vsub.f32 %v873, %v5032
    %5034 = vmatpush1.msra.mxu0 %v5033
    %5035 = vmatprep.subr.mxu0 0.0
    %v5036 = vand.u32 %v874, 4294901760
    %v5037 = vsub.f32 %v874, %v5036
    %5038 = vmatpush1.msra.mxu0 %v5037
    %5039 = vmatprep.subr.mxu0 0.0
    %v5040 = vand.u32 %v875, 4294901760
    %v5041 = vsub.f32 %v875, %v5040
    %5042 = vmatpush1.msra.mxu0 %v5041
    %5043 = vmatprep.subr.mxu0 0.0
    %v5044 = vand.u32 %v876, 4294901760
    %v5045 = vsub.f32 %v876, %v5044
    %5046 = vmatpush1.msra.mxu0 %v5045
    %5047 = vmatprep.subr.mxu0 0.0
    %v5048 = vand.u32 %v877, 4294901760
    %v5049 = vsub.f32 %v877, %v5048
    %5050 = vmatpush1.msra.mxu0 %v5049
    %5051 = vmatprep.subr.mxu0 0.0
    %5052 = vmatpush1.msra.mxu0 0.0
    %5053 = vmatprep.subr.mxu0 0.0
    %5054 = vmatpush1.msra.mxu0 0.0
    %5055 = vmatprep.subr.mxu0 0.0
    %5056 = vmatpush1.msra.mxu0 0.0
    %5057 = vmatprep.subr.mxu0 0.0
    %5058 = vmatpush1.msra.mxu0 0.0
    %5059 = vmatprep.subr.mxu0 0.0
    %5060 = vmatpush1.msra.mxu0 0.0
    %5061 = vmatprep.subr.mxu0 0.0
    %5062 = vmatpush1.msra.mxu0 0.0
    %5063 = vmatprep.subr.mxu0 0.0
    %5064 = vmatpush1.msra.mxu0 0.0
    %5065 = vmatprep.subr.mxu0 0.0
    %5066 = vmatpush1.msra.mxu0 0.0
    %5067 = vmatprep.subr.mxu0 0.0
    %5068 = vmatpush1.msra.mxu0 0.0
    %5069 = vmatprep.subr.mxu0 0.0
    %5070 = vmatpush1.msra.mxu0 0.0
    %5071 = vmatprep.subr.mxu0 0.0
    %5072 = vmatpush1.msra.mxu0 0.0
    %5073 = vmatprep.subr.mxu0 0.0
    %5074 = vmatpush1.msra.mxu0 0.0
    %5075 = vmatprep.subr.mxu0 0.0
    %5076 = vmatpush1.msra.mxu0 0.0
    %5077 = vmatprep.subr.mxu0 0.0
    %5078 = vmatpush1.msra.mxu0 0.0
    %5079 = vmatprep.subr.mxu0 0.0
    %5080 = vmatpush1.msra.mxu0 0.0
    %5081 = vmatprep.subr.mxu0 0.0
    %5082 = vmatpush1.msra.mxu0 0.0
    %5083 = vmatprep.mubr.f32.mxu0 0.0
    %v5084 = vand.u32 %v4743, 4294901760
    %v5085 = vsub.f32 %v4743, %v5084
    %5086 = vmatmul.mubr.f32.gmra.mrb[0].mxu0 %v5085
    %v5087 = vpop.f32.mrb[0].mxu0
    %v5088 = vadd.f32 %v4984, %v5087
    %v5089 = vpop.f32.mrb[0].mxu0
    %5090 = vdwg.mxu0
    %5091 = vmatprep.subr.mxu0 0.0
    %v5092 = vand.u32 %v862, 4294901760
    %5093 = vmatpush1.msra.mxu0 %v5092
    %5094 = vmatprep.subr.mxu0 0.0
    %v5095 = vand.u32 %v863, 4294901760
    %5096 = vmatpush1.msra.mxu0 %v5095
    %5097 = vmatprep.subr.mxu0 0.0
    %v5098 = vand.u32 %v864, 4294901760
    %5099 = vmatpush1.msra.mxu0 %v5098
    %5100 = vmatprep.subr.mxu0 0.0
    %v5101 = vand.u32 %v865, 4294901760
    %5102 = vmatpush1.msra.mxu0 %v5101
    %5103 = vmatprep.subr.mxu0 0.0
    %v5104 = vand.u32 %v866, 4294901760
    %5105 = vmatpush1.msra.mxu0 %v5104
    %5106 = vmatprep.subr.mxu0 0.0
    %v5107 = vand.u32 %v867, 4294901760
    %5108 = vmatpush1.msra.mxu0 %v5107
    %5109 = vmatprep.subr.mxu0 0.0
    %v5110 = vand.u32 %v868, 4294901760
    %5111 = vmatpush1.msra.mxu0 %v5110
    %5112 = vmatprep.subr.mxu0 0.0
    %v5113 = vand.u32 %v869, 4294901760
    %5114 = vmatpush1.msra.mxu0 %v5113
    %5115 = vmatprep.subr.mxu0 0.0
    %v5116 = vand.u32 %v870, 4294901760
    %5117 = vmatpush1.msra.mxu0 %v5116
    %5118 = vmatprep.subr.mxu0 0.0
    %v5119 = vand.u32 %v871, 4294901760
    %5120 = vmatpush1.msra.mxu0 %v5119
    %5121 = vmatprep.subr.mxu0 0.0
    %v5122 = vand.u32 %v872, 4294901760
    %5123 = vmatpush1.msra.mxu0 %v5122
    %5124 = vmatprep.subr.mxu0 0.0
    %v5125 = vand.u32 %v873, 4294901760
    %5126 = vmatpush1.msra.mxu0 %v5125
    %5127 = vmatprep.subr.mxu0 0.0
    %v5128 = vand.u32 %v874, 4294901760
    %5129 = vmatpush1.msra.mxu0 %v5128
    %5130 = vmatprep.subr.mxu0 0.0
    %v5131 = vand.u32 %v875, 4294901760
    %5132 = vmatpush1.msra.mxu0 %v5131
    %5133 = vmatprep.subr.mxu0 0.0
    %v5134 = vand.u32 %v876, 4294901760
    %5135 = vmatpush1.msra.mxu0 %v5134
    %5136 = vmatprep.subr.mxu0 0.0
    %v5137 = vand.u32 %v877, 4294901760
    %5138 = vmatpush1.msra.mxu0 %v5137
    %5139 = vmatprep.subr.mxu0 0.0
    %5140 = vmatpush1.msra.mxu0 0.0
    %5141 = vmatprep.subr.mxu0 0.0
    %5142 = vmatpush1.msra.mxu0 0.0
    %5143 = vmatprep.subr.mxu0 0.0
    %5144 = vmatpush1.msra.mxu0 0.0
    %5145 = vmatprep.subr.mxu0 0.0
    %5146 = vmatpush1.msra.mxu0 0.0
    %5147 = vmatprep.subr.mxu0 0.0
    %5148 = vmatpush1.msra.mxu0 0.0
    %5149 = vmatprep.subr.mxu0 0.0
    %5150 = vmatpush1.msra.mxu0 0.0
    %5151 = vmatprep.subr.mxu0 0.0
    %5152 = vmatpush1.msra.mxu0 0.0
    %5153 = vmatprep.subr.mxu0 0.0
    %5154 = vmatpush1.msra.mxu0 0.0
    %5155 = vmatprep.subr.mxu0 0.0
    %5156 = vmatpush1.msra.mxu0 0.0
    %5157 = vmatprep.subr.mxu0 0.0
    %5158 = vmatpush1.msra.mxu0 0.0
    %5159 = vmatprep.subr.mxu0 0.0
    %5160 = vmatpush1.msra.mxu0 0.0
    %5161 = vmatprep.subr.mxu0 0.0
    %5162 = vmatpush1.msra.mxu0 0.0
    %5163 = vmatprep.subr.mxu0 0.0
    %5164 = vmatpush1.msra.mxu0 0.0
    %5165 = vmatprep.subr.mxu0 0.0
    %5166 = vmatpush1.msra.mxu0 0.0
    %5167 = vmatprep.subr.mxu0 0.0
    %5168 = vmatpush1.msra.mxu0 0.0
    %5169 = vmatprep.subr.mxu0 0.0
    %5170 = vmatpush1.msra.mxu0 0.0
    %5171 = vmatprep.mubr.f32.mxu0 0.0
    %v5172 = vand.u32 %v4743, 4294901760
    %v5173 = vsub.f32 %v4743, %v5172
    %v5174 = vand.u32 %v5173, 4294901760
    %5175 = vmatmul.mubr.f32.gmra.mrb[0].mxu0 %v5174
    %v5176 = vpop.f32.mrb[0].mxu0
    %v5177 = vadd.f32 %v5088, %v5176
    %v5178 = vpop.f32.mrb[0].mxu0
    %5179 = vdwg.mxu0
    %5180 = vmatprep.subr.mxu0 0.0
    %v5181 = vand.u32 %v862, 4294901760
    %v5182 = vsub.f32 %v862, %v5181
    %v5183 = vand.u32 %v5182, 4294901760
    %5184 = vmatpush1.msra.mxu0 %v5183
    %5185 = vmatprep.subr.mxu0 0.0
    %v5186 = vand.u32 %v863, 4294901760
    %v5187 = vsub.f32 %v863, %v5186
    %v5188 = vand.u32 %v5187, 4294901760
    %5189 = vmatpush1.msra.mxu0 %v5188
    %5190 = vmatprep.subr.mxu0 0.0
    %v5191 = vand.u32 %v864, 4294901760
    %v5192 = vsub.f32 %v864, %v5191
    %v5193 = vand.u32 %v5192, 4294901760
    %5194 = vmatpush1.msra.mxu0 %v5193
    %5195 = vmatprep.subr.mxu0 0.0
    %v5196 = vand.u32 %v865, 4294901760
    %v5197 = vsub.f32 %v865, %v5196
    %v5198 = vand.u32 %v5197, 4294901760
    %5199 = vmatpush1.msra.mxu0 %v5198
    %5200 = vmatprep.subr.mxu0 0.0
    %v5201 = vand.u32 %v866, 4294901760
    %v5202 = vsub.f32 %v866, %v5201
    %v5203 = vand.u32 %v5202, 4294901760
    %5204 = vmatpush1.msra.mxu0 %v5203
    %5205 = vmatprep.subr.mxu0 0.0
    %v5206 = vand.u32 %v867, 4294901760
    %v5207 = vsub.f32 %v867, %v5206
    %v5208 = vand.u32 %v5207, 4294901760
    %5209 = vmatpush1.msra.mxu0 %v5208
    %5210 = vmatprep.subr.mxu0 0.0
    %v5211 = vand.u32 %v868, 4294901760
    %v5212 = vsub.f32 %v868, %v5211
    %v5213 = vand.u32 %v5212, 4294901760
    %5214 = vmatpush1.msra.mxu0 %v5213
    %5215 = vmatprep.subr.mxu0 0.0
    %v5216 = vand.u32 %v869, 4294901760
    %v5217 = vsub.f32 %v869, %v5216
    %v5218 = vand.u32 %v5217, 4294901760
    %5219 = vmatpush1.msra.mxu0 %v5218
    %5220 = vmatprep.subr.mxu0 0.0
    %v5221 = vand.u32 %v870, 4294901760
    %v5222 = vsub.f32 %v870, %v5221
    %v5223 = vand.u32 %v5222, 4294901760
    %5224 = vmatpush1.msra.mxu0 %v5223
    %5225 = vmatprep.subr.mxu0 0.0
    %v5226 = vand.u32 %v871, 4294901760
    %v5227 = vsub.f32 %v871, %v5226
    %v5228 = vand.u32 %v5227, 4294901760
    %5229 = vmatpush1.msra.mxu0 %v5228
    %5230 = vmatprep.subr.mxu0 0.0
    %v5231 = vand.u32 %v872, 4294901760
    %v5232 = vsub.f32 %v872, %v5231
    %v5233 = vand.u32 %v5232, 4294901760
    %5234 = vmatpush1.msra.mxu0 %v5233
    %5235 = vmatprep.subr.mxu0 0.0
    %v5236 = vand.u32 %v873, 4294901760
    %v5237 = vsub.f32 %v873, %v5236
    %v5238 = vand.u32 %v5237, 4294901760
    %5239 = vmatpush1.msra.mxu0 %v5238
    %5240 = vmatprep.subr.mxu0 0.0
    %v5241 = vand.u32 %v874, 4294901760
    %v5242 = vsub.f32 %v874, %v5241
    %v5243 = vand.u32 %v5242, 4294901760
    %5244 = vmatpush1.msra.mxu0 %v5243
    %5245 = vmatprep.subr.mxu0 0.0
    %v5246 = vand.u32 %v875, 4294901760
    %v5247 = vsub.f32 %v875, %v5246
    %v5248 = vand.u32 %v5247, 4294901760
    %5249 = vmatpush1.msra.mxu0 %v5248
    %5250 = vmatprep.subr.mxu0 0.0
    %v5251 = vand.u32 %v876, 4294901760
    %v5252 = vsub.f32 %v876, %v5251
    %v5253 = vand.u32 %v5252, 4294901760
    %5254 = vmatpush1.msra.mxu0 %v5253
    %5255 = vmatprep.subr.mxu0 0.0
    %v5256 = vand.u32 %v877, 4294901760
    %v5257 = vsub.f32 %v877, %v5256
    %v5258 = vand.u32 %v5257, 4294901760
    %5259 = vmatpush1.msra.mxu0 %v5258
    %5260 = vmatprep.subr.mxu0 0.0
    %5261 = vmatpush1.msra.mxu0 0.0
    %5262 = vmatprep.subr.mxu0 0.0
    %5263 = vmatpush1.msra.mxu0 0.0
    %5264 = vmatprep.subr.mxu0 0.0
    %5265 = vmatpush1.msra.mxu0 0.0
    %5266 = vmatprep.subr.mxu0 0.0
    %5267 = vmatpush1.msra.mxu0 0.0
    %5268 = vmatprep.subr.mxu0 0.0
    %5269 = vmatpush1.msra.mxu0 0.0
    %5270 = vmatprep.subr.mxu0 0.0
    %5271 = vmatpush1.msra.mxu0 0.0
    %5272 = vmatprep.subr.mxu0 0.0
    %5273 = vmatpush1.msra.mxu0 0.0
    %5274 = vmatprep.subr.mxu0 0.0
    %5275 = vmatpush1.msra.mxu0 0.0
    %5276 = vmatprep.subr.mxu0 0.0
    %5277 = vmatpush1.msra.mxu0 0.0
    %5278 = vmatprep.subr.mxu0 0.0
    %5279 = vmatpush1.msra.mxu0 0.0
    %5280 = vmatprep.subr.mxu0 0.0
    %5281 = vmatpush1.msra.mxu0 0.0
    %5282 = vmatprep.subr.mxu0 0.0
    %5283 = vmatpush1.msra.mxu0 0.0
    %5284 = vmatprep.subr.mxu0 0.0
    %5285 = vmatpush1.msra.mxu0 0.0
    %5286 = vmatprep.subr.mxu0 0.0
    %5287 = vmatpush1.msra.mxu0 0.0
    %5288 = vmatprep.subr.mxu0 0.0
    %5289 = vmatpush1.msra.mxu0 0.0
    %5290 = vmatprep.subr.mxu0 0.0
    %5291 = vmatpush1.msra.mxu0 0.0
    %5292 = vmatprep.mubr.f32.mxu0 0.0
    %v5293 = vand.u32 %v4743, 4294901760
    %5294 = vmatmul.mubr.f32.gmra.mrb[0].mxu0 %v5293
    %v5295 = vpop.f32.mrb[0].mxu0
    %v5296 = vadd.f32 %v5177, %v5295
    %v5297 = vpop.f32.mrb[0].mxu0
    %5298 = vdwg.mxu0
    %5299 = vmatprep.subr.mxu0 0.0
    %v5300 = vand.u32 %v862, 4294901760
    %5301 = vmatpush1.msra.mxu0 %v5300
    %5302 = vmatprep.subr.mxu0 0.0
    %v5303 = vand.u32 %v863, 4294901760
    %5304 = vmatpush1.msra.mxu0 %v5303
    %5305 = vmatprep.subr.mxu0 0.0
    %v5306 = vand.u32 %v864, 4294901760
    %5307 = vmatpush1.msra.mxu0 %v5306
    %5308 = vmatprep.subr.mxu0 0.0
    %v5309 = vand.u32 %v865, 4294901760
    %5310 = vmatpush1.msra.mxu0 %v5309
    %5311 = vmatprep.subr.mxu0 0.0
    %v5312 = vand.u32 %v866, 4294901760
    %5313 = vmatpush1.msra.mxu0 %v5312
    %5314 = vmatprep.subr.mxu0 0.0
    %v5315 = vand.u32 %v867, 4294901760
    %5316 = vmatpush1.msra.mxu0 %v5315
    %5317 = vmatprep.subr.mxu0 0.0
    %v5318 = vand.u32 %v868, 4294901760
    %5319 = vmatpush1.msra.mxu0 %v5318
    %5320 = vmatprep.subr.mxu0 0.0
    %v5321 = vand.u32 %v869, 4294901760
    %5322 = vmatpush1.msra.mxu0 %v5321
    %5323 = vmatprep.subr.mxu0 0.0
    %v5324 = vand.u32 %v870, 4294901760
    %5325 = vmatpush1.msra.mxu0 %v5324
    %5326 = vmatprep.subr.mxu0 0.0
    %v5327 = vand.u32 %v871, 4294901760
    %5328 = vmatpush1.msra.mxu0 %v5327
    %5329 = vmatprep.subr.mxu0 0.0
    %v5330 = vand.u32 %v872, 4294901760
    %5331 = vmatpush1.msra.mxu0 %v5330
    %5332 = vmatprep.subr.mxu0 0.0
    %v5333 = vand.u32 %v873, 4294901760
    %5334 = vmatpush1.msra.mxu0 %v5333
    %5335 = vmatprep.subr.mxu0 0.0
    %v5336 = vand.u32 %v874, 4294901760
    %5337 = vmatpush1.msra.mxu0 %v5336
    %5338 = vmatprep.subr.mxu0 0.0
    %v5339 = vand.u32 %v875, 4294901760
    %5340 = vmatpush1.msra.mxu0 %v5339
    %5341 = vmatprep.subr.mxu0 0.0
    %v5342 = vand.u32 %v876, 4294901760
    %5343 = vmatpush1.msra.mxu0 %v5342
    %5344 = vmatprep.subr.mxu0 0.0
    %v5345 = vand.u32 %v877, 4294901760
    %5346 = vmatpush1.msra.mxu0 %v5345
    %5347 = vmatprep.subr.mxu0 0.0
    %5348 = vmatpush1.msra.mxu0 0.0
    %5349 = vmatprep.subr.mxu0 0.0
    %5350 = vmatpush1.msra.mxu0 0.0
    %5351 = vmatprep.subr.mxu0 0.0
    %5352 = vmatpush1.msra.mxu0 0.0
    %5353 = vmatprep.subr.mxu0 0.0
    %5354 = vmatpush1.msra.mxu0 0.0
    %5355 = vmatprep.subr.mxu0 0.0
    %5356 = vmatpush1.msra.mxu0 0.0
    %5357 = vmatprep.subr.mxu0 0.0
    %5358 = vmatpush1.msra.mxu0 0.0
    %5359 = vmatprep.subr.mxu0 0.0
    %5360 = vmatpush1.msra.mxu0 0.0
    %5361 = vmatprep.subr.mxu0 0.0
    %5362 = vmatpush1.msra.mxu0 0.0
    %5363 = vmatprep.subr.mxu0 0.0
    %5364 = vmatpush1.msra.mxu0 0.0
    %5365 = vmatprep.subr.mxu0 0.0
    %5366 = vmatpush1.msra.mxu0 0.0
    %5367 = vmatprep.subr.mxu0 0.0
    %5368 = vmatpush1.msra.mxu0 0.0
    %5369 = vmatprep.subr.mxu0 0.0
    %5370 = vmatpush1.msra.mxu0 0.0
    %5371 = vmatprep.subr.mxu0 0.0
    %5372 = vmatpush1.msra.mxu0 0.0
    %5373 = vmatprep.subr.mxu0 0.0
    %5374 = vmatpush1.msra.mxu0 0.0
    %5375 = vmatprep.subr.mxu0 0.0
    %5376 = vmatpush1.msra.mxu0 0.0
    %5377 = vmatprep.subr.mxu0 0.0
    %5378 = vmatpush1.msra.mxu0 0.0
    %5379 = vmatprep.mubr.f32.mxu0 0.0
    %v5380 = vand.u32 %v4743, 4294901760
    %5381 = vmatmul.mubr.f32.gmra.mrb[0].mxu0 %v5380
    %v5382 = vpop.f32.mrb[0].mxu0
    %v5383 = vadd.f32 %v5296, %v5382
    %v5384 = vpop.f32.mrb[0].mxu0
    %5385 = vdwg.mxu0
    %v5386 = vadd.f32 %v4744, %v5383
    %v5387 = vtanh.pop %v5386
    %v5388 = vld [vmem:[#allocation6] sm:$0xff]
    %v5389 = vld [vmem:[#allocation6 + $0x8] sm:$0xff]
    %v5390 = vld [vmem:[#allocation6 + $0x10] sm:$0xff]
    %v5391 = vld [vmem:[#allocation6 + $0x18] sm:$0xff]
    %v5392 = vld [vmem:[#allocation6 + $0x20] sm:$0xff]
    %v5393 = vld [vmem:[#allocation6 + $0x28] sm:$0xff]
    %v5394 = vld [vmem:[#allocation6 + $0x30] sm:$0xff]
    %v5395 = vld [vmem:[#allocation6 + $0x38] sm:$0xff]
    %v5396 = vld [vmem:[#allocation6 + $0x40] sm:$0xff]
    %v5397 = vld [vmem:[#allocation6 + $0x48] sm:$0xff]
    %v5398 = vld [vmem:[#allocation6 + $0x50] sm:$0xff]
    %v5399 = vld [vmem:[#allocation6 + $0x58] sm:$0xff]
    %v5400 = vld [vmem:[#allocation6 + $0x60] sm:$0xff]
    %v5401 = vld [vmem:[#allocation6 + $0x68] sm:$0xff]
    %v5402 = vld [vmem:[#allocation6 + $0x70] sm:$0xff]
    %v5403 = vld [vmem:[#allocation6 + $0x78] sm:$0xff]
    %v5404 = vld [vmem:[%s5] sm:$0x1]
    %v5406 = vlaneseq
    %v5407 = vshrl.u32 %v5406, 7
    %v5408 = vsub.s32 0, %v5407
    %v5409 = vrot.slane %v5404, %v5408
    %5411 = vmatprep.subr.mxu0 0.0
    %v5412 = vand.u32 %v5388, 4294901760
    %5413 = vmatpush1.msra.mxu0 %v5412
    %5414 = vmatprep.subr.mxu0 0.0
    %v5415 = vand.u32 %v5389, 4294901760
    %5416 = vmatpush1.msra.mxu0 %v5415
    %5417 = vmatprep.subr.mxu0 0.0
    %v5418 = vand.u32 %v5390, 4294901760
    %5419 = vmatpush1.msra.mxu0 %v5418
    %5420 = vmatprep.subr.mxu0 0.0
    %v5421 = vand.u32 %v5391, 4294901760
    %5422 = vmatpush1.msra.mxu0 %v5421
    %5423 = vmatprep.subr.mxu0 0.0
    %v5424 = vand.u32 %v5392, 4294901760
    %5425 = vmatpush1.msra.mxu0 %v5424
    %5426 = vmatprep.subr.mxu0 0.0
    %v5427 = vand.u32 %v5393, 4294901760
    %5428 = vmatpush1.msra.mxu0 %v5427
    %5429 = vmatprep.subr.mxu0 0.0
    %v5430 = vand.u32 %v5394, 4294901760
    %5431 = vmatpush1.msra.mxu0 %v5430
    %5432 = vmatprep.subr.mxu0 0.0
    %v5433 = vand.u32 %v5395, 4294901760
    %5434 = vmatpush1.msra.mxu0 %v5433
    %5435 = vmatprep.subr.mxu0 0.0
    %v5436 = vand.u32 %v5396, 4294901760
    %5437 = vmatpush1.msra.mxu0 %v5436
    %5438 = vmatprep.subr.mxu0 0.0
    %v5439 = vand.u32 %v5397, 4294901760
    %5440 = vmatpush1.msra.mxu0 %v5439
    %5441 = vmatprep.subr.mxu0 0.0
    %v5442 = vand.u32 %v5398, 4294901760
    %5443 = vmatpush1.msra.mxu0 %v5442
    %5444 = vmatprep.subr.mxu0 0.0
    %v5445 = vand.u32 %v5399, 4294901760
    %5446 = vmatpush1.msra.mxu0 %v5445
    %5447 = vmatprep.subr.mxu0 0.0
    %v5448 = vand.u32 %v5400, 4294901760
    %5449 = vmatpush1.msra.mxu0 %v5448
    %5450 = vmatprep.subr.mxu0 0.0
    %v5451 = vand.u32 %v5401, 4294901760
    %5452 = vmatpush1.msra.mxu0 %v5451
    %5453 = vmatprep.subr.mxu0 0.0
    %v5454 = vand.u32 %v5402, 4294901760
    %5455 = vmatpush1.msra.mxu0 %v5454
    %5456 = vmatprep.subr.mxu0 0.0
    %v5457 = vand.u32 %v5403, 4294901760
    %5458 = vmatpush1.msra.mxu0 %v5457
    %5459 = vmatprep.subr.mxu0 0.0
    %5460 = vmatpush1.msra.mxu0 0.0
    %5461 = vmatprep.subr.mxu0 0.0
    %5462 = vmatpush1.msra.mxu0 0.0
    %5463 = vmatprep.subr.mxu0 0.0
    %5464 = vmatpush1.msra.mxu0 0.0
    %5465 = vmatprep.subr.mxu0 0.0
    %5466 = vmatpush1.msra.mxu0 0.0
    %5467 = vmatprep.subr.mxu0 0.0
    %5468 = vmatpush1.msra.mxu0 0.0
    %5469 = vmatprep.subr.mxu0 0.0
    %5470 = vmatpush1.msra.mxu0 0.0
    %5471 = vmatprep.subr.mxu0 0.0
    %5472 = vmatpush1.msra.mxu0 0.0
    %5473 = vmatprep.subr.mxu0 0.0
    %5474 = vmatpush1.msra.mxu0 0.0
    %5475 = vmatprep.subr.mxu0 0.0
    %5476 = vmatpush1.msra.mxu0 0.0
    %5477 = vmatprep.subr.mxu0 0.0
    %5478 = vmatpush1.msra.mxu0 0.0
    %5479 = vmatprep.subr.mxu0 0.0
    %5480 = vmatpush1.msra.mxu0 0.0
    %5481 = vmatprep.subr.mxu0 0.0
    %5482 = vmatpush1.msra.mxu0 0.0
    %5483 = vmatprep.subr.mxu0 0.0
    %5484 = vmatpush1.msra.mxu0 0.0
    %5485 = vmatprep.subr.mxu0 0.0
    %5486 = vmatpush1.msra.mxu0 0.0
    %5487 = vmatprep.subr.mxu0 0.0
    %5488 = vmatpush1.msra.mxu0 0.0
    %5489 = vmatprep.subr.mxu0 0.0
    %5490 = vmatpush1.msra.mxu0 0.0
    %5491 = vmatprep.mubr.f32.mxu0 0.0
    %v5492 = vand.u32 %v5387, 4294901760
    %v5493 = vsub.f32 %v5387, %v5492
    %v5494 = vand.u32 %v5493, 4294901760
    %v5495 = vsub.f32 %v5493, %v5494
    %v5496 = vand.u32 %v5495, 4294901760
    %5497 = vmatmul.mubr.f32.gmra.mrb[0].mxu0 %v5496
    %v5498 = vpop.f32.mrb[0].mxu0
    %v5499 = vadd.f32 %v5409, %v5498
    %v5500 = vpop.f32.mrb[0].mxu0
    %5501 = vdwg.mxu0
    %5502 = vmatprep.subr.mxu0 0.0
    %v5503 = vand.u32 %v5388, 4294901760
    %v5504 = vsub.f32 %v5388, %v5503
    %v5505 = vand.u32 %v5504, 4294901760
    %v5506 = vsub.f32 %v5504, %v5505
    %v5507 = vand.u32 %v5506, 4294901760
    %5508 = vmatpush1.msra.mxu0 %v5507
    %5509 = vmatprep.subr.mxu0 0.0
    %v5510 = vand.u32 %v5389, 4294901760
    %v5511 = vsub.f32 %v5389, %v5510
    %v5512 = vand.u32 %v5511, 4294901760
    %v5513 = vsub.f32 %v5511, %v5512
    %v5514 = vand.u32 %v5513, 4294901760
    %5515 = vmatpush1.msra.mxu0 %v5514
    %5516 = vmatprep.subr.mxu0 0.0
    %v5517 = vand.u32 %v5390, 4294901760
    %v5518 = vsub.f32 %v5390, %v5517
    %v5519 = vand.u32 %v5518, 4294901760
    %v5520 = vsub.f32 %v5518, %v5519
    %v5521 = vand.u32 %v5520, 4294901760
    %5522 = vmatpush1.msra.mxu0 %v5521
    %5523 = vmatprep.subr.mxu0 0.0
    %v5524 = vand.u32 %v5391, 4294901760
    %v5525 = vsub.f32 %v5391, %v5524
    %v5526 = vand.u32 %v5525, 4294901760
    %v5527 = vsub.f32 %v5525, %v5526
    %v5528 = vand.u32 %v5527, 4294901760
    %5529 = vmatpush1.msra.mxu0 %v5528
    %5530 = vmatprep.subr.mxu0 0.0
    %v5531 = vand.u32 %v5392, 4294901760
    %v5532 = vsub.f32 %v5392, %v5531
    %v5533 = vand.u32 %v5532, 4294901760
    %v5534 = vsub.f32 %v5532, %v5533
    %v5535 = vand.u32 %v5534, 4294901760
    %5536 = vmatpush1.msra.mxu0 %v5535
    %5537 = vmatprep.subr.mxu0 0.0
    %v5538 = vand.u32 %v5393, 4294901760
    %v5539 = vsub.f32 %v5393, %v5538
    %v5540 = vand.u32 %v5539, 4294901760
    %v5541 = vsub.f32 %v5539, %v5540
    %v5542 = vand.u32 %v5541, 4294901760
    %5543 = vmatpush1.msra.mxu0 %v5542
    %5544 = vmatprep.subr.mxu0 0.0
    %v5545 = vand.u32 %v5394, 4294901760
    %v5546 = vsub.f32 %v5394, %v5545
    %v5547 = vand.u32 %v5546, 4294901760
    %v5548 = vsub.f32 %v5546, %v5547
    %v5549 = vand.u32 %v5548, 4294901760
    %5550 = vmatpush1.msra.mxu0 %v5549
    %5551 = vmatprep.subr.mxu0 0.0
    %v5552 = vand.u32 %v5395, 4294901760
    %v5553 = vsub.f32 %v5395, %v5552
    %v5554 = vand.u32 %v5553, 4294901760
    %v5555 = vsub.f32 %v5553, %v5554
    %v5556 = vand.u32 %v5555, 4294901760
    %5557 = vmatpush1.msra.mxu0 %v5556
    %5558 = vmatprep.subr.mxu0 0.0
    %v5559 = vand.u32 %v5396, 4294901760
    %v5560 = vsub.f32 %v5396, %v5559
    %v5561 = vand.u32 %v5560, 4294901760
    %v5562 = vsub.f32 %v5560, %v5561
    %v5563 = vand.u32 %v5562, 4294901760
    %5564 = vmatpush1.msra.mxu0 %v5563
    %5565 = vmatprep.subr.mxu0 0.0
    %v5566 = vand.u32 %v5397, 4294901760
    %v5567 = vsub.f32 %v5397, %v5566
    %v5568 = vand.u32 %v5567, 4294901760
    %v5569 = vsub.f32 %v5567, %v5568
    %v5570 = vand.u32 %v5569, 4294901760
    %5571 = vmatpush1.msra.mxu0 %v5570
    %5572 = vmatprep.subr.mxu0 0.0
    %v5573 = vand.u32 %v5398, 4294901760
    %v5574 = vsub.f32 %v5398, %v5573
    %v5575 = vand.u32 %v5574, 4294901760
    %v5576 = vsub.f32 %v5574, %v5575
    %v5577 = vand.u32 %v5576, 4294901760
    %5578 = vmatpush1.msra.mxu0 %v5577
    %5579 = vmatprep.subr.mxu0 0.0
    %v5580 = vand.u32 %v5399, 4294901760
    %v5581 = vsub.f32 %v5399, %v5580
    %v5582 = vand.u32 %v5581, 4294901760
    %v5583 = vsub.f32 %v5581, %v5582
    %v5584 = vand.u32 %v5583, 4294901760
    %5585 = vmatpush1.msra.mxu0 %v5584
    %5586 = vmatprep.subr.mxu0 0.0
    %v5587 = vand.u32 %v5400, 4294901760
    %v5588 = vsub.f32 %v5400, %v5587
    %v5589 = vand.u32 %v5588, 4294901760
    %v5590 = vsub.f32 %v5588, %v5589
    %v5591 = vand.u32 %v5590, 4294901760
    %5592 = vmatpush1.msra.mxu0 %v5591
    %5593 = vmatprep.subr.mxu0 0.0
    %v5594 = vand.u32 %v5401, 4294901760
    %v5595 = vsub.f32 %v5401, %v5594
    %v5596 = vand.u32 %v5595, 4294901760
    %v5597 = vsub.f32 %v5595, %v5596
    %v5598 = vand.u32 %v5597, 4294901760
    %5599 = vmatpush1.msra.mxu0 %v5598
    %5600 = vmatprep.subr.mxu0 0.0
    %v5601 = vand.u32 %v5402, 4294901760
    %v5602 = vsub.f32 %v5402, %v5601
    %v5603 = vand.u32 %v5602, 4294901760
    %v5604 = vsub.f32 %v5602, %v5603
    %v5605 = vand.u32 %v5604, 4294901760
    %5606 = vmatpush1.msra.mxu0 %v5605
    %5607 = vmatprep.subr.mxu0 0.0
    %v5608 = vand.u32 %v5403, 4294901760
    %v5609 = vsub.f32 %v5403, %v5608
    %v5610 = vand.u32 %v5609, 4294901760
    %v5611 = vsub.f32 %v5609, %v5610
    %v5612 = vand.u32 %v5611, 4294901760
    %5613 = vmatpush1.msra.mxu0 %v5612
    %5614 = vmatprep.subr.mxu0 0.0
    %5615 = vmatpush1.msra.mxu0 0.0
    %5616 = vmatprep.subr.mxu0 0.0
    %5617 = vmatpush1.msra.mxu0 0.0
    %5618 = vmatprep.subr.mxu0 0.0
    %5619 = vmatpush1.msra.mxu0 0.0
    %5620 = vmatprep.subr.mxu0 0.0
    %5621 = vmatpush1.msra.mxu0 0.0
    %5622 = vmatprep.subr.mxu0 0.0
    %5623 = vmatpush1.msra.mxu0 0.0
    %5624 = vmatprep.subr.mxu0 0.0
    %5625 = vmatpush1.msra.mxu0 0.0
    %5626 = vmatprep.subr.mxu0 0.0
    %5627 = vmatpush1.msra.mxu0 0.0
    %5628 = vmatprep.subr.mxu0 0.0
    %5629 = vmatpush1.msra.mxu0 0.0
    %5630 = vmatprep.subr.mxu0 0.0
    %5631 = vmatpush1.msra.mxu0 0.0
    %5632 = vmatprep.subr.mxu0 0.0
    %5633 = vmatpush1.msra.mxu0 0.0
    %5634 = vmatprep.subr.mxu0 0.0
    %5635 = vmatpush1.msra.mxu0 0.0
    %5636 = vmatprep.subr.mxu0 0.0
    %5637 = vmatpush1.msra.mxu0 0.0
    %5638 = vmatprep.subr.mxu0 0.0
    %5639 = vmatpush1.msra.mxu0 0.0
    %5640 = vmatprep.subr.mxu0 0.0
    %5641 = vmatpush1.msra.mxu0 0.0
    %5642 = vmatprep.subr.mxu0 0.0
    %5643 = vmatpush1.msra.mxu0 0.0
    %5644 = vmatprep.subr.mxu0 0.0
    %5645 = vmatpush1.msra.mxu0 0.0
    %5646 = vmatprep.mubr.f32.mxu0 0.0
    %v5647 = vand.u32 %v5387, 4294901760
    %5648 = vmatmul.mubr.f32.gmra.mrb[0].mxu0 %v5647
    %v5649 = vpop.f32.mrb[0].mxu0
    %v5650 = vadd.f32 %v5499, %v5649
    %v5651 = vpop.f32.mrb[0].mxu0
    %5652 = vdwg.mxu0
    %5653 = vmatprep.subr.mxu0 0.0
    %v5654 = vand.u32 %v5388, 4294901760
    %v5655 = vsub.f32 %v5388, %v5654
    %5656 = vmatpush1.msra.mxu0 %v5655
    %5657 = vmatprep.subr.mxu0 0.0
    %v5658 = vand.u32 %v5389, 4294901760
    %v5659 = vsub.f32 %v5389, %v5658
    %5660 = vmatpush1.msra.mxu0 %v5659
    %5661 = vmatprep.subr.mxu0 0.0
    %v5662 = vand.u32 %v5390, 4294901760
    %v5663 = vsub.f32 %v5390, %v5662
    %5664 = vmatpush1.msra.mxu0 %v5663
    %5665 = vmatprep.subr.mxu0 0.0
    %v5666 = vand.u32 %v5391, 4294901760
    %v5667 = vsub.f32 %v5391, %v5666
    %5668 = vmatpush1.msra.mxu0 %v5667
    %5669 = vmatprep.subr.mxu0 0.0
    %v5670 = vand.u32 %v5392, 4294901760
    %v5671 = vsub.f32 %v5392, %v5670
    %5672 = vmatpush1.msra.mxu0 %v5671
    %5673 = vmatprep.subr.mxu0 0.0
    %v5674 = vand.u32 %v5393, 4294901760
    %v5675 = vsub.f32 %v5393, %v5674
    %5676 = vmatpush1.msra.mxu0 %v5675
    %5677 = vmatprep.subr.mxu0 0.0
    %v5678 = vand.u32 %v5394, 4294901760
    %v5679 = vsub.f32 %v5394, %v5678
    %5680 = vmatpush1.msra.mxu0 %v5679
    %5681 = vmatprep.subr.mxu0 0.0
    %v5682 = vand.u32 %v5395, 4294901760
    %v5683 = vsub.f32 %v5395, %v5682
    %5684 = vmatpush1.msra.mxu0 %v5683
    %5685 = vmatprep.subr.mxu0 0.0
    %v5686 = vand.u32 %v5396, 4294901760
    %v5687 = vsub.f32 %v5396, %v5686
    %5688 = vmatpush1.msra.mxu0 %v5687
    %5689 = vmatprep.subr.mxu0 0.0
    %v5690 = vand.u32 %v5397, 4294901760
    %v5691 = vsub.f32 %v5397, %v5690
    %5692 = vmatpush1.msra.mxu0 %v5691
    %5693 = vmatprep.subr.mxu0 0.0
    %v5694 = vand.u32 %v5398, 4294901760
    %v5695 = vsub.f32 %v5398, %v5694
    %5696 = vmatpush1.msra.mxu0 %v5695
    %5697 = vmatprep.subr.mxu0 0.0
    %v5698 = vand.u32 %v5399, 4294901760
    %v5699 = vsub.f32 %v5399, %v5698
    %5700 = vmatpush1.msra.mxu0 %v5699
    %5701 = vmatprep.subr.mxu0 0.0
    %v5702 = vand.u32 %v5400, 4294901760
    %v5703 = vsub.f32 %v5400, %v5702
    %5704 = vmatpush1.msra.mxu0 %v5703
    %5705 = vmatprep.subr.mxu0 0.0
    %v5706 = vand.u32 %v5401, 4294901760
    %v5707 = vsub.f32 %v5401, %v5706
    %5708 = vmatpush1.msra.mxu0 %v5707
    %5709 = vmatprep.subr.mxu0 0.0
    %v5710 = vand.u32 %v5402, 4294901760
    %v5711 = vsub.f32 %v5402, %v5710
    %5712 = vmatpush1.msra.mxu0 %v5711
    %5713 = vmatprep.subr.mxu0 0.0
    %v5714 = vand.u32 %v5403, 4294901760
    %v5715 = vsub.f32 %v5403, %v5714
    %5716 = vmatpush1.msra.mxu0 %v5715
    %5717 = vmatprep.subr.mxu0 0.0
    %5718 = vmatpush1.msra.mxu0 0.0
    %5719 = vmatprep.subr.mxu0 0.0
    %5720 = vmatpush1.msra.mxu0 0.0
    %5721 = vmatprep.subr.mxu0 0.0
    %5722 = vmatpush1.msra.mxu0 0.0
    %5723 = vmatprep.subr.mxu0 0.0
    %5724 = vmatpush1.msra.mxu0 0.0
    %5725 = vmatprep.subr.mxu0 0.0
    %5726 = vmatpush1.msra.mxu0 0.0
    %5727 = vmatprep.subr.mxu0 0.0
    %5728 = vmatpush1.msra.mxu0 0.0
    %5729 = vmatprep.subr.mxu0 0.0
    %5730 = vmatpush1.msra.mxu0 0.0
    %5731 = vmatprep.subr.mxu0 0.0
    %5732 = vmatpush1.msra.mxu0 0.0
    %5733 = vmatprep.subr.mxu0 0.0
    %5734 = vmatpush1.msra.mxu0 0.0
    %5735 = vmatprep.subr.mxu0 0.0
    %5736 = vmatpush1.msra.mxu0 0.0
    %5737 = vmatprep.subr.mxu0 0.0
    %5738 = vmatpush1.msra.mxu0 0.0
    %5739 = vmatprep.subr.mxu0 0.0
    %5740 = vmatpush1.msra.mxu0 0.0
    %5741 = vmatprep.subr.mxu0 0.0
    %5742 = vmatpush1.msra.mxu0 0.0
    %5743 = vmatprep.subr.mxu0 0.0
    %5744 = vmatpush1.msra.mxu0 0.0
    %5745 = vmatprep.subr.mxu0 0.0
    %5746 = vmatpush1.msra.mxu0 0.0
    %5747 = vmatprep.subr.mxu0 0.0
    %5748 = vmatpush1.msra.mxu0 0.0
    %5749 = vmatprep.mubr.f32.mxu0 0.0
    %v5750 = vand.u32 %v5387, 4294901760
    %v5751 = vsub.f32 %v5387, %v5750
    %5752 = vmatmul.mubr.f32.gmra.mrb[0].mxu0 %v5751
    %v5753 = vpop.f32.mrb[0].mxu0
    %v5754 = vadd.f32 %v5650, %v5753
    %v5755 = vpop.f32.mrb[0].mxu0
    %5756 = vdwg.mxu0
    %5757 = vmatprep.subr.mxu0 0.0
    %v5758 = vand.u32 %v5388, 4294901760
    %5759 = vmatpush1.msra.mxu0 %v5758
    %5760 = vmatprep.subr.mxu0 0.0
    %v5761 = vand.u32 %v5389, 4294901760
    %5762 = vmatpush1.msra.mxu0 %v5761
    %5763 = vmatprep.subr.mxu0 0.0
    %v5764 = vand.u32 %v5390, 4294901760
    %5765 = vmatpush1.msra.mxu0 %v5764
    %5766 = vmatprep.subr.mxu0 0.0
    %v5767 = vand.u32 %v5391, 4294901760
    %5768 = vmatpush1.msra.mxu0 %v5767
    %5769 = vmatprep.subr.mxu0 0.0
    %v5770 = vand.u32 %v5392, 4294901760
    %5771 = vmatpush1.msra.mxu0 %v5770
    %5772 = vmatprep.subr.mxu0 0.0
    %v5773 = vand.u32 %v5393, 4294901760
    %5774 = vmatpush1.msra.mxu0 %v5773
    %5775 = vmatprep.subr.mxu0 0.0
    %v5776 = vand.u32 %v5394, 4294901760
    %5777 = vmatpush1.msra.mxu0 %v5776
    %5778 = vmatprep.subr.mxu0 0.0
    %v5779 = vand.u32 %v5395, 4294901760
    %5780 = vmatpush1.msra.mxu0 %v5779
    %5781 = vmatprep.subr.mxu0 0.0
    %v5782 = vand.u32 %v5396, 4294901760
    %5783 = vmatpush1.msra.mxu0 %v5782
    %5784 = vmatprep.subr.mxu0 0.0
    %v5785 = vand.u32 %v5397, 4294901760
    %5786 = vmatpush1.msra.mxu0 %v5785
    %5787 = vmatprep.subr.mxu0 0.0
    %v5788 = vand.u32 %v5398, 4294901760
    %5789 = vmatpush1.msra.mxu0 %v5788
    %5790 = vmatprep.subr.mxu0 0.0
    %v5791 = vand.u32 %v5399, 4294901760
    %5792 = vmatpush1.msra.mxu0 %v5791
    %5793 = vmatprep.subr.mxu0 0.0
    %v5794 = vand.u32 %v5400, 4294901760
    %5795 = vmatpush1.msra.mxu0 %v5794
    %5796 = vmatprep.subr.mxu0 0.0
    %v5797 = vand.u32 %v5401, 4294901760
    %5798 = vmatpush1.msra.mxu0 %v5797
    %5799 = vmatprep.subr.mxu0 0.0
    %v5800 = vand.u32 %v5402, 4294901760
    %5801 = vmatpush1.msra.mxu0 %v5800
    %5802 = vmatprep.subr.mxu0 0.0
    %v5803 = vand.u32 %v5403, 4294901760
    %5804 = vmatpush1.msra.mxu0 %v5803
    %5805 = vmatprep.subr.mxu0 0.0
    %5806 = vmatpush1.msra.mxu0 0.0
    %5807 = vmatprep.subr.mxu0 0.0
    %5808 = vmatpush1.msra.mxu0 0.0
    %5809 = vmatprep.subr.mxu0 0.0
    %5810 = vmatpush1.msra.mxu0 0.0
    %5811 = vmatprep.subr.mxu0 0.0
    %5812 = vmatpush1.msra.mxu0 0.0
    %5813 = vmatprep.subr.mxu0 0.0
    %5814 = vmatpush1.msra.mxu0 0.0
    %5815 = vmatprep.subr.mxu0 0.0
    %5816 = vmatpush1.msra.mxu0 0.0
    %5817 = vmatprep.subr.mxu0 0.0
    %5818 = vmatpush1.msra.mxu0 0.0
    %5819 = vmatprep.subr.mxu0 0.0
    %5820 = vmatpush1.msra.mxu0 0.0
    %5821 = vmatprep.subr.mxu0 0.0
    %5822 = vmatpush1.msra.mxu0 0.0
    %5823 = vmatprep.subr.mxu0 0.0
    %5824 = vmatpush1.msra.mxu0 0.0
    %5825 = vmatprep.subr.mxu0 0.0
    %5826 = vmatpush1.msra.mxu0 0.0
    %5827 = vmatprep.subr.mxu0 0.0
    %5828 = vmatpush1.msra.mxu0 0.0
    %5829 = vmatprep.subr.mxu0 0.0
    %5830 = vmatpush1.msra.mxu0 0.0
    %5831 = vmatprep.subr.mxu0 0.0
    %5832 = vmatpush1.msra.mxu0 0.0
    %5833 = vmatprep.subr.mxu0 0.0
    %5834 = vmatpush1.msra.mxu0 0.0
    %5835 = vmatprep.subr.mxu0 0.0
    %5836 = vmatpush1.msra.mxu0 0.0
    %5837 = vmatprep.mubr.f32.mxu0 0.0
    %v5838 = vand.u32 %v5387, 4294901760
    %v5839 = vsub.f32 %v5387, %v5838
    %v5840 = vand.u32 %v5839, 4294901760
    %5841 = vmatmul.mubr.f32.gmra.mrb[0].mxu0 %v5840
    %v5842 = vpop.f32.mrb[0].mxu0
    %v5843 = vadd.f32 %v5754, %v5842
    %v5844 = vpop.f32.mrb[0].mxu0
    %5845 = vdwg.mxu0
    %5846 = vmatprep.subr.mxu0 0.0
    %v5847 = vand.u32 %v5388, 4294901760
    %v5848 = vsub.f32 %v5388, %v5847
    %v5849 = vand.u32 %v5848, 4294901760
    %5850 = vmatpush1.msra.mxu0 %v5849
    %5851 = vmatprep.subr.mxu0 0.0
    %v5852 = vand.u32 %v5389, 4294901760
    %v5853 = vsub.f32 %v5389, %v5852
    %v5854 = vand.u32 %v5853, 4294901760
    %5855 = vmatpush1.msra.mxu0 %v5854
    %5856 = vmatprep.subr.mxu0 0.0
    %v5857 = vand.u32 %v5390, 4294901760
    %v5858 = vsub.f32 %v5390, %v5857
    %v5859 = vand.u32 %v5858, 4294901760
    %5860 = vmatpush1.msra.mxu0 %v5859
    %5861 = vmatprep.subr.mxu0 0.0
    %v5862 = vand.u32 %v5391, 4294901760
    %v5863 = vsub.f32 %v5391, %v5862
    %v5864 = vand.u32 %v5863, 4294901760
    %5865 = vmatpush1.msra.mxu0 %v5864
    %5866 = vmatprep.subr.mxu0 0.0
    %v5867 = vand.u32 %v5392, 4294901760
    %v5868 = vsub.f32 %v5392, %v5867
    %v5869 = vand.u32 %v5868, 4294901760
    %5870 = vmatpush1.msra.mxu0 %v5869
    %5871 = vmatprep.subr.mxu0 0.0
    %v5872 = vand.u32 %v5393, 4294901760
    %v5873 = vsub.f32 %v5393, %v5872
    %v5874 = vand.u32 %v5873, 4294901760
    %5875 = vmatpush1.msra.mxu0 %v5874
    %5876 = vmatprep.subr.mxu0 0.0
    %v5877 = vand.u32 %v5394, 4294901760
    %v5878 = vsub.f32 %v5394, %v5877
    %v5879 = vand.u32 %v5878, 4294901760
    %5880 = vmatpush1.msra.mxu0 %v5879
    %5881 = vmatprep.subr.mxu0 0.0
    %v5882 = vand.u32 %v5395, 4294901760
    %v5883 = vsub.f32 %v5395, %v5882
    %v5884 = vand.u32 %v5883, 4294901760
    %5885 = vmatpush1.msra.mxu0 %v5884
    %5886 = vmatprep.subr.mxu0 0.0
    %v5887 = vand.u32 %v5396, 4294901760
    %v5888 = vsub.f32 %v5396, %v5887
    %v5889 = vand.u32 %v5888, 4294901760
    %5890 = vmatpush1.msra.mxu0 %v5889
    %5891 = vmatprep.subr.mxu0 0.0
    %v5892 = vand.u32 %v5397, 4294901760
    %v5893 = vsub.f32 %v5397, %v5892
    %v5894 = vand.u32 %v5893, 4294901760
    %5895 = vmatpush1.msra.mxu0 %v5894
    %5896 = vmatprep.subr.mxu0 0.0
    %v5897 = vand.u32 %v5398, 4294901760
    %v5898 = vsub.f32 %v5398, %v5897
    %v5899 = vand.u32 %v5898, 4294901760
    %5900 = vmatpush1.msra.mxu0 %v5899
    %5901 = vmatprep.subr.mxu0 0.0
    %v5902 = vand.u32 %v5399, 4294901760
    %v5903 = vsub.f32 %v5399, %v5902
    %v5904 = vand.u32 %v5903, 4294901760
    %5905 = vmatpush1.msra.mxu0 %v5904
    %5906 = vmatprep.subr.mxu0 0.0
    %v5907 = vand.u32 %v5400, 4294901760
    %v5908 = vsub.f32 %v5400, %v5907
    %v5909 = vand.u32 %v5908, 4294901760
    %5910 = vmatpush1.msra.mxu0 %v5909
    %5911 = vmatprep.subr.mxu0 0.0
    %v5912 = vand.u32 %v5401, 4294901760
    %v5913 = vsub.f32 %v5401, %v5912
    %v5914 = vand.u32 %v5913, 4294901760
    %5915 = vmatpush1.msra.mxu0 %v5914
    %5916 = vmatprep.subr.mxu0 0.0
    %v5917 = vand.u32 %v5402, 4294901760
    %v5918 = vsub.f32 %v5402, %v5917
    %v5919 = vand.u32 %v5918, 4294901760
    %5920 = vmatpush1.msra.mxu0 %v5919
    %5921 = vmatprep.subr.mxu0 0.0
    %v5922 = vand.u32 %v5403, 4294901760
    %v5923 = vsub.f32 %v5403, %v5922
    %v5924 = vand.u32 %v5923, 4294901760
    %5925 = vmatpush1.msra.mxu0 %v5924
    %5926 = vmatprep.subr.mxu0 0.0
    %5927 = vmatpush1.msra.mxu0 0.0
    %5928 = vmatprep.subr.mxu0 0.0
    %5929 = vmatpush1.msra.mxu0 0.0
    %5930 = vmatprep.subr.mxu0 0.0
    %5931 = vmatpush1.msra.mxu0 0.0
    %5932 = vmatprep.subr.mxu0 0.0
    %5933 = vmatpush1.msra.mxu0 0.0
    %5934 = vmatprep.subr.mxu0 0.0
    %5935 = vmatpush1.msra.mxu0 0.0
    %5936 = vmatprep.subr.mxu0 0.0
    %5937 = vmatpush1.msra.mxu0 0.0
    %5938 = vmatprep.subr.mxu0 0.0
    %5939 = vmatpush1.msra.mxu0 0.0
    %5940 = vmatprep.subr.mxu0 0.0
    %5941 = vmatpush1.msra.mxu0 0.0
    %5942 = vmatprep.subr.mxu0 0.0
    %5943 = vmatpush1.msra.mxu0 0.0
    %5944 = vmatprep.subr.mxu0 0.0
    %5945 = vmatpush1.msra.mxu0 0.0
    %5946 = vmatprep.subr.mxu0 0.0
    %5947 = vmatpush1.msra.mxu0 0.0
    %5948 = vmatprep.subr.mxu0 0.0
    %5949 = vmatpush1.msra.mxu0 0.0
    %5950 = vmatprep.subr.mxu0 0.0
    %5951 = vmatpush1.msra.mxu0 0.0
    %5952 = vmatprep.subr.mxu0 0.0
    %5953 = vmatpush1.msra.mxu0 0.0
    %5954 = vmatprep.subr.mxu0 0.0
    %5955 = vmatpush1.msra.mxu0 0.0
    %5956 = vmatprep.subr.mxu0 0.0
    %5957 = vmatpush1.msra.mxu0 0.0
    %5958 = vmatprep.mubr.f32.mxu0 0.0
    %v5959 = vand.u32 %v5387, 4294901760
    %5960 = vmatmul.mubr.f32.gmra.mrb[0].mxu0 %v5959
    %v5961 = vpop.f32.mrb[0].mxu0
    %v5962 = vadd.f32 %v5843, %v5961
    %v5963 = vpop.f32.mrb[0].mxu0
    %5964 = vdwg.mxu0
    %5965 = vmatprep.subr.mxu0 0.0
    %v5966 = vand.u32 %v5388, 4294901760
    %5967 = vmatpush1.msra.mxu0 %v5966
    %5968 = vmatprep.subr.mxu0 0.0
    %v5969 = vand.u32 %v5389, 4294901760
    %5970 = vmatpush1.msra.mxu0 %v5969
    %5971 = vmatprep.subr.mxu0 0.0
    %v5972 = vand.u32 %v5390, 4294901760
    %5973 = vmatpush1.msra.mxu0 %v5972
    %5974 = vmatprep.subr.mxu0 0.0
    %v5975 = vand.u32 %v5391, 4294901760
    %5976 = vmatpush1.msra.mxu0 %v5975
    %5977 = vmatprep.subr.mxu0 0.0
    %v5978 = vand.u32 %v5392, 4294901760
    %5979 = vmatpush1.msra.mxu0 %v5978
    %5980 = vmatprep.subr.mxu0 0.0
    %v5981 = vand.u32 %v5393, 4294901760
    %5982 = vmatpush1.msra.mxu0 %v5981
    %5983 = vmatprep.subr.mxu0 0.0
    %v5984 = vand.u32 %v5394, 4294901760
    %5985 = vmatpush1.msra.mxu0 %v5984
    %5986 = vmatprep.subr.mxu0 0.0
    %v5987 = vand.u32 %v5395, 4294901760
    %5988 = vmatpush1.msra.mxu0 %v5987
    %5989 = vmatprep.subr.mxu0 0.0
    %v5990 = vand.u32 %v5396, 4294901760
    %5991 = vmatpush1.msra.mxu0 %v5990
    %5992 = vmatprep.subr.mxu0 0.0
    %v5993 = vand.u32 %v5397, 4294901760
    %5994 = vmatpush1.msra.mxu0 %v5993
    %5995 = vmatprep.subr.mxu0 0.0
    %v5996 = vand.u32 %v5398, 4294901760
    %5997 = vmatpush1.msra.mxu0 %v5996
    %5998 = vmatprep.subr.mxu0 0.0
    %v5999 = vand.u32 %v5399, 4294901760
    %6000 = vmatpush1.msra.mxu0 %v5999
    %6001 = vmatprep.subr.mxu0 0.0
    %v6002 = vand.u32 %v5400, 4294901760
    %6003 = vmatpush1.msra.mxu0 %v6002
    %6004 = vmatprep.subr.mxu0 0.0
    %v6005 = vand.u32 %v5401, 4294901760
    %6006 = vmatpush1.msra.mxu0 %v6005
    %6007 = vmatprep.subr.mxu0 0.0
    %v6008 = vand.u32 %v5402, 4294901760
    %6009 = vmatpush1.msra.mxu0 %v6008
    %6010 = vmatprep.subr.mxu0 0.0
    %v6011 = vand.u32 %v5403, 4294901760
    %6012 = vmatpush1.msra.mxu0 %v6011
    %6013 = vmatprep.subr.mxu0 0.0
    %6014 = vmatpush1.msra.mxu0 0.0
    %6015 = vmatprep.subr.mxu0 0.0
    %6016 = vmatpush1.msra.mxu0 0.0
    %6017 = vmatprep.subr.mxu0 0.0
    %6018 = vmatpush1.msra.mxu0 0.0
    %6019 = vmatprep.subr.mxu0 0.0
    %6020 = vmatpush1.msra.mxu0 0.0
    %6021 = vmatprep.subr.mxu0 0.0
    %6022 = vmatpush1.msra.mxu0 0.0
    %6023 = vmatprep.subr.mxu0 0.0
    %6024 = vmatpush1.msra.mxu0 0.0
    %6025 = vmatprep.subr.mxu0 0.0
    %6026 = vmatpush1.msra.mxu0 0.0
    %6027 = vmatprep.subr.mxu0 0.0
    %6028 = vmatpush1.msra.mxu0 0.0
    %6029 = vmatprep.subr.mxu0 0.0
    %6030 = vmatpush1.msra.mxu0 0.0
    %6031 = vmatprep.subr.mxu0 0.0
    %6032 = vmatpush1.msra.mxu0 0.0
    %6033 = vmatprep.subr.mxu0 0.0
    %6034 = vmatpush1.msra.mxu0 0.0
    %6035 = vmatprep.subr.mxu0 0.0
    %6036 = vmatpush1.msra.mxu0 0.0
    %6037 = vmatprep.subr.mxu0 0.0
    %6038 = vmatpush1.msra.mxu0 0.0
    %6039 = vmatprep.subr.mxu0 0.0
    %6040 = vmatpush1.msra.mxu0 0.0
    %6041 = vmatprep.subr.mxu0 0.0
    %6042 = vmatpush1.msra.mxu0 0.0
    %6043 = vmatprep.subr.mxu0 0.0
    %6044 = vmatpush1.msra.mxu0 0.0
    %6045 = vmatprep.mubr.f32.mxu0 0.0
    %v6046 = vand.u32 %v5387, 4294901760
    %6047 = vmatmul.mubr.f32.gmra.mrb[0].mxu0 %v6046
    %v6048 = vpop.f32.mrb[0].mxu0
    %v6049 = vadd.f32 %v5962, %v6048
    %v6050 = vpop.f32.mrb[0].mxu0
    %6051 = vdwg.mxu0
    %6052 = vst [vmem:[#allocation8] sm:$0xff] %v6049
    // Predicated region
    $region34: #{tpu_custom_call.1} parent=1 // pred_check
      _
    $region35: #{tpu_custom_call.1} parent=1 // pred_check_branch
      %6054 = sbr.rel (0) target = $region37
    $region36: #{tpu_custom_call.1} parent=1 // pred_region
      %s6056 = ssub.s32 128, 128
      %6057 = vsyncadd [#allocation5], %s6056
      %s6059 = sshll.u32 [#allocation8], 4
      %s6060 = int_to_ptr.vmem [resolvable:$true] %s6059
      %6062 = dma.vmem_to_hbm [thread:$0]  %s6060, 128, %s6, [#allocation5]
    $region37: #{tpu_custom_call.1} parent=1 // pred_fallthru
      _
    // Predicated region
    $region38: #{tpu_custom_call.1} parent=1 // pred_check
      _
    $region39: #{tpu_custom_call.1} parent=1 // pred_check_branch
      %6064 = sbr.rel (0) target = $region41
    $region40: #{tpu_custom_call.1} parent=1 // pred_region
      %6065 = dma.done [#allocation5], 128
    $region41: #{tpu_custom_call.1} parent=1 // pred_fallthru
      _
    %6066 = vsyncpa [#allocation4], 1
    %6067 = vsyncpa [#allocation7], 1
    %6068 = vsyncpa [#allocation5], 1

</llo_original>
